<compile_context>
chip_gen: v7x
topology: tpu7x:2x2x1
jax: 0.10.0
libtpu: 0.0.40
codegen_flags: <defaults>
</compile_context>

<pallas_src>
import functools

import jax
import jax.numpy as jnp
import numpy as np
from jax.experimental import pallas as pl
from jax.experimental.pallas import tpu as pltpu

_HEAD_LANES = 128  # lane-dense packed head output width


# ----------------------------- small math helpers -----------------------------
def _sigmoid(x):
    return 1.0 / (1.0 + jnp.exp(-x))


def _silu(x):
    return x * _sigmoid(x)


def _softplus(x):
    # stable softplus = max(x,0) + log(1 + exp(-|x|)); matches F.softplus.
    return jnp.maximum(x, 0.0) + jnp.log(1.0 + jnp.exp(-jnp.abs(x)))


# ------------------------ hardware-aware sizing helpers ------------------------
def _padded_bytes(shape, itemsize):
    # Rough VMEM footprint with (8,128) tile padding on the trailing two dims.
    if len(shape) == 0:
        return max(itemsize, 4)
    if len(shape) == 1:
        return max(int(2 ** np.ceil(np.log2(max(shape[0] * itemsize, 1)))), 512)
    lead = int(np.prod(shape[:-2], dtype=np.int64)) if len(shape) > 2 else 1
    sub = -(-shape[-2] // 8) * 8
    lane = -(-shape[-1] // 128) * 128
    return int(lead * sub * lane * itemsize)


def _vmem_capacity_bytes():
    try:
        info = pltpu.get_tpu_info()
        cap = getattr(info, "vmem_capacity_bytes", None)
        if cap:
            return int(cap)
    except Exception:
        pass
    return 64 << 20  # conservative: physical VMEM of the smallest generation (v7x)


def _num_tensorcores():
    candidates = []
    try:
        candidates.append(getattr(pltpu.get_tpu_info(), "num_cores", None))
    except Exception:
        pass
    try:
        candidates.append(getattr(jax.devices()[0], "num_cores", None))
    except Exception:
        pass
    for v in candidates:
        try:
            v = int(v)
            if v >= 1:
                return v
        except (TypeError, ValueError):
            pass
    return 1


def _choose_tiling(batch, seq_len, n_cores, target_rows=512):
    """Pick TB (samples per grid step) and the number of grid steps."""
    if seq_len % 8 != 0:
        # Keep sample boundaries aligned to full blocks: one big step.
        return batch, 1
    tb = max(1, min(batch, max(1, target_rows // seq_len)))
    n_steps = -(-batch // tb)
    # Multi-TensorCore chips (v7x): keep >=1 grid step per core so the
    # "parallel" axis actually feeds every core.
    if n_cores > 1 and n_steps < n_cores <= batch:
        n_steps = n_cores
        tb = -(-batch // n_steps)
        n_steps = -(-batch // tb)
    return tb, n_steps


def _vmem_budget(weights, x_block, out_block, act_bytes, single_buffer):
    cap = _vmem_capacity_bytes()
    usable = int(cap * 0.85)
    w = sum(_padded_bytes(tuple(t.shape), np.dtype(t.dtype).itemsize)
            for t in weights)
    w *= 1 if single_buffer else 2                 # weight buffers (single vs double)
    io = 2 * (_padded_bytes(x_block, 4) + _padded_bytes(out_block, 4))
    need = w + io + act_bytes + (2 << 20)
    if need > usable:
        raise ValueError(
            f"fused Mamba kernel needs ~{need >> 20} MiB VMEM but only "
            f"~{usable >> 20} MiB is usable on this TPU; reduce samples-per-step "
            f"or seq_len.")
    return int(min(max(need, 8 << 20), usable))


# --------------------------------- fused kernel --------------------------------
def fused_mamba_kernel(x_ref,
                       inw_ref, inb_ref,
                       nw_ref,
                       ipdw_ref, ipdb_ref,
                       cw_ref, cb_ref,
                       clw_ref, clb_ref,
                       fw_ref, fb_ref,
                       opw_ref, opb_ref,
                       outw_ref, outb_ref,
                       o_ref, *, eps):
    f32 = jnp.float32
    bf16 = jnp.bfloat16

    n_blocks = nw_ref.shape[0]
    L = cb_ref.shape[1]
    d_model = opw_ref.shape[2]
    d2 = 2 * d_model
    state_size = (fw_ref.shape[2] - d2) // 2
    out_dim = outw_ref.shape[1]
    rows = x_ref.shape[0]
    tb = rows // L                         # samples in this grid step (static)

    def mm(a_f32, w16):
        # bf16 x bf16 MXU matmul with f32 accumulation.
        return jnp.dot(a_f32.astype(bf16), w16, preferred_element_type=f32)

    # ----------------- input projection: all TB*L rows in one MXU call -----------
    h = mm(x_ref[...], inw_ref[...]) + inb_ref[...]                     # (rows, d)

    # ------------------------------ Mamba blocks ----------------------------------
    for b in range(n_blocks):                                           # static unroll
        # RMSNorm (f32 elementwise).
        ms = jnp.mean(h * h, axis=-1, keepdims=True)
        xn = h * jax.lax.rsqrt(ms + eps) * nw_ref[b]                    # (rows, d)
        xn16 = xn.astype(bf16)

        # Fused [inp_proj | D]: single (rows, d) x (d, 4d) MXU call.
        pd = jnp.dot(xn16, ipdw_ref[b], preferred_element_type=f32) + ipdb_ref[b]
        xp = pd[:, :d2]                                                 # inp_proj  (rows, 2d)
        x_res = _silu(pd[:, d2:])                                       # silu(D(x)) (rows, 2d)

        # Conv1d(seq->seq, k=3, p=1): seq positions are the channels, the 2d
        # feature axis is the conv "width".  The 3 taps are pre-stacked on the
        # host into cw (3L, L) -> one MXU call per sample; the +/-1 width shifts
        # are applied to the small f32 result.  Static per-sample loop.
        conv_rows = []
        zc = jnp.zeros((L, 1), f32)
        for t in range(tb):
            xpt16 = xp[t * L:(t + 1) * L].astype(bf16)                  # (L, 2d)
            R = jnp.dot(cw_ref[b], xpt16, preferred_element_type=f32)   # (3L, 2d)
            R0, R1, R2 = R[0:L], R[L:2 * L], R[2 * L:3 * L]
            xc_t = (jnp.concatenate([zc, R0[:, :-1]], axis=1)           # tap k=0 (w-1)
                    + R1                                                # tap k=1
                    + jnp.concatenate([R2[:, 1:], zc], axis=1)          # tap k=2 (w+1)
                    + cb_ref[b])                                        # bias per seq pos
            conv_rows.append(xc_t)
        xc = conv_rows[0] if tb == 1 else jnp.concatenate(conv_rows, axis=0)

        xcl = mm(_silu(xc), clw_ref[b]) + clb_ref[b]                    # conv_linear (rows, 2d)
        xcl16 = xcl.astype(bf16)

        # Fused [fc1 | fc2 | fc3]: single (rows, 2d) x (2d, 2d+2n) MXU call.
        # S6 with h == 0:  y = x * softplus(fc1 x) * sum_n(fc2 x * fc3 x)
        fcs = jnp.dot(xcl16, fw_ref[b], preferred_element_type=f32) + fb_ref[b]
        delta = _softplus(fcs[:, :d2])
        Bm = fcs[:, d2:d2 + state_size]
        Cm = fcs[:, d2 + state_size:d2 + 2 * state_size]
        y_ssm = xcl * delta * jnp.sum(Bm * Cm, axis=-1, keepdims=True)

        x_comb = _silu(y_ssm) * x_res
        h = mm(x_comb, opw_ref[b]) + opb_ref[b]                         # (rows, d)

    # ---------------------------------- head --------------------------------------
    pooled_rows = [jnp.mean(h[t * L:(t + 1) * L], axis=0, keepdims=True)
                   for t in range(tb)]
    pooled = pooled_rows[0] if tb == 1 else jnp.concatenate(pooled_rows, axis=0)
    logits = mm(pooled, outw_ref[...]) + outb_ref[...]                  # (tb, out_dim)

    pieces = [pooled, logits]
    pad_n = o_ref.shape[1] - d_model - out_dim
    if pad_n > 0:
        pieces.append(jnp.zeros((tb, pad_n), f32))
    o_ref[...] = jnp.concatenate(pieces, axis=-1)                       # lane-dense store


# ---------------------------------- wrapper -------------------------------------
def _weight_spec(shape, single_buffer):
    nd = len(shape)
    idx = lambda i, _nd=nd: (0,) * _nd                # grid-invariant: resident in VMEM
    if single_buffer:
        return pl.BlockSpec(shape, idx, pipeline_mode=pl.Buffered(1))
    return pl.BlockSpec(shape, idx)


def _run_fused(xt_rows, weights, *, tb, n_steps, L, C, vmem_bytes, single_buffer, eps):
    row_block = tb * L
    in_specs = [pl.BlockSpec((row_block, C), lambda i: (i, 0))]
    in_specs += [_weight_spec(tuple(w.shape), single_buffer) for w in weights]
    out_spec = pl.BlockSpec((tb, _HEAD_LANES), lambda i: (i, 0))
    res = pl.pallas_call(
        functools.partial(fused_mamba_kernel, eps=eps),
        out_shape=jax.ShapeDtypeStruct((n_steps * tb, _HEAD_LANES), jnp.float32),
        grid=(n_steps,),
        in_specs=in_specs,
        out_specs=out_spec,
        compiler_params=pltpu.CompilerParams(
            dimension_semantics=("parallel",),
            vmem_limit_bytes=vmem_bytes),
    )(xt_rows, *weights)
    return jax.block_until_ready(res)


def mamba_forward(x, params, eps=1e-5):
    # x: (B, C, L) like the PyTorch NCL input.
    B, C, L = x.shape
    d_model, out_dim = params["out_w"].shape
    n_blocks = params["nw"].shape[0]
    d2 = 2 * d_model
    assert d_model + out_dim <= _HEAD_LANES, "packed head output needs d+out<=128"
    assert params["cw"].shape == (n_blocks, 3 * L, L)      # stacked conv taps
    assert params["cb"].shape == (n_blocks, L, 1)          # bias over seq axis

    # Host-side weight fusion (same-activation matmuls -> one MXU call each).
    ipdw = jnp.concatenate([params["ipw"], params["dw"]], axis=-1)       # (nb, d, 4d)
    ipdb = jnp.concatenate([params["ipb"], params["db"]], axis=-1)       # (nb, 1, 4d)
    fw = jnp.concatenate([params["f1w"], params["f2w"], params["f3w"]], axis=-1)
    fb = jnp.concatenate([params["f1b"], params["f2b"], params["f3b"]], axis=-1)

    weights = [params["in_w"], params["in_b"], params["nw"],
               ipdw, ipdb,
               params["cw"], params["cb"],
               params["clw"], params["clb"],
               fw, fb,
               params["opw"], params["opb"],
               params["out_w"], params["out_b"]]

    tb, n_steps = _choose_tiling(B, L, _num_tensorcores())
    b_pad = tb * n_steps

    xt = jnp.transpose(x, (0, 2, 1)).astype(jnp.float32)                 # (B, L, C)
    if b_pad > B:
        xt = jnp.concatenate([xt, jnp.zeros((b_pad - B, L, C), jnp.float32)], axis=0)
    xt_rows = xt.reshape(b_pad * L, C)                                   # merged rows

    # Live-intermediate estimate: ~a dozen (rows, <=4d) f32 arrays + stacked conv result.
    rows_pad = -(-tb * L // 8) * 8
    lane = lambda w: -(-w // 128) * 128
    act_bytes = rows_pad * lane(4 * d_model) * 4 * 12
    act_bytes += (-(-3 * L // 8) * 8) * lane(d2) * 4 * 2

    run_kwargs = dict(tb=tb, n_steps=n_steps, L=L, C=C, eps=eps)
    single_buffer = hasattr(pl, "Buffered")
    try:
        vmem_bytes = _vmem_budget(weights, (tb * L, C), (tb, _HEAD_LANES),
                                  act_bytes, single_buffer)
        res = _run_fused(xt_rows, weights, vmem_bytes=vmem_bytes,
                         single_buffer=single_buffer, **run_kwargs)
    except Exception:
        if not single_buffer:
            raise
        # Buffered(1) single-resident weight buffers unsupported here: fall back
        # to default double-buffered weight specs.
        vmem_bytes = _vmem_budget(weights, (tb * L, C), (tb, _HEAD_LANES),
                                  act_bytes, False)
        res = _run_fused(xt_rows, weights, vmem_bytes=vmem_bytes,
                         single_buffer=False, **run_kwargs)

    pooled = res[:B, :d_model]
    out = res[:B, d_model:d_model + out_dim]
    return pooled, out


# ----------------------------- pure-JAX reference --------------------------------
_BLOCK_KEYS = ("nw", "ipw", "ipb", "cw", "cb", "clw", "clb",
               "f1w", "f1b", "f2w", "f2b", "f3w", "f3b", "dw", "db", "opw", "opb")


def _mm_ref(a, w):
    return jnp.dot(a.astype(jnp.bfloat16), w, preferred_element_type=jnp.float32)


def _ref_block(h, p, eps=1e-5):
    ms = jnp.mean(h * h, axis=-1, keepdims=True)
    xn = h * jax.lax.rsqrt(ms + eps) * p["nw"]
    xp = _mm_ref(xn, p["ipw"]) + p["ipb"]
    L = xp.shape[1]
    R = jnp.einsum("kl,blf->bkf", p["cw"], xp.astype(jnp.bfloat16),
                   preferred_element_type=jnp.float32)
    R0, R1, R2 = R[:, 0:L], R[:, L:2 * L], R[:, 2 * L:3 * L]
    z = jnp.zeros(R0[..., :1].shape, R0.dtype)
    xc = (jnp.concatenate([z, R0[..., :-1]], axis=-1) + R1
          + jnp.concatenate([R2[..., 1:], z], axis=-1) + p["cb"])
    xca = _silu(xc)
    xcl = _mm_ref(xca, p["clw"]) + p["clb"]
    delta = _softplus(_mm_ref(xcl, p["f1w"]) + p["f1b"])
    Bm = _mm_ref(xcl, p["f2w"]) + p["f2b"]
    Cm = _mm_ref(xcl, p["f3w"]) + p["f3b"]
    y = xcl * delta * jnp.sum(Bm * Cm, axis=-1, keepdims=True)
    x_res = _silu(_mm_ref(xn, p["dw"]) + p["db"])
    return _mm_ref(_silu(y) * x_res, p["opw"]) + p["opb"]


def ref_mamba(x, params, eps=1e-5):
    h = _mm_ref(jnp.transpose(x, (0, 2, 1)), params["in_w"]) + params["in_b"]
    for b in range(params["nw"].shape[0]):
        pb = {k: params[k][b] for k in _BLOCK_KEYS}
        h = _ref_block(h, pb, eps)
    pooled = jnp.mean(h, axis=1)
    out = _mm_ref(pooled, params["out_w"]) + params["out_b"]
    return pooled, out


# ------------------------------ parameter init ------------------------------------
def init_params(key, in_ch, seq_len, d_model, state_size, out_dim, n_blocks=3):
    d2 = 2 * d_model
    keys = iter(jax.random.split(key, 4 + n_blocks * 16))
    bf16 = jnp.bfloat16

    def nrm(shape, scale=0.1):
        return scale * jax.random.normal(next(keys), shape, dtype=jnp.float32)

    def stack(fn):
        return jnp.stack([fn() for _ in range(n_blocks)], axis=0)

    return {
        "in_w": nrm((in_ch, d_model)).astype(bf16),
        "in_b": nrm((1, d_model)),
        "out_w": nrm((d_model, out_dim)).astype(bf16),
        "out_b": nrm((1, out_dim)),
        # per-block weights, stacked along a leading block axis
        "nw": jnp.ones((n_blocks, 1, d_model), jnp.float32),            # RMSNorm weight
        "ipw": stack(lambda: nrm((d_model, d2))).astype(bf16),          # inp_proj
        "ipb": stack(lambda: nrm((1, d2))),
        "cw": stack(lambda: nrm((3 * seq_len, seq_len))).astype(bf16),  # conv taps [k0;k1;k2]
        "cb": stack(lambda: nrm((seq_len, 1))),                         # conv bias (per seq pos)
        "clw": stack(lambda: nrm((d2, d2))).astype(bf16),               # conv_linear
        "clb": stack(lambda: nrm((1, d2))),
        "f1w": stack(lambda: nrm((d2, d2))).astype(bf16),               # S6.fc1
        "f1b": stack(lambda: nrm((1, d2))),
        "f2w": stack(lambda: nrm((d2, state_size))).astype(bf16),       # S6.fc2
        "f2b": stack(lambda: nrm((1, state_size))),
        "f3w": stack(lambda: nrm((d2, state_size))).astype(bf16),       # S6.fc3
        "f3b": stack(lambda: nrm((1, state_size))),
        "dw": stack(lambda: nrm((d_model, d2))).astype(bf16),           # D
        "db": stack(lambda: nrm((1, d2))),
        "opw": stack(lambda: nrm((d2, d_model))).astype(bf16),          # out_proj
        "opb": jnp.ones((n_blocks, 1, d_model), jnp.float32),           # out_proj.bias = 1.0
    }


# ------------------------------------ main ----------------------------------------
if __name__ == "__main__":
    B, C, L = 2, 4, 8                 # batch, input_channels, seq_len
    d_model, state_size, out_dim = 16, 8, 4

    key = jax.random.PRNGKey(0)
    kx, kp = jax.random.split(key)
    x = jax.random.normal(kx, (B, C, L), dtype=jnp.float32)
    params = init_params(kp, C, L, d_model, state_size, out_dim)

    pooled, out = mamba_forward(x, params)
    pooled = jax.block_until_ready(pooled)
    out = jax.block_until_ready(out)

    pooled_ref, out_ref = ref_mamba(x, params)
    np.testing.assert_allclose(np.asarray(pooled), np.asarray(pooled_ref),
                               rtol=1e-2, atol=1e-2)
    np.testing.assert_allclose(np.asarray(out), np.asarray(out_ref),
                               rtol=1e-2, atol=1e-2)

    assert pooled.shape == (B, d_model) and out.shape == (B, out_dim)
    print("KERNEL_OK")
</pallas_src>

<mosaic_0001>
module attributes {stable_mosaic.version = 11 : i64} {
  func.func @fused_mamba_kernel(%arg0: i32, %arg1: memref<16x4xf32, #tpu.memory_space<vmem>>, %arg2: memref<4x16xbf16, #tpu.memory_space<vmem>>, %arg3: memref<1x16xf32, #tpu.memory_space<vmem>>, %arg4: memref<3x1x16xf32, #tpu.memory_space<vmem>>, %arg5: memref<3x16x64xbf16, #tpu.memory_space<vmem>>, %arg6: memref<3x1x64xf32, #tpu.memory_space<vmem>>, %arg7: memref<3x24x8xbf16, #tpu.memory_space<vmem>>, %arg8: memref<3x8x1xf32, #tpu.memory_space<vmem>>, %arg9: memref<3x32x32xbf16, #tpu.memory_space<vmem>>, %arg10: memref<3x1x32xf32, #tpu.memory_space<vmem>>, %arg11: memref<3x32x48xbf16, #tpu.memory_space<vmem>>, %arg12: memref<3x1x48xf32, #tpu.memory_space<vmem>>, %arg13: memref<3x32x16xbf16, #tpu.memory_space<vmem>>, %arg14: memref<3x1x16xf32, #tpu.memory_space<vmem>>, %arg15: memref<16x4xbf16, #tpu.memory_space<vmem>>, %arg16: memref<1x4xf32, #tpu.memory_space<vmem>>, %arg17: memref<2x128xf32, #tpu.memory_space<vmem>>) attributes {dimension_semantics = [#tpu.dimension_semantics<parallel>], iteration_bounds = array<i64: 1>, scalar_prefetch = 0 : i64, scratch_operands = 0 : i64, tpu.core_type = #tpu.core_type<tc>, window_params = [{transform_indices = @transform_0, window_bounds = array<i64: 16, 4>}, {pipeline_mode = #tpu.pipeline_mode<synchronous>, transform_indices = @transform_1, window_bounds = array<i64: 4, 16>}, {pipeline_mode = #tpu.pipeline_mode<synchronous>, transform_indices = @transform_2, window_bounds = array<i64: 1, 16>}, {pipeline_mode = #tpu.pipeline_mode<synchronous>, transform_indices = @transform_3, window_bounds = array<i64: 3, 1, 16>}, {pipeline_mode = #tpu.pipeline_mode<synchronous>, transform_indices = @transform_4, window_bounds = array<i64: 3, 16, 64>}, {pipeline_mode = #tpu.pipeline_mode<synchronous>, transform_indices = @transform_5, window_bounds = array<i64: 3, 1, 64>}, {pipeline_mode = #tpu.pipeline_mode<synchronous>, transform_indices = @transform_6, window_bounds = array<i64: 3, 24, 8>}, {pipeline_mode = #tpu.pipeline_mode<synchronous>, transform_indices = @transform_7, window_bounds = array<i64: 3, 8, 1>}, {pipeline_mode = #tpu.pipeline_mode<synchronous>, transform_indices = @transform_8, window_bounds = array<i64: 3, 32, 32>}, {pipeline_mode = #tpu.pipeline_mode<synchronous>, transform_indices = @transform_9, window_bounds = array<i64: 3, 1, 32>}, {pipeline_mode = #tpu.pipeline_mode<synchronous>, transform_indices = @transform_10, window_bounds = array<i64: 3, 32, 48>}, {pipeline_mode = #tpu.pipeline_mode<synchronous>, transform_indices = @transform_11, window_bounds = array<i64: 3, 1, 48>}, {pipeline_mode = #tpu.pipeline_mode<synchronous>, transform_indices = @transform_12, window_bounds = array<i64: 3, 32, 16>}, {pipeline_mode = #tpu.pipeline_mode<synchronous>, transform_indices = @transform_13, window_bounds = array<i64: 3, 1, 16>}, {pipeline_mode = #tpu.pipeline_mode<synchronous>, transform_indices = @transform_14, window_bounds = array<i64: 16, 4>}, {pipeline_mode = #tpu.pipeline_mode<synchronous>, transform_indices = @transform_15, window_bounds = array<i64: 1, 4>}, {transform_indices = @transform_16, window_bounds = array<i64: 2, 128>}]} {
    %c0 = arith.constant 0 : index
    %c0_0 = arith.constant 0 : index
    %0 = vector.load %arg1[%c0, %c0_0] : memref<16x4xf32, #tpu.memory_space<vmem>>, vector<16x4xf32>
    %c0_1 = arith.constant 0 : index
    %c0_2 = arith.constant 0 : index
    %1 = vector.load %arg2[%c0_1, %c0_2] : memref<4x16xbf16, #tpu.memory_space<vmem>>, vector<4x16xbf16>
    %2 = arith.truncf %0 : vector<16x4xf32> to vector<16x4xbf16>
    %cst = arith.constant dense<0.000000e+00> : vector<16x16xf32>
    %3 = tpu.matmul %2, %1, %cst {dimension_numbers = #tpu.dot_dimension_numbers<[1], [0], [0], [1], [0, 0, 1, 1], [], []>} : vector<16x4xbf16>, vector<4x16xbf16>, vector<16x16xf32> -> vector<16x16xf32>
    %c0_3 = arith.constant 0 : index
    %c0_4 = arith.constant 0 : index
    %4 = vector.load %arg3[%c0_3, %c0_4] : memref<1x16xf32, #tpu.memory_space<vmem>>, vector<1x16xf32>
    %5 = vector.broadcast %4 : vector<1x16xf32> to vector<16x16xf32>
    %6 = arith.addf %3, %5 : vector<16x16xf32>
    %7 = arith.mulf %6, %6 : vector<16x16xf32>
    %cst_5 = arith.constant dense<0.000000e+00> : vector<16xf32>
    %8 = vector.multi_reduction <add>, %7, %cst_5 [1] : vector<16x16xf32> to vector<16xf32>
    %9 = vector.shape_cast %8 : vector<16xf32> to vector<16x1xf32>
    %cst_6 = arith.constant 1.600000e+01 : f32
    %10 = vector.broadcast %cst_6 : f32 to vector<16x1xf32>
    %11 = arith.divf %9, %10 : vector<16x1xf32>
    %cst_7 = arith.constant 9.99999974E-6 : f32
    %12 = vector.broadcast %cst_7 : f32 to vector<16x1xf32>
    %13 = arith.addf %11, %12 : vector<16x1xf32>
    %14 = math.rsqrt %13 : vector<16x1xf32>
    %15 = vector.broadcast %14 : vector<16x1xf32> to vector<16x16xf32>
    %16 = arith.mulf %6, %15 : vector<16x16xf32>
    %c0_8 = arith.constant 0 : index
    %c0_9 = arith.constant 0 : index
    %c0_10 = arith.constant 0 : index
    %17 = vector.load %arg4[%c0_8, %c0_9, %c0_10] : memref<3x1x16xf32, #tpu.memory_space<vmem>>, vector<1x1x16xf32>
    %18 = vector.shape_cast %17 : vector<1x1x16xf32> to vector<1x16xf32>
    %19 = vector.broadcast %18 : vector<1x16xf32> to vector<16x16xf32>
    %20 = arith.mulf %16, %19 : vector<16x16xf32>
    %21 = arith.truncf %20 : vector<16x16xf32> to vector<16x16xbf16>
    %c0_11 = arith.constant 0 : index
    %c0_12 = arith.constant 0 : index
    %c0_13 = arith.constant 0 : index
    %22 = vector.load %arg5[%c0_11, %c0_12, %c0_13] : memref<3x16x64xbf16, #tpu.memory_space<vmem>>, vector<1x16x64xbf16>
    %23 = vector.shape_cast %22 : vector<1x16x64xbf16> to vector<16x64xbf16>
    %cst_14 = arith.constant dense<0.000000e+00> : vector<16x64xf32>
    %24 = tpu.matmul %21, %23, %cst_14 {dimension_numbers = #tpu.dot_dimension_numbers<[1], [0], [0], [1], [0, 0, 1, 1], [], []>} : vector<16x16xbf16>, vector<16x64xbf16>, vector<16x64xf32> -> vector<16x64xf32>
    %c0_15 = arith.constant 0 : index
    %c0_16 = arith.constant 0 : index
    %c0_17 = arith.constant 0 : index
    %25 = vector.load %arg6[%c0_15, %c0_16, %c0_17] : memref<3x1x64xf32, #tpu.memory_space<vmem>>, vector<1x1x64xf32>
    %26 = vector.shape_cast %25 : vector<1x1x64xf32> to vector<1x64xf32>
    %27 = vector.broadcast %26 : vector<1x64xf32> to vector<16x64xf32>
    %28 = arith.addf %24, %27 : vector<16x64xf32>
    %29 = vector.extract_strided_slice %28 {offsets = [0, 0], sizes = [16, 32], strides = [1, 1]} : vector<16x64xf32> to vector<16x32xf32>
    %30 = vector.extract_strided_slice %28 {offsets = [0, 32], sizes = [16, 32], strides = [1, 1]} : vector<16x64xf32> to vector<16x32xf32>
    %cst_18 = arith.constant 0.000000e+00 : f32
    %31 = vector.broadcast %cst_18 : f32 to vector<16x32xf32>
    %32 = arith.subf %31, %30 : vector<16x32xf32>
    %33 = math.exp %32 : vector<16x32xf32>
    %cst_19 = arith.constant 1.000000e+00 : f32
    %34 = vector.broadcast %cst_19 : f32 to vector<16x32xf32>
    %35 = arith.addf %34, %33 : vector<16x32xf32>
    %cst_20 = arith.constant 1.000000e+00 : f32
    %36 = vector.broadcast %cst_20 : f32 to vector<16x32xf32>
    %37 = arith.divf %36, %35 : vector<16x32xf32>
    %38 = arith.mulf %30, %37 : vector<16x32xf32>
    %cst_21 = arith.constant 0.000000e+00 : f32
    %39 = vector.broadcast %cst_21 : f32 to vector<8x1xf32>
    %40 = vector.extract_strided_slice %29 {offsets = [0, 0], sizes = [8, 32], strides = [1, 1]} : vector<16x32xf32> to vector<8x32xf32>
    %41 = arith.truncf %40 : vector<8x32xf32> to vector<8x32xbf16>
    %c0_22 = arith.constant 0 : index
    %c0_23 = arith.constant 0 : index
    %c0_24 = arith.constant 0 : index
    %42 = vector.load %arg7[%c0_22, %c0_23, %c0_24] : memref<3x24x8xbf16, #tpu.memory_space<vmem>>, vector<1x24x8xbf16>
    %43 = vector.shape_cast %42 : vector<1x24x8xbf16> to vector<24x8xbf16>
    %cst_25 = arith.constant dense<0.000000e+00> : vector<24x32xf32>
    %44 = tpu.matmul %43, %41, %cst_25 {dimension_numbers = #tpu.dot_dimension_numbers<[1], [0], [0], [1], [0, 0, 1, 1], [], []>} : vector<24x8xbf16>, vector<8x32xbf16>, vector<24x32xf32> -> vector<24x32xf32>
    %45 = vector.extract_strided_slice %44 {offsets = [0, 0], sizes = [8, 32], strides = [1, 1]} : vector<24x32xf32> to vector<8x32xf32>
    %46 = vector.extract_strided_slice %44 {offsets = [8, 0], sizes = [8, 32], strides = [1, 1]} : vector<24x32xf32> to vector<8x32xf32>
    %47 = vector.extract_strided_slice %44 {offsets = [16, 0], sizes = [8, 32], strides = [1, 1]} : vector<24x32xf32> to vector<8x32xf32>
    %48 = vector.extract_strided_slice %45 {offsets = [0, 0], sizes = [8, 31], strides = [1, 1]} : vector<8x32xf32> to vector<8x31xf32>
    %49 = tpu.concatenate %39, %48 in 1 : vector<8x1xf32>, vector<8x31xf32> -> vector<8x32xf32>
    %50 = arith.addf %49, %46 : vector<8x32xf32>
    %51 = vector.extract_strided_slice %47 {offsets = [0, 1], sizes = [8, 31], strides = [1, 1]} : vector<8x32xf32> to vector<8x31xf32>
    %52 = tpu.concatenate %51, %39 in 1 : vector<8x31xf32>, vector<8x1xf32> -> vector<8x32xf32>
    %53 = arith.addf %50, %52 : vector<8x32xf32>
    %c0_26 = arith.constant 0 : index
    %c0_27 = arith.constant 0 : index
    %c0_28 = arith.constant 0 : index
    %54 = vector.load %arg8[%c0_26, %c0_27, %c0_28] : memref<3x8x1xf32, #tpu.memory_space<vmem>>, vector<1x8x1xf32>
    %55 = vector.shape_cast %54 : vector<1x8x1xf32> to vector<8x1xf32>
    %56 = vector.broadcast %55 : vector<8x1xf32> to vector<8x32xf32>
    %57 = arith.addf %53, %56 : vector<8x32xf32>
    %58 = vector.extract_strided_slice %29 {offsets = [8, 0], sizes = [8, 32], strides = [1, 1]} : vector<16x32xf32> to vector<8x32xf32>
    %59 = arith.truncf %58 : vector<8x32xf32> to vector<8x32xbf16>
    %c0_29 = arith.constant 0 : index
    %c0_30 = arith.constant 0 : index
    %c0_31 = arith.constant 0 : index
    %60 = vector.load %arg7[%c0_29, %c0_30, %c0_31] : memref<3x24x8xbf16, #tpu.memory_space<vmem>>, vector<1x24x8xbf16>
    %61 = vector.shape_cast %60 : vector<1x24x8xbf16> to vector<24x8xbf16>
    %cst_32 = arith.constant dense<0.000000e+00> : vector<24x32xf32>
    %62 = tpu.matmul %61, %59, %cst_32 {dimension_numbers = #tpu.dot_dimension_numbers<[1], [0], [0], [1], [0, 0, 1, 1], [], []>} : vector<24x8xbf16>, vector<8x32xbf16>, vector<24x32xf32> -> vector<24x32xf32>
    %63 = vector.extract_strided_slice %62 {offsets = [0, 0], sizes = [8, 32], strides = [1, 1]} : vector<24x32xf32> to vector<8x32xf32>
    %64 = vector.extract_strided_slice %62 {offsets = [8, 0], sizes = [8, 32], strides = [1, 1]} : vector<24x32xf32> to vector<8x32xf32>
    %65 = vector.extract_strided_slice %62 {offsets = [16, 0], sizes = [8, 32], strides = [1, 1]} : vector<24x32xf32> to vector<8x32xf32>
    %66 = vector.extract_strided_slice %63 {offsets = [0, 0], sizes = [8, 31], strides = [1, 1]} : vector<8x32xf32> to vector<8x31xf32>
    %67 = tpu.concatenate %39, %66 in 1 : vector<8x1xf32>, vector<8x31xf32> -> vector<8x32xf32>
    %68 = arith.addf %67, %64 : vector<8x32xf32>
    %69 = vector.extract_strided_slice %65 {offsets = [0, 1], sizes = [8, 31], strides = [1, 1]} : vector<8x32xf32> to vector<8x31xf32>
    %70 = tpu.concatenate %69, %39 in 1 : vector<8x31xf32>, vector<8x1xf32> -> vector<8x32xf32>
    %71 = arith.addf %68, %70 : vector<8x32xf32>
    %c0_33 = arith.constant 0 : index
    %c0_34 = arith.constant 0 : index
    %c0_35 = arith.constant 0 : index
    %72 = vector.load %arg8[%c0_33, %c0_34, %c0_35] : memref<3x8x1xf32, #tpu.memory_space<vmem>>, vector<1x8x1xf32>
    %73 = vector.shape_cast %72 : vector<1x8x1xf32> to vector<8x1xf32>
    %74 = vector.broadcast %73 : vector<8x1xf32> to vector<8x32xf32>
    %75 = arith.addf %71, %74 : vector<8x32xf32>
    %76 = tpu.concatenate %57, %75 in 0 : vector<8x32xf32>, vector<8x32xf32> -> vector<16x32xf32>
    %cst_36 = arith.constant 0.000000e+00 : f32
    %77 = vector.broadcast %cst_36 : f32 to vector<16x32xf32>
    %78 = arith.subf %77, %76 : vector<16x32xf32>
    %79 = math.exp %78 : vector<16x32xf32>
    %cst_37 = arith.constant 1.000000e+00 : f32
    %80 = vector.broadcast %cst_37 : f32 to vector<16x32xf32>
    %81 = arith.addf %80, %79 : vector<16x32xf32>
    %cst_38 = arith.constant 1.000000e+00 : f32
    %82 = vector.broadcast %cst_38 : f32 to vector<16x32xf32>
    %83 = arith.divf %82, %81 : vector<16x32xf32>
    %84 = arith.mulf %76, %83 : vector<16x32xf32>
    %c0_39 = arith.constant 0 : index
    %c0_40 = arith.constant 0 : index
    %c0_41 = arith.constant 0 : index
    %85 = vector.load %arg9[%c0_39, %c0_40, %c0_41] : memref<3x32x32xbf16, #tpu.memory_space<vmem>>, vector<1x32x32xbf16>
    %86 = vector.shape_cast %85 : vector<1x32x32xbf16> to vector<32x32xbf16>
    %87 = arith.truncf %84 : vector<16x32xf32> to vector<16x32xbf16>
    %cst_42 = arith.constant dense<0.000000e+00> : vector<16x32xf32>
    %88 = tpu.matmul %87, %86, %cst_42 {dimension_numbers = #tpu.dot_dimension_numbers<[1], [0], [0], [1], [0, 0, 1, 1], [], []>} : vector<16x32xbf16>, vector<32x32xbf16>, vector<16x32xf32> -> vector<16x32xf32>
    %c0_43 = arith.constant 0 : index
    %c0_44 = arith.constant 0 : index
    %c0_45 = arith.constant 0 : index
    %89 = vector.load %arg10[%c0_43, %c0_44, %c0_45] : memref<3x1x32xf32, #tpu.memory_space<vmem>>, vector<1x1x32xf32>
    %90 = vector.shape_cast %89 : vector<1x1x32xf32> to vector<1x32xf32>
    %91 = vector.broadcast %90 : vector<1x32xf32> to vector<16x32xf32>
    %92 = arith.addf %88, %91 : vector<16x32xf32>
    %93 = arith.truncf %92 : vector<16x32xf32> to vector<16x32xbf16>
    %c0_46 = arith.constant 0 : index
    %c0_47 = arith.constant 0 : index
    %c0_48 = arith.constant 0 : index
    %94 = vector.load %arg11[%c0_46, %c0_47, %c0_48] : memref<3x32x48xbf16, #tpu.memory_space<vmem>>, vector<1x32x48xbf16>
    %95 = vector.shape_cast %94 : vector<1x32x48xbf16> to vector<32x48xbf16>
    %cst_49 = arith.constant dense<0.000000e+00> : vector<16x48xf32>
    %96 = tpu.matmul %93, %95, %cst_49 {dimension_numbers = #tpu.dot_dimension_numbers<[1], [0], [0], [1], [0, 0, 1, 1], [], []>} : vector<16x32xbf16>, vector<32x48xbf16>, vector<16x48xf32> -> vector<16x48xf32>
    %c0_50 = arith.constant 0 : index
    %c0_51 = arith.constant 0 : index
    %c0_52 = arith.constant 0 : index
    %97 = vector.load %arg12[%c0_50, %c0_51, %c0_52] : memref<3x1x48xf32, #tpu.memory_space<vmem>>, vector<1x1x48xf32>
    %98 = vector.shape_cast %97 : vector<1x1x48xf32> to vector<1x48xf32>
    %99 = vector.broadcast %98 : vector<1x48xf32> to vector<16x48xf32>
    %100 = arith.addf %96, %99 : vector<16x48xf32>
    %101 = vector.extract_strided_slice %100 {offsets = [0, 0], sizes = [16, 32], strides = [1, 1]} : vector<16x48xf32> to vector<16x32xf32>
    %cst_53 = arith.constant 0.000000e+00 : f32
    %102 = vector.broadcast %cst_53 : f32 to vector<16x32xf32>
    %103 = arith.maximumf %101, %102 : vector<16x32xf32>
    %104 = math.absf %101 : vector<16x32xf32>
    %cst_54 = arith.constant 0.000000e+00 : f32
    %105 = vector.broadcast %cst_54 : f32 to vector<16x32xf32>
    %106 = arith.subf %105, %104 : vector<16x32xf32>
    %107 = math.exp %106 : vector<16x32xf32>
    %cst_55 = arith.constant 1.000000e+00 : f32
    %108 = vector.broadcast %cst_55 : f32 to vector<16x32xf32>
    %109 = arith.addf %108, %107 : vector<16x32xf32>
    %110 = math.log %109 : vector<16x32xf32>
    %111 = arith.addf %103, %110 : vector<16x32xf32>
    %112 = vector.extract_strided_slice %100 {offsets = [0, 32], sizes = [16, 8], strides = [1, 1]} : vector<16x48xf32> to vector<16x8xf32>
    %113 = vector.extract_strided_slice %100 {offsets = [0, 40], sizes = [16, 8], strides = [1, 1]} : vector<16x48xf32> to vector<16x8xf32>
    %114 = arith.mulf %92, %111 : vector<16x32xf32>
    %115 = arith.mulf %112, %113 : vector<16x8xf32>
    %cst_56 = arith.constant dense<0.000000e+00> : vector<16xf32>
    %116 = vector.multi_reduction <add>, %115, %cst_56 [1] : vector<16x8xf32> to vector<16xf32>
    %117 = vector.shape_cast %116 : vector<16xf32> to vector<16x1xf32>
    %118 = vector.broadcast %117 : vector<16x1xf32> to vector<16x32xf32>
    %119 = arith.mulf %114, %118 : vector<16x32xf32>
    %cst_57 = arith.constant 0.000000e+00 : f32
    %120 = vector.broadcast %cst_57 : f32 to vector<16x32xf32>
    %121 = arith.subf %120, %119 : vector<16x32xf32>
    %122 = math.exp %121 : vector<16x32xf32>
    %cst_58 = arith.constant 1.000000e+00 : f32
    %123 = vector.broadcast %cst_58 : f32 to vector<16x32xf32>
    %124 = arith.addf %123, %122 : vector<16x32xf32>
    %cst_59 = arith.constant 1.000000e+00 : f32
    %125 = vector.broadcast %cst_59 : f32 to vector<16x32xf32>
    %126 = arith.divf %125, %124 : vector<16x32xf32>
    %127 = arith.mulf %119, %126 : vector<16x32xf32>
    %128 = arith.mulf %127, %38 : vector<16x32xf32>
    %c0_60 = arith.constant 0 : index
    %c0_61 = arith.constant 0 : index
    %c0_62 = arith.constant 0 : index
    %129 = vector.load %arg13[%c0_60, %c0_61, %c0_62] : memref<3x32x16xbf16, #tpu.memory_space<vmem>>, vector<1x32x16xbf16>
    %130 = vector.shape_cast %129 : vector<1x32x16xbf16> to vector<32x16xbf16>
    %131 = arith.truncf %128 : vector<16x32xf32> to vector<16x32xbf16>
    %cst_63 = arith.constant dense<0.000000e+00> : vector<16x16xf32>
    %132 = tpu.matmul %131, %130, %cst_63 {dimension_numbers = #tpu.dot_dimension_numbers<[1], [0], [0], [1], [0, 0, 1, 1], [], []>} : vector<16x32xbf16>, vector<32x16xbf16>, vector<16x16xf32> -> vector<16x16xf32>
    %c0_64 = arith.constant 0 : index
    %c0_65 = arith.constant 0 : index
    %c0_66 = arith.constant 0 : index
    %133 = vector.load %arg14[%c0_64, %c0_65, %c0_66] : memref<3x1x16xf32, #tpu.memory_space<vmem>>, vector<1x1x16xf32>
    %134 = vector.shape_cast %133 : vector<1x1x16xf32> to vector<1x16xf32>
    %135 = vector.broadcast %134 : vector<1x16xf32> to vector<16x16xf32>
    %136 = arith.addf %132, %135 : vector<16x16xf32>
    %137 = arith.mulf %136, %136 : vector<16x16xf32>
    %cst_67 = arith.constant dense<0.000000e+00> : vector<16xf32>
    %138 = vector.multi_reduction <add>, %137, %cst_67 [1] : vector<16x16xf32> to vector<16xf32>
    %139 = vector.shape_cast %138 : vector<16xf32> to vector<16x1xf32>
    %cst_68 = arith.constant 1.600000e+01 : f32
    %140 = vector.broadcast %cst_68 : f32 to vector<16x1xf32>
    %141 = arith.divf %139, %140 : vector<16x1xf32>
    %cst_69 = arith.constant 9.99999974E-6 : f32
    %142 = vector.broadcast %cst_69 : f32 to vector<16x1xf32>
    %143 = arith.addf %141, %142 : vector<16x1xf32>
    %144 = math.rsqrt %143 : vector<16x1xf32>
    %145 = vector.broadcast %144 : vector<16x1xf32> to vector<16x16xf32>
    %146 = arith.mulf %136, %145 : vector<16x16xf32>
    %c1 = arith.constant 1 : index
    %c0_70 = arith.constant 0 : index
    %c0_71 = arith.constant 0 : index
    %147 = vector.load %arg4[%c1, %c0_70, %c0_71] : memref<3x1x16xf32, #tpu.memory_space<vmem>>, vector<1x1x16xf32>
    %148 = vector.shape_cast %147 : vector<1x1x16xf32> to vector<1x16xf32>
    %149 = vector.broadcast %148 : vector<1x16xf32> to vector<16x16xf32>
    %150 = arith.mulf %146, %149 : vector<16x16xf32>
    %151 = arith.truncf %150 : vector<16x16xf32> to vector<16x16xbf16>
    %c1_72 = arith.constant 1 : index
    %c0_73 = arith.constant 0 : index
    %c0_74 = arith.constant 0 : index
    %152 = vector.load %arg5[%c1_72, %c0_73, %c0_74] : memref<3x16x64xbf16, #tpu.memory_space<vmem>>, vector<1x16x64xbf16>
    %153 = vector.shape_cast %152 : vector<1x16x64xbf16> to vector<16x64xbf16>
    %cst_75 = arith.constant dense<0.000000e+00> : vector<16x64xf32>
    %154 = tpu.matmul %151, %153, %cst_75 {dimension_numbers = #tpu.dot_dimension_numbers<[1], [0], [0], [1], [0, 0, 1, 1], [], []>} : vector<16x16xbf16>, vector<16x64xbf16>, vector<16x64xf32> -> vector<16x64xf32>
    %c1_76 = arith.constant 1 : index
    %c0_77 = arith.constant 0 : index
    %c0_78 = arith.constant 0 : index
    %155 = vector.load %arg6[%c1_76, %c0_77, %c0_78] : memref<3x1x64xf32, #tpu.memory_space<vmem>>, vector<1x1x64xf32>
    %156 = vector.shape_cast %155 : vector<1x1x64xf32> to vector<1x64xf32>
    %157 = vector.broadcast %156 : vector<1x64xf32> to vector<16x64xf32>
    %158 = arith.addf %154, %157 : vector<16x64xf32>
    %159 = vector.extract_strided_slice %158 {offsets = [0, 0], sizes = [16, 32], strides = [1, 1]} : vector<16x64xf32> to vector<16x32xf32>
    %160 = vector.extract_strided_slice %158 {offsets = [0, 32], sizes = [16, 32], strides = [1, 1]} : vector<16x64xf32> to vector<16x32xf32>
    %cst_79 = arith.constant 0.000000e+00 : f32
    %161 = vector.broadcast %cst_79 : f32 to vector<16x32xf32>
    %162 = arith.subf %161, %160 : vector<16x32xf32>
    %163 = math.exp %162 : vector<16x32xf32>
    %cst_80 = arith.constant 1.000000e+00 : f32
    %164 = vector.broadcast %cst_80 : f32 to vector<16x32xf32>
    %165 = arith.addf %164, %163 : vector<16x32xf32>
    %cst_81 = arith.constant 1.000000e+00 : f32
    %166 = vector.broadcast %cst_81 : f32 to vector<16x32xf32>
    %167 = arith.divf %166, %165 : vector<16x32xf32>
    %168 = arith.mulf %160, %167 : vector<16x32xf32>
    %cst_82 = arith.constant 0.000000e+00 : f32
    %169 = vector.broadcast %cst_82 : f32 to vector<8x1xf32>
    %170 = vector.extract_strided_slice %159 {offsets = [0, 0], sizes = [8, 32], strides = [1, 1]} : vector<16x32xf32> to vector<8x32xf32>
    %171 = arith.truncf %170 : vector<8x32xf32> to vector<8x32xbf16>
    %c1_83 = arith.constant 1 : index
    %c0_84 = arith.constant 0 : index
    %c0_85 = arith.constant 0 : index
    %172 = vector.load %arg7[%c1_83, %c0_84, %c0_85] : memref<3x24x8xbf16, #tpu.memory_space<vmem>>, vector<1x24x8xbf16>
    %173 = vector.shape_cast %172 : vector<1x24x8xbf16> to vector<24x8xbf16>
    %cst_86 = arith.constant dense<0.000000e+00> : vector<24x32xf32>
    %174 = tpu.matmul %173, %171, %cst_86 {dimension_numbers = #tpu.dot_dimension_numbers<[1], [0], [0], [1], [0, 0, 1, 1], [], []>} : vector<24x8xbf16>, vector<8x32xbf16>, vector<24x32xf32> -> vector<24x32xf32>
    %175 = vector.extract_strided_slice %174 {offsets = [0, 0], sizes = [8, 32], strides = [1, 1]} : vector<24x32xf32> to vector<8x32xf32>
    %176 = vector.extract_strided_slice %174 {offsets = [8, 0], sizes = [8, 32], strides = [1, 1]} : vector<24x32xf32> to vector<8x32xf32>
    %177 = vector.extract_strided_slice %174 {offsets = [16, 0], sizes = [8, 32], strides = [1, 1]} : vector<24x32xf32> to vector<8x32xf32>
    %178 = vector.extract_strided_slice %175 {offsets = [0, 0], sizes = [8, 31], strides = [1, 1]} : vector<8x32xf32> to vector<8x31xf32>
    %179 = tpu.concatenate %169, %178 in 1 : vector<8x1xf32>, vector<8x31xf32> -> vector<8x32xf32>
    %180 = arith.addf %179, %176 : vector<8x32xf32>
    %181 = vector.extract_strided_slice %177 {offsets = [0, 1], sizes = [8, 31], strides = [1, 1]} : vector<8x32xf32> to vector<8x31xf32>
    %182 = tpu.concatenate %181, %169 in 1 : vector<8x31xf32>, vector<8x1xf32> -> vector<8x32xf32>
    %183 = arith.addf %180, %182 : vector<8x32xf32>
    %c1_87 = arith.constant 1 : index
    %c0_88 = arith.constant 0 : index
    %c0_89 = arith.constant 0 : index
    %184 = vector.load %arg8[%c1_87, %c0_88, %c0_89] : memref<3x8x1xf32, #tpu.memory_space<vmem>>, vector<1x8x1xf32>
    %185 = vector.shape_cast %184 : vector<1x8x1xf32> to vector<8x1xf32>
    %186 = vector.broadcast %185 : vector<8x1xf32> to vector<8x32xf32>
    %187 = arith.addf %183, %186 : vector<8x32xf32>
    %188 = vector.extract_strided_slice %159 {offsets = [8, 0], sizes = [8, 32], strides = [1, 1]} : vector<16x32xf32> to vector<8x32xf32>
    %189 = arith.truncf %188 : vector<8x32xf32> to vector<8x32xbf16>
    %c1_90 = arith.constant 1 : index
    %c0_91 = arith.constant 0 : index
    %c0_92 = arith.constant 0 : index
    %190 = vector.load %arg7[%c1_90, %c0_91, %c0_92] : memref<3x24x8xbf16, #tpu.memory_space<vmem>>, vector<1x24x8xbf16>
    %191 = vector.shape_cast %190 : vector<1x24x8xbf16> to vector<24x8xbf16>
    %cst_93 = arith.constant dense<0.000000e+00> : vector<24x32xf32>
    %192 = tpu.matmul %191, %189, %cst_93 {dimension_numbers = #tpu.dot_dimension_numbers<[1], [0], [0], [1], [0, 0, 1, 1], [], []>} : vector<24x8xbf16>, vector<8x32xbf16>, vector<24x32xf32> -> vector<24x32xf32>
    %193 = vector.extract_strided_slice %192 {offsets = [0, 0], sizes = [8, 32], strides = [1, 1]} : vector<24x32xf32> to vector<8x32xf32>
    %194 = vector.extract_strided_slice %192 {offsets = [8, 0], sizes = [8, 32], strides = [1, 1]} : vector<24x32xf32> to vector<8x32xf32>
    %195 = vector.extract_strided_slice %192 {offsets = [16, 0], sizes = [8, 32], strides = [1, 1]} : vector<24x32xf32> to vector<8x32xf32>
    %196 = vector.extract_strided_slice %193 {offsets = [0, 0], sizes = [8, 31], strides = [1, 1]} : vector<8x32xf32> to vector<8x31xf32>
    %197 = tpu.concatenate %169, %196 in 1 : vector<8x1xf32>, vector<8x31xf32> -> vector<8x32xf32>
    %198 = arith.addf %197, %194 : vector<8x32xf32>
    %199 = vector.extract_strided_slice %195 {offsets = [0, 1], sizes = [8, 31], strides = [1, 1]} : vector<8x32xf32> to vector<8x31xf32>
    %200 = tpu.concatenate %199, %169 in 1 : vector<8x31xf32>, vector<8x1xf32> -> vector<8x32xf32>
    %201 = arith.addf %198, %200 : vector<8x32xf32>
    %c1_94 = arith.constant 1 : index
    %c0_95 = arith.constant 0 : index
    %c0_96 = arith.constant 0 : index
    %202 = vector.load %arg8[%c1_94, %c0_95, %c0_96] : memref<3x8x1xf32, #tpu.memory_space<vmem>>, vector<1x8x1xf32>
    %203 = vector.shape_cast %202 : vector<1x8x1xf32> to vector<8x1xf32>
    %204 = vector.broadcast %203 : vector<8x1xf32> to vector<8x32xf32>
    %205 = arith.addf %201, %204 : vector<8x32xf32>
    %206 = tpu.concatenate %187, %205 in 0 : vector<8x32xf32>, vector<8x32xf32> -> vector<16x32xf32>
    %cst_97 = arith.constant 0.000000e+00 : f32
    %207 = vector.broadcast %cst_97 : f32 to vector<16x32xf32>
    %208 = arith.subf %207, %206 : vector<16x32xf32>
    %209 = math.exp %208 : vector<16x32xf32>
    %cst_98 = arith.constant 1.000000e+00 : f32
    %210 = vector.broadcast %cst_98 : f32 to vector<16x32xf32>
    %211 = arith.addf %210, %209 : vector<16x32xf32>
    %cst_99 = arith.constant 1.000000e+00 : f32
    %212 = vector.broadcast %cst_99 : f32 to vector<16x32xf32>
    %213 = arith.divf %212, %211 : vector<16x32xf32>
    %214 = arith.mulf %206, %213 : vector<16x32xf32>
    %c1_100 = arith.constant 1 : index
    %c0_101 = arith.constant 0 : index
    %c0_102 = arith.constant 0 : index
    %215 = vector.load %arg9[%c1_100, %c0_101, %c0_102] : memref<3x32x32xbf16, #tpu.memory_space<vmem>>, vector<1x32x32xbf16>
    %216 = vector.shape_cast %215 : vector<1x32x32xbf16> to vector<32x32xbf16>
    %217 = arith.truncf %214 : vector<16x32xf32> to vector<16x32xbf16>
    %cst_103 = arith.constant dense<0.000000e+00> : vector<16x32xf32>
    %218 = tpu.matmul %217, %216, %cst_103 {dimension_numbers = #tpu.dot_dimension_numbers<[1], [0], [0], [1], [0, 0, 1, 1], [], []>} : vector<16x32xbf16>, vector<32x32xbf16>, vector<16x32xf32> -> vector<16x32xf32>
    %c1_104 = arith.constant 1 : index
    %c0_105 = arith.constant 0 : index
    %c0_106 = arith.constant 0 : index
    %219 = vector.load %arg10[%c1_104, %c0_105, %c0_106] : memref<3x1x32xf32, #tpu.memory_space<vmem>>, vector<1x1x32xf32>
    %220 = vector.shape_cast %219 : vector<1x1x32xf32> to vector<1x32xf32>
    %221 = vector.broadcast %220 : vector<1x32xf32> to vector<16x32xf32>
    %222 = arith.addf %218, %221 : vector<16x32xf32>
    %223 = arith.truncf %222 : vector<16x32xf32> to vector<16x32xbf16>
    %c1_107 = arith.constant 1 : index
    %c0_108 = arith.constant 0 : index
    %c0_109 = arith.constant 0 : index
    %224 = vector.load %arg11[%c1_107, %c0_108, %c0_109] : memref<3x32x48xbf16, #tpu.memory_space<vmem>>, vector<1x32x48xbf16>
    %225 = vector.shape_cast %224 : vector<1x32x48xbf16> to vector<32x48xbf16>
    %cst_110 = arith.constant dense<0.000000e+00> : vector<16x48xf32>
    %226 = tpu.matmul %223, %225, %cst_110 {dimension_numbers = #tpu.dot_dimension_numbers<[1], [0], [0], [1], [0, 0, 1, 1], [], []>} : vector<16x32xbf16>, vector<32x48xbf16>, vector<16x48xf32> -> vector<16x48xf32>
    %c1_111 = arith.constant 1 : index
    %c0_112 = arith.constant 0 : index
    %c0_113 = arith.constant 0 : index
    %227 = vector.load %arg12[%c1_111, %c0_112, %c0_113] : memref<3x1x48xf32, #tpu.memory_space<vmem>>, vector<1x1x48xf32>
    %228 = vector.shape_cast %227 : vector<1x1x48xf32> to vector<1x48xf32>
    %229 = vector.broadcast %228 : vector<1x48xf32> to vector<16x48xf32>
    %230 = arith.addf %226, %229 : vector<16x48xf32>
    %231 = vector.extract_strided_slice %230 {offsets = [0, 0], sizes = [16, 32], strides = [1, 1]} : vector<16x48xf32> to vector<16x32xf32>
    %cst_114 = arith.constant 0.000000e+00 : f32
    %232 = vector.broadcast %cst_114 : f32 to vector<16x32xf32>
    %233 = arith.maximumf %231, %232 : vector<16x32xf32>
    %234 = math.absf %231 : vector<16x32xf32>
    %cst_115 = arith.constant 0.000000e+00 : f32
    %235 = vector.broadcast %cst_115 : f32 to vector<16x32xf32>
    %236 = arith.subf %235, %234 : vector<16x32xf32>
    %237 = math.exp %236 : vector<16x32xf32>
    %cst_116 = arith.constant 1.000000e+00 : f32
    %238 = vector.broadcast %cst_116 : f32 to vector<16x32xf32>
    %239 = arith.addf %238, %237 : vector<16x32xf32>
    %240 = math.log %239 : vector<16x32xf32>
    %241 = arith.addf %233, %240 : vector<16x32xf32>
    %242 = vector.extract_strided_slice %230 {offsets = [0, 32], sizes = [16, 8], strides = [1, 1]} : vector<16x48xf32> to vector<16x8xf32>
    %243 = vector.extract_strided_slice %230 {offsets = [0, 40], sizes = [16, 8], strides = [1, 1]} : vector<16x48xf32> to vector<16x8xf32>
    %244 = arith.mulf %222, %241 : vector<16x32xf32>
    %245 = arith.mulf %242, %243 : vector<16x8xf32>
    %cst_117 = arith.constant dense<0.000000e+00> : vector<16xf32>
    %246 = vector.multi_reduction <add>, %245, %cst_117 [1] : vector<16x8xf32> to vector<16xf32>
    %247 = vector.shape_cast %246 : vector<16xf32> to vector<16x1xf32>
    %248 = vector.broadcast %247 : vector<16x1xf32> to vector<16x32xf32>
    %249 = arith.mulf %244, %248 : vector<16x32xf32>
    %cst_118 = arith.constant 0.000000e+00 : f32
    %250 = vector.broadcast %cst_118 : f32 to vector<16x32xf32>
    %251 = arith.subf %250, %249 : vector<16x32xf32>
    %252 = math.exp %251 : vector<16x32xf32>
    %cst_119 = arith.constant 1.000000e+00 : f32
    %253 = vector.broadcast %cst_119 : f32 to vector<16x32xf32>
    %254 = arith.addf %253, %252 : vector<16x32xf32>
    %cst_120 = arith.constant 1.000000e+00 : f32
    %255 = vector.broadcast %cst_120 : f32 to vector<16x32xf32>
    %256 = arith.divf %255, %254 : vector<16x32xf32>
    %257 = arith.mulf %249, %256 : vector<16x32xf32>
    %258 = arith.mulf %257, %168 : vector<16x32xf32>
    %c1_121 = arith.constant 1 : index
    %c0_122 = arith.constant 0 : index
    %c0_123 = arith.constant 0 : index
    %259 = vector.load %arg13[%c1_121, %c0_122, %c0_123] : memref<3x32x16xbf16, #tpu.memory_space<vmem>>, vector<1x32x16xbf16>
    %260 = vector.shape_cast %259 : vector<1x32x16xbf16> to vector<32x16xbf16>
    %261 = arith.truncf %258 : vector<16x32xf32> to vector<16x32xbf16>
    %cst_124 = arith.constant dense<0.000000e+00> : vector<16x16xf32>
    %262 = tpu.matmul %261, %260, %cst_124 {dimension_numbers = #tpu.dot_dimension_numbers<[1], [0], [0], [1], [0, 0, 1, 1], [], []>} : vector<16x32xbf16>, vector<32x16xbf16>, vector<16x16xf32> -> vector<16x16xf32>
    %c1_125 = arith.constant 1 : index
    %c0_126 = arith.constant 0 : index
    %c0_127 = arith.constant 0 : index
    %263 = vector.load %arg14[%c1_125, %c0_126, %c0_127] : memref<3x1x16xf32, #tpu.memory_space<vmem>>, vector<1x1x16xf32>
    %264 = vector.shape_cast %263 : vector<1x1x16xf32> to vector<1x16xf32>
    %265 = vector.broadcast %264 : vector<1x16xf32> to vector<16x16xf32>
    %266 = arith.addf %262, %265 : vector<16x16xf32>
    %267 = arith.mulf %266, %266 : vector<16x16xf32>
    %cst_128 = arith.constant dense<0.000000e+00> : vector<16xf32>
    %268 = vector.multi_reduction <add>, %267, %cst_128 [1] : vector<16x16xf32> to vector<16xf32>
    %269 = vector.shape_cast %268 : vector<16xf32> to vector<16x1xf32>
    %cst_129 = arith.constant 1.600000e+01 : f32
    %270 = vector.broadcast %cst_129 : f32 to vector<16x1xf32>
    %271 = arith.divf %269, %270 : vector<16x1xf32>
    %cst_130 = arith.constant 9.99999974E-6 : f32
    %272 = vector.broadcast %cst_130 : f32 to vector<16x1xf32>
    %273 = arith.addf %271, %272 : vector<16x1xf32>
    %274 = math.rsqrt %273 : vector<16x1xf32>
    %275 = vector.broadcast %274 : vector<16x1xf32> to vector<16x16xf32>
    %276 = arith.mulf %266, %275 : vector<16x16xf32>
    %c2 = arith.constant 2 : index
    %c0_131 = arith.constant 0 : index
    %c0_132 = arith.constant 0 : index
    %277 = vector.load %arg4[%c2, %c0_131, %c0_132] : memref<3x1x16xf32, #tpu.memory_space<vmem>>, vector<1x1x16xf32>
    %278 = vector.shape_cast %277 : vector<1x1x16xf32> to vector<1x16xf32>
    %279 = vector.broadcast %278 : vector<1x16xf32> to vector<16x16xf32>
    %280 = arith.mulf %276, %279 : vector<16x16xf32>
    %281 = arith.truncf %280 : vector<16x16xf32> to vector<16x16xbf16>
    %c2_133 = arith.constant 2 : index
    %c0_134 = arith.constant 0 : index
    %c0_135 = arith.constant 0 : index
    %282 = vector.load %arg5[%c2_133, %c0_134, %c0_135] : memref<3x16x64xbf16, #tpu.memory_space<vmem>>, vector<1x16x64xbf16>
    %283 = vector.shape_cast %282 : vector<1x16x64xbf16> to vector<16x64xbf16>
    %cst_136 = arith.constant dense<0.000000e+00> : vector<16x64xf32>
    %284 = tpu.matmul %281, %283, %cst_136 {dimension_numbers = #tpu.dot_dimension_numbers<[1], [0], [0], [1], [0, 0, 1, 1], [], []>} : vector<16x16xbf16>, vector<16x64xbf16>, vector<16x64xf32> -> vector<16x64xf32>
    %c2_137 = arith.constant 2 : index
    %c0_138 = arith.constant 0 : index
    %c0_139 = arith.constant 0 : index
    %285 = vector.load %arg6[%c2_137, %c0_138, %c0_139] : memref<3x1x64xf32, #tpu.memory_space<vmem>>, vector<1x1x64xf32>
    %286 = vector.shape_cast %285 : vector<1x1x64xf32> to vector<1x64xf32>
    %287 = vector.broadcast %286 : vector<1x64xf32> to vector<16x64xf32>
    %288 = arith.addf %284, %287 : vector<16x64xf32>
    %289 = vector.extract_strided_slice %288 {offsets = [0, 0], sizes = [16, 32], strides = [1, 1]} : vector<16x64xf32> to vector<16x32xf32>
    %290 = vector.extract_strided_slice %288 {offsets = [0, 32], sizes = [16, 32], strides = [1, 1]} : vector<16x64xf32> to vector<16x32xf32>
    %cst_140 = arith.constant 0.000000e+00 : f32
    %291 = vector.broadcast %cst_140 : f32 to vector<16x32xf32>
    %292 = arith.subf %291, %290 : vector<16x32xf32>
    %293 = math.exp %292 : vector<16x32xf32>
    %cst_141 = arith.constant 1.000000e+00 : f32
    %294 = vector.broadcast %cst_141 : f32 to vector<16x32xf32>
    %295 = arith.addf %294, %293 : vector<16x32xf32>
    %cst_142 = arith.constant 1.000000e+00 : f32
    %296 = vector.broadcast %cst_142 : f32 to vector<16x32xf32>
    %297 = arith.divf %296, %295 : vector<16x32xf32>
    %298 = arith.mulf %290, %297 : vector<16x32xf32>
    %cst_143 = arith.constant 0.000000e+00 : f32
    %299 = vector.broadcast %cst_143 : f32 to vector<8x1xf32>
    %300 = vector.extract_strided_slice %289 {offsets = [0, 0], sizes = [8, 32], strides = [1, 1]} : vector<16x32xf32> to vector<8x32xf32>
    %301 = arith.truncf %300 : vector<8x32xf32> to vector<8x32xbf16>
    %c2_144 = arith.constant 2 : index
    %c0_145 = arith.constant 0 : index
    %c0_146 = arith.constant 0 : index
    %302 = vector.load %arg7[%c2_144, %c0_145, %c0_146] : memref<3x24x8xbf16, #tpu.memory_space<vmem>>, vector<1x24x8xbf16>
    %303 = vector.shape_cast %302 : vector<1x24x8xbf16> to vector<24x8xbf16>
    %cst_147 = arith.constant dense<0.000000e+00> : vector<24x32xf32>
    %304 = tpu.matmul %303, %301, %cst_147 {dimension_numbers = #tpu.dot_dimension_numbers<[1], [0], [0], [1], [0, 0, 1, 1], [], []>} : vector<24x8xbf16>, vector<8x32xbf16>, vector<24x32xf32> -> vector<24x32xf32>
    %305 = vector.extract_strided_slice %304 {offsets = [0, 0], sizes = [8, 32], strides = [1, 1]} : vector<24x32xf32> to vector<8x32xf32>
    %306 = vector.extract_strided_slice %304 {offsets = [8, 0], sizes = [8, 32], strides = [1, 1]} : vector<24x32xf32> to vector<8x32xf32>
    %307 = vector.extract_strided_slice %304 {offsets = [16, 0], sizes = [8, 32], strides = [1, 1]} : vector<24x32xf32> to vector<8x32xf32>
    %308 = vector.extract_strided_slice %305 {offsets = [0, 0], sizes = [8, 31], strides = [1, 1]} : vector<8x32xf32> to vector<8x31xf32>
    %309 = tpu.concatenate %299, %308 in 1 : vector<8x1xf32>, vector<8x31xf32> -> vector<8x32xf32>
    %310 = arith.addf %309, %306 : vector<8x32xf32>
    %311 = vector.extract_strided_slice %307 {offsets = [0, 1], sizes = [8, 31], strides = [1, 1]} : vector<8x32xf32> to vector<8x31xf32>
    %312 = tpu.concatenate %311, %299 in 1 : vector<8x31xf32>, vector<8x1xf32> -> vector<8x32xf32>
    %313 = arith.addf %310, %312 : vector<8x32xf32>
    %c2_148 = arith.constant 2 : index
    %c0_149 = arith.constant 0 : index
    %c0_150 = arith.constant 0 : index
    %314 = vector.load %arg8[%c2_148, %c0_149, %c0_150] : memref<3x8x1xf32, #tpu.memory_space<vmem>>, vector<1x8x1xf32>
    %315 = vector.shape_cast %314 : vector<1x8x1xf32> to vector<8x1xf32>
    %316 = vector.broadcast %315 : vector<8x1xf32> to vector<8x32xf32>
    %317 = arith.addf %313, %316 : vector<8x32xf32>
    %318 = vector.extract_strided_slice %289 {offsets = [8, 0], sizes = [8, 32], strides = [1, 1]} : vector<16x32xf32> to vector<8x32xf32>
    %319 = arith.truncf %318 : vector<8x32xf32> to vector<8x32xbf16>
    %c2_151 = arith.constant 2 : index
    %c0_152 = arith.constant 0 : index
    %c0_153 = arith.constant 0 : index
    %320 = vector.load %arg7[%c2_151, %c0_152, %c0_153] : memref<3x24x8xbf16, #tpu.memory_space<vmem>>, vector<1x24x8xbf16>
    %321 = vector.shape_cast %320 : vector<1x24x8xbf16> to vector<24x8xbf16>
    %cst_154 = arith.constant dense<0.000000e+00> : vector<24x32xf32>
    %322 = tpu.matmul %321, %319, %cst_154 {dimension_numbers = #tpu.dot_dimension_numbers<[1], [0], [0], [1], [0, 0, 1, 1], [], []>} : vector<24x8xbf16>, vector<8x32xbf16>, vector<24x32xf32> -> vector<24x32xf32>
    %323 = vector.extract_strided_slice %322 {offsets = [0, 0], sizes = [8, 32], strides = [1, 1]} : vector<24x32xf32> to vector<8x32xf32>
    %324 = vector.extract_strided_slice %322 {offsets = [8, 0], sizes = [8, 32], strides = [1, 1]} : vector<24x32xf32> to vector<8x32xf32>
    %325 = vector.extract_strided_slice %322 {offsets = [16, 0], sizes = [8, 32], strides = [1, 1]} : vector<24x32xf32> to vector<8x32xf32>
    %326 = vector.extract_strided_slice %323 {offsets = [0, 0], sizes = [8, 31], strides = [1, 1]} : vector<8x32xf32> to vector<8x31xf32>
    %327 = tpu.concatenate %299, %326 in 1 : vector<8x1xf32>, vector<8x31xf32> -> vector<8x32xf32>
    %328 = arith.addf %327, %324 : vector<8x32xf32>
    %329 = vector.extract_strided_slice %325 {offsets = [0, 1], sizes = [8, 31], strides = [1, 1]} : vector<8x32xf32> to vector<8x31xf32>
    %330 = tpu.concatenate %329, %299 in 1 : vector<8x31xf32>, vector<8x1xf32> -> vector<8x32xf32>
    %331 = arith.addf %328, %330 : vector<8x32xf32>
    %c2_155 = arith.constant 2 : index
    %c0_156 = arith.constant 0 : index
    %c0_157 = arith.constant 0 : index
    %332 = vector.load %arg8[%c2_155, %c0_156, %c0_157] : memref<3x8x1xf32, #tpu.memory_space<vmem>>, vector<1x8x1xf32>
    %333 = vector.shape_cast %332 : vector<1x8x1xf32> to vector<8x1xf32>
    %334 = vector.broadcast %333 : vector<8x1xf32> to vector<8x32xf32>
    %335 = arith.addf %331, %334 : vector<8x32xf32>
    %336 = tpu.concatenate %317, %335 in 0 : vector<8x32xf32>, vector<8x32xf32> -> vector<16x32xf32>
    %cst_158 = arith.constant 0.000000e+00 : f32
    %337 = vector.broadcast %cst_158 : f32 to vector<16x32xf32>
    %338 = arith.subf %337, %336 : vector<16x32xf32>
    %339 = math.exp %338 : vector<16x32xf32>
    %cst_159 = arith.constant 1.000000e+00 : f32
    %340 = vector.broadcast %cst_159 : f32 to vector<16x32xf32>
    %341 = arith.addf %340, %339 : vector<16x32xf32>
    %cst_160 = arith.constant 1.000000e+00 : f32
    %342 = vector.broadcast %cst_160 : f32 to vector<16x32xf32>
    %343 = arith.divf %342, %341 : vector<16x32xf32>
    %344 = arith.mulf %336, %343 : vector<16x32xf32>
    %c2_161 = arith.constant 2 : index
    %c0_162 = arith.constant 0 : index
    %c0_163 = arith.constant 0 : index
    %345 = vector.load %arg9[%c2_161, %c0_162, %c0_163] : memref<3x32x32xbf16, #tpu.memory_space<vmem>>, vector<1x32x32xbf16>
    %346 = vector.shape_cast %345 : vector<1x32x32xbf16> to vector<32x32xbf16>
    %347 = arith.truncf %344 : vector<16x32xf32> to vector<16x32xbf16>
    %cst_164 = arith.constant dense<0.000000e+00> : vector<16x32xf32>
    %348 = tpu.matmul %347, %346, %cst_164 {dimension_numbers = #tpu.dot_dimension_numbers<[1], [0], [0], [1], [0, 0, 1, 1], [], []>} : vector<16x32xbf16>, vector<32x32xbf16>, vector<16x32xf32> -> vector<16x32xf32>
    %c2_165 = arith.constant 2 : index
    %c0_166 = arith.constant 0 : index
    %c0_167 = arith.constant 0 : index
    %349 = vector.load %arg10[%c2_165, %c0_166, %c0_167] : memref<3x1x32xf32, #tpu.memory_space<vmem>>, vector<1x1x32xf32>
    %350 = vector.shape_cast %349 : vector<1x1x32xf32> to vector<1x32xf32>
    %351 = vector.broadcast %350 : vector<1x32xf32> to vector<16x32xf32>
    %352 = arith.addf %348, %351 : vector<16x32xf32>
    %353 = arith.truncf %352 : vector<16x32xf32> to vector<16x32xbf16>
    %c2_168 = arith.constant 2 : index
    %c0_169 = arith.constant 0 : index
    %c0_170 = arith.constant 0 : index
    %354 = vector.load %arg11[%c2_168, %c0_169, %c0_170] : memref<3x32x48xbf16, #tpu.memory_space<vmem>>, vector<1x32x48xbf16>
    %355 = vector.shape_cast %354 : vector<1x32x48xbf16> to vector<32x48xbf16>
    %cst_171 = arith.constant dense<0.000000e+00> : vector<16x48xf32>
    %356 = tpu.matmul %353, %355, %cst_171 {dimension_numbers = #tpu.dot_dimension_numbers<[1], [0], [0], [1], [0, 0, 1, 1], [], []>} : vector<16x32xbf16>, vector<32x48xbf16>, vector<16x48xf32> -> vector<16x48xf32>
    %c2_172 = arith.constant 2 : index
    %c0_173 = arith.constant 0 : index
    %c0_174 = arith.constant 0 : index
    %357 = vector.load %arg12[%c2_172, %c0_173, %c0_174] : memref<3x1x48xf32, #tpu.memory_space<vmem>>, vector<1x1x48xf32>
    %358 = vector.shape_cast %357 : vector<1x1x48xf32> to vector<1x48xf32>
    %359 = vector.broadcast %358 : vector<1x48xf32> to vector<16x48xf32>
    %360 = arith.addf %356, %359 : vector<16x48xf32>
    %361 = vector.extract_strided_slice %360 {offsets = [0, 0], sizes = [16, 32], strides = [1, 1]} : vector<16x48xf32> to vector<16x32xf32>
    %cst_175 = arith.constant 0.000000e+00 : f32
    %362 = vector.broadcast %cst_175 : f32 to vector<16x32xf32>
    %363 = arith.maximumf %361, %362 : vector<16x32xf32>
    %364 = math.absf %361 : vector<16x32xf32>
    %cst_176 = arith.constant 0.000000e+00 : f32
    %365 = vector.broadcast %cst_176 : f32 to vector<16x32xf32>
    %366 = arith.subf %365, %364 : vector<16x32xf32>
    %367 = math.exp %366 : vector<16x32xf32>
    %cst_177 = arith.constant 1.000000e+00 : f32
    %368 = vector.broadcast %cst_177 : f32 to vector<16x32xf32>
    %369 = arith.addf %368, %367 : vector<16x32xf32>
    %370 = math.log %369 : vector<16x32xf32>
    %371 = arith.addf %363, %370 : vector<16x32xf32>
    %372 = vector.extract_strided_slice %360 {offsets = [0, 32], sizes = [16, 8], strides = [1, 1]} : vector<16x48xf32> to vector<16x8xf32>
    %373 = vector.extract_strided_slice %360 {offsets = [0, 40], sizes = [16, 8], strides = [1, 1]} : vector<16x48xf32> to vector<16x8xf32>
    %374 = arith.mulf %352, %371 : vector<16x32xf32>
    %375 = arith.mulf %372, %373 : vector<16x8xf32>
    %cst_178 = arith.constant dense<0.000000e+00> : vector<16xf32>
    %376 = vector.multi_reduction <add>, %375, %cst_178 [1] : vector<16x8xf32> to vector<16xf32>
    %377 = vector.shape_cast %376 : vector<16xf32> to vector<16x1xf32>
    %378 = vector.broadcast %377 : vector<16x1xf32> to vector<16x32xf32>
    %379 = arith.mulf %374, %378 : vector<16x32xf32>
    %cst_179 = arith.constant 0.000000e+00 : f32
    %380 = vector.broadcast %cst_179 : f32 to vector<16x32xf32>
    %381 = arith.subf %380, %379 : vector<16x32xf32>
    %382 = math.exp %381 : vector<16x32xf32>
    %cst_180 = arith.constant 1.000000e+00 : f32
    %383 = vector.broadcast %cst_180 : f32 to vector<16x32xf32>
    %384 = arith.addf %383, %382 : vector<16x32xf32>
    %cst_181 = arith.constant 1.000000e+00 : f32
    %385 = vector.broadcast %cst_181 : f32 to vector<16x32xf32>
    %386 = arith.divf %385, %384 : vector<16x32xf32>
    %387 = arith.mulf %379, %386 : vector<16x32xf32>
    %388 = arith.mulf %387, %298 : vector<16x32xf32>
    %c2_182 = arith.constant 2 : index
    %c0_183 = arith.constant 0 : index
    %c0_184 = arith.constant 0 : index
    %389 = vector.load %arg13[%c2_182, %c0_183, %c0_184] : memref<3x32x16xbf16, #tpu.memory_space<vmem>>, vector<1x32x16xbf16>
    %390 = vector.shape_cast %389 : vector<1x32x16xbf16> to vector<32x16xbf16>
    %391 = arith.truncf %388 : vector<16x32xf32> to vector<16x32xbf16>
    %cst_185 = arith.constant dense<0.000000e+00> : vector<16x16xf32>
    %392 = tpu.matmul %391, %390, %cst_185 {dimension_numbers = #tpu.dot_dimension_numbers<[1], [0], [0], [1], [0, 0, 1, 1], [], []>} : vector<16x32xbf16>, vector<32x16xbf16>, vector<16x16xf32> -> vector<16x16xf32>
    %c2_186 = arith.constant 2 : index
    %c0_187 = arith.constant 0 : index
    %c0_188 = arith.constant 0 : index
    %393 = vector.load %arg14[%c2_186, %c0_187, %c0_188] : memref<3x1x16xf32, #tpu.memory_space<vmem>>, vector<1x1x16xf32>
    %394 = vector.shape_cast %393 : vector<1x1x16xf32> to vector<1x16xf32>
    %395 = vector.broadcast %394 : vector<1x16xf32> to vector<16x16xf32>
    %396 = arith.addf %392, %395 : vector<16x16xf32>
    %397 = vector.extract_strided_slice %396 {offsets = [0, 0], sizes = [8, 16], strides = [1, 1]} : vector<16x16xf32> to vector<8x16xf32>
    %cst_189 = arith.constant dense<0.000000e+00> : vector<16xf32>
    %398 = vector.multi_reduction <add>, %397, %cst_189 [0] : vector<8x16xf32> to vector<16xf32>
    %399 = vector.shape_cast %398 : vector<16xf32> to vector<1x16xf32>
    %cst_190 = arith.constant 8.000000e+00 : f32
    %400 = vector.broadcast %cst_190 : f32 to vector<1x16xf32>
    %401 = arith.divf %399, %400 : vector<1x16xf32>
    %402 = vector.extract_strided_slice %396 {offsets = [8, 0], sizes = [8, 16], strides = [1, 1]} : vector<16x16xf32> to vector<8x16xf32>
    %cst_191 = arith.constant dense<0.000000e+00> : vector<16xf32>
    %403 = vector.multi_reduction <add>, %402, %cst_191 [0] : vector<8x16xf32> to vector<16xf32>
    %404 = vector.shape_cast %403 : vector<16xf32> to vector<1x16xf32>
    %cst_192 = arith.constant 8.000000e+00 : f32
    %405 = vector.broadcast %cst_192 : f32 to vector<1x16xf32>
    %406 = arith.divf %404, %405 : vector<1x16xf32>
    %407 = tpu.concatenate %401, %406 in 0 : vector<1x16xf32>, vector<1x16xf32> -> vector<2x16xf32>
    %c0_193 = arith.constant 0 : index
    %c0_194 = arith.constant 0 : index
    %408 = vector.load %arg15[%c0_193, %c0_194] : memref<16x4xbf16, #tpu.memory_space<vmem>>, vector<16x4xbf16>
    %409 = arith.truncf %407 : vector<2x16xf32> to vector<2x16xbf16>
    %cst_195 = arith.constant dense<0.000000e+00> : vector<2x4xf32>
    %410 = tpu.matmul %409, %408, %cst_195 {dimension_numbers = #tpu.dot_dimension_numbers<[1], [0], [0], [1], [0, 0, 1, 1], [], []>} : vector<2x16xbf16>, vector<16x4xbf16>, vector<2x4xf32> -> vector<2x4xf32>
    %c0_196 = arith.constant 0 : index
    %c0_197 = arith.constant 0 : index
    %411 = vector.load %arg16[%c0_196, %c0_197] : memref<1x4xf32, #tpu.memory_space<vmem>>, vector<1x4xf32>
    %412 = vector.broadcast %411 : vector<1x4xf32> to vector<2x4xf32>
    %413 = arith.addf %410, %412 : vector<2x4xf32>
    %cst_198 = arith.constant 0.000000e+00 : f32
    %414 = vector.broadcast %cst_198 : f32 to vector<2x108xf32>
    %415 = tpu.concatenate %407, %413, %414 in 1 : vector<2x16xf32>, vector<2x4xf32>, vector<2x108xf32> -> vector<2x128xf32>
    %c0_199 = arith.constant 0 : index
    %c0_200 = arith.constant 0 : index
    %416 = vector.load %arg17[%c0_199, %c0_200] : memref<2x128xf32, #tpu.memory_space<vmem>>, vector<2x128xf32>
    tpu.vector_store %arg17[%c0_199, %c0_200], %415 {strides = array<i32>} : memref<2x128xf32, #tpu.memory_space<vmem>>, vector<2x128xf32>,
    return
  }
  func.func @transform_0(%arg0: i32) -> (i32, i32) {
    %c0_i32 = arith.constant 0 : i32
    %c0_i32_0 = arith.constant 0 : i32
    return %arg0, %c0_i32 : i32, i32
  }
  func.func @transform_1(%arg0: i32) -> (i32, i32) {
    %c0_i32 = arith.constant 0 : i32
    %c0_i32_0 = arith.constant 0 : i32
    %c0_i32_1 = arith.constant 0 : i32
    return %c0_i32, %c0_i32_0 : i32, i32
  }
  func.func @transform_2(%arg0: i32) -> (i32, i32) {
    %c0_i32 = arith.constant 0 : i32
    %c0_i32_0 = arith.constant 0 : i32
    %c0_i32_1 = arith.constant 0 : i32
    return %c0_i32, %c0_i32_0 : i32, i32
  }
  func.func @transform_3(%arg0: i32) -> (i32, i32, i32) {
    %c0_i32 = arith.constant 0 : i32
    %c0_i32_0 = arith.constant 0 : i32
    %c0_i32_1 = arith.constant 0 : i32
    %c0_i32_2 = arith.constant 0 : i32
    return %c0_i32, %c0_i32_0, %c0_i32_1 : i32, i32, i32
  }
  func.func @transform_4(%arg0: i32) -> (i32, i32, i32) {
    %c0_i32 = arith.constant 0 : i32
    %c0_i32_0 = arith.constant 0 : i32
    %c0_i32_1 = arith.constant 0 : i32
    %c0_i32_2 = arith.constant 0 : i32
    return %c0_i32, %c0_i32_0, %c0_i32_1 : i32, i32, i32
  }
  func.func @transform_5(%arg0: i32) -> (i32, i32, i32) {
    %c0_i32 = arith.constant 0 : i32
    %c0_i32_0 = arith.constant 0 : i32
    %c0_i32_1 = arith.constant 0 : i32
    %c0_i32_2 = arith.constant 0 : i32
    return %c0_i32, %c0_i32_0, %c0_i32_1 : i32, i32, i32
  }
  func.func @transform_6(%arg0: i32) -> (i32, i32, i32) {
    %c0_i32 = arith.constant 0 : i32
    %c0_i32_0 = arith.constant 0 : i32
    %c0_i32_1 = arith.constant 0 : i32
    %c0_i32_2 = arith.constant 0 : i32
    return %c0_i32, %c0_i32_0, %c0_i32_1 : i32, i32, i32
  }
  func.func @transform_7(%arg0: i32) -> (i32, i32, i32) {
    %c0_i32 = arith.constant 0 : i32
    %c0_i32_0 = arith.constant 0 : i32
    %c0_i32_1 = arith.constant 0 : i32
    %c0_i32_2 = arith.constant 0 : i32
    return %c0_i32, %c0_i32_0, %c0_i32_1 : i32, i32, i32
  }
  func.func @transform_8(%arg0: i32) -> (i32, i32, i32) {
    %c0_i32 = arith.constant 0 : i32
    %c0_i32_0 = arith.constant 0 : i32
    %c0_i32_1 = arith.constant 0 : i32
    %c0_i32_2 = arith.constant 0 : i32
    return %c0_i32, %c0_i32_0, %c0_i32_1 : i32, i32, i32
  }
  func.func @transform_9(%arg0: i32) -> (i32, i32, i32) {
    %c0_i32 = arith.constant 0 : i32
    %c0_i32_0 = arith.constant 0 : i32
    %c0_i32_1 = arith.constant 0 : i32
    %c0_i32_2 = arith.constant 0 : i32
    return %c0_i32, %c0_i32_0, %c0_i32_1 : i32, i32, i32
  }
  func.func @transform_10(%arg0: i32) -> (i32, i32, i32) {
    %c0_i32 = arith.constant 0 : i32
    %c0_i32_0 = arith.constant 0 : i32
    %c0_i32_1 = arith.constant 0 : i32
    %c0_i32_2 = arith.constant 0 : i32
    return %c0_i32, %c0_i32_0, %c0_i32_1 : i32, i32, i32
  }
  func.func @transform_11(%arg0: i32) -> (i32, i32, i32) {
    %c0_i32 = arith.constant 0 : i32
    %c0_i32_0 = arith.constant 0 : i32
    %c0_i32_1 = arith.constant 0 : i32
    %c0_i32_2 = arith.constant 0 : i32
    return %c0_i32, %c0_i32_0, %c0_i32_1 : i32, i32, i32
  }
  func.func @transform_12(%arg0: i32) -> (i32, i32, i32) {
    %c0_i32 = arith.constant 0 : i32
    %c0_i32_0 = arith.constant 0 : i32
    %c0_i32_1 = arith.constant 0 : i32
    %c0_i32_2 = arith.constant 0 : i32
    return %c0_i32, %c0_i32_0, %c0_i32_1 : i32, i32, i32
  }
  func.func @transform_13(%arg0: i32) -> (i32, i32, i32) {
    %c0_i32 = arith.constant 0 : i32
    %c0_i32_0 = arith.constant 0 : i32
    %c0_i32_1 = arith.constant 0 : i32
    %c0_i32_2 = arith.constant 0 : i32
    return %c0_i32, %c0_i32_0, %c0_i32_1 : i32, i32, i32
  }
  func.func @transform_14(%arg0: i32) -> (i32, i32) {
    %c0_i32 = arith.constant 0 : i32
    %c0_i32_0 = arith.constant 0 : i32
    %c0_i32_1 = arith.constant 0 : i32
    return %c0_i32, %c0_i32_0 : i32, i32
  }
  func.func @transform_15(%arg0: i32) -> (i32, i32) {
    %c0_i32 = arith.constant 0 : i32
    %c0_i32_0 = arith.constant 0 : i32
    %c0_i32_1 = arith.constant 0 : i32
    return %c0_i32, %c0_i32_0 : i32, i32
  }
  func.func @transform_16(%arg0: i32) -> (i32, i32) {
    %c0_i32 = arith.constant 0 : i32
    %c0_i32_0 = arith.constant 0 : i32
    return %arg0, %c0_i32 : i32, i32
  }
}

module attributes {stable_mosaic.version = 11 : i64} {
  func.func @fused_mamba_kernel(%arg0: i32, %arg1: memref<16x4xf32, #tpu.memory_space<vmem>>, %arg2: memref<4x16xbf16, #tpu.memory_space<vmem>>, %arg3: memref<1x16xf32, #tpu.memory_space<vmem>>, %arg4: memref<3x1x16xf32, #tpu.memory_space<vmem>>, %arg5: memref<3x16x64xbf16, #tpu.memory_space<vmem>>, %arg6: memref<3x1x64xf32, #tpu.memory_space<vmem>>, %arg7: memref<3x24x8xbf16, #tpu.memory_space<vmem>>, %arg8: memref<3x8x1xf32, #tpu.memory_space<vmem>>, %arg9: memref<3x32x32xbf16, #tpu.memory_space<vmem>>, %arg10: memref<3x1x32xf32, #tpu.memory_space<vmem>>, %arg11: memref<3x32x48xbf16, #tpu.memory_space<vmem>>, %arg12: memref<3x1x48xf32, #tpu.memory_space<vmem>>, %arg13: memref<3x32x16xbf16, #tpu.memory_space<vmem>>, %arg14: memref<3x1x16xf32, #tpu.memory_space<vmem>>, %arg15: memref<16x4xbf16, #tpu.memory_space<vmem>>, %arg16: memref<1x4xf32, #tpu.memory_space<vmem>>, %arg17: memref<2x128xf32, #tpu.memory_space<vmem>>) attributes {dimension_semantics = [#tpu.dimension_semantics<parallel>], iteration_bounds = array<i64: 1>, scalar_prefetch = 0 : i64, scratch_operands = 0 : i64, tpu.core_type = #tpu.core_type<tc>, window_params = [{transform_indices = @transform_0, window_bounds = array<i64: 16, 4>}, {pipeline_mode = #tpu.pipeline_mode<synchronous>, transform_indices = @transform_1, window_bounds = array<i64: 4, 16>}, {pipeline_mode = #tpu.pipeline_mode<synchronous>, transform_indices = @transform_2, window_bounds = array<i64: 1, 16>}, {pipeline_mode = #tpu.pipeline_mode<synchronous>, transform_indices = @transform_3, window_bounds = array<i64: 3, 1, 16>}, {pipeline_mode = #tpu.pipeline_mode<synchronous>, transform_indices = @transform_4, window_bounds = array<i64: 3, 16, 64>}, {pipeline_mode = #tpu.pipeline_mode<synchronous>, transform_indices = @transform_5, window_bounds = array<i64: 3, 1, 64>}, {pipeline_mode = #tpu.pipeline_mode<synchronous>, transform_indices = @transform_6, window_bounds = array<i64: 3, 24, 8>}, {pipeline_mode = #tpu.pipeline_mode<synchronous>, transform_indices = @transform_7, window_bounds = array<i64: 3, 8, 1>}, {pipeline_mode = #tpu.pipeline_mode<synchronous>, transform_indices = @transform_8, window_bounds = array<i64: 3, 32, 32>}, {pipeline_mode = #tpu.pipeline_mode<synchronous>, transform_indices = @transform_9, window_bounds = array<i64: 3, 1, 32>}, {pipeline_mode = #tpu.pipeline_mode<synchronous>, transform_indices = @transform_10, window_bounds = array<i64: 3, 32, 48>}, {pipeline_mode = #tpu.pipeline_mode<synchronous>, transform_indices = @transform_11, window_bounds = array<i64: 3, 1, 48>}, {pipeline_mode = #tpu.pipeline_mode<synchronous>, transform_indices = @transform_12, window_bounds = array<i64: 3, 32, 16>}, {pipeline_mode = #tpu.pipeline_mode<synchronous>, transform_indices = @transform_13, window_bounds = array<i64: 3, 1, 16>}, {pipeline_mode = #tpu.pipeline_mode<synchronous>, transform_indices = @transform_14, window_bounds = array<i64: 16, 4>}, {pipeline_mode = #tpu.pipeline_mode<synchronous>, transform_indices = @transform_15, window_bounds = array<i64: 1, 4>}, {transform_indices = @transform_16, window_bounds = array<i64: 2, 128>}]} {
    %c0 = arith.constant 0 : index
    %c0_0 = arith.constant 0 : index
    %0 = vector.load %arg1[%c0, %c0_0] : memref<16x4xf32, #tpu.memory_space<vmem>>, vector<16x4xf32>
    %c0_1 = arith.constant 0 : index
    %c0_2 = arith.constant 0 : index
    %1 = vector.load %arg2[%c0_1, %c0_2] : memref<4x16xbf16, #tpu.memory_space<vmem>>, vector<4x16xbf16>
    %2 = arith.truncf %0 : vector<16x4xf32> to vector<16x4xbf16>
    %cst = arith.constant dense<0.000000e+00> : vector<16x16xf32>
    %3 = tpu.matmul %2, %1, %cst {dimension_numbers = #tpu.dot_dimension_numbers<[1], [0], [0], [1], [0, 0, 1, 1], [], []>} : vector<16x4xbf16>, vector<4x16xbf16>, vector<16x16xf32> -> vector<16x16xf32>
    %c0_3 = arith.constant 0 : index
    %c0_4 = arith.constant 0 : index
    %4 = vector.load %arg3[%c0_3, %c0_4] : memref<1x16xf32, #tpu.memory_space<vmem>>, vector<1x16xf32>
    %5 = vector.broadcast %4 : vector<1x16xf32> to vector<16x16xf32>
    %6 = arith.addf %3, %5 : vector<16x16xf32>
    %7 = arith.mulf %6, %6 : vector<16x16xf32>
    %cst_5 = arith.constant dense<0.000000e+00> : vector<16xf32>
    %8 = vector.multi_reduction <add>, %7, %cst_5 [1] : vector<16x16xf32> to vector<16xf32>
    %9 = vector.shape_cast %8 : vector<16xf32> to vector<16x1xf32>
    %cst_6 = arith.constant 1.600000e+01 : f32
    %10 = vector.broadcast %cst_6 : f32 to vector<16x1xf32>
    %11 = arith.divf %9, %10 : vector<16x1xf32>
    %cst_7 = arith.constant 9.99999974E-6 : f32
    %12 = vector.broadcast %cst_7 : f32 to vector<16x1xf32>
    %13 = arith.addf %11, %12 : vector<16x1xf32>
    %14 = math.rsqrt %13 : vector<16x1xf32>
    %15 = vector.broadcast %14 : vector<16x1xf32> to vector<16x16xf32>
    %16 = arith.mulf %6, %15 : vector<16x16xf32>
    %c0_8 = arith.constant 0 : index
    %c0_9 = arith.constant 0 : index
    %c0_10 = arith.constant 0 : index
    %17 = vector.load %arg4[%c0_8, %c0_9, %c0_10] : memref<3x1x16xf32, #tpu.memory_space<vmem>>, vector<1x1x16xf32>
    %18 = vector.shape_cast %17 : vector<1x1x16xf32> to vector<1x16xf32>
    %19 = vector.broadcast %18 : vector<1x16xf32> to vector<16x16xf32>
    %20 = arith.mulf %16, %19 : vector<16x16xf32>
    %21 = arith.truncf %20 : vector<16x16xf32> to vector<16x16xbf16>
    %c0_11 = arith.constant 0 : index
    %c0_12 = arith.constant 0 : index
    %c0_13 = arith.constant 0 : index
    %22 = vector.load %arg5[%c0_11, %c0_12, %c0_13] : memref<3x16x64xbf16, #tpu.memory_space<vmem>>, vector<1x16x64xbf16>
    %23 = vector.shape_cast %22 : vector<1x16x64xbf16> to vector<16x64xbf16>
    %cst_14 = arith.constant dense<0.000000e+00> : vector<16x64xf32>
    %24 = tpu.matmul %21, %23, %cst_14 {dimension_numbers = #tpu.dot_dimension_numbers<[1], [0], [0], [1], [0, 0, 1, 1], [], []>} : vector<16x16xbf16>, vector<16x64xbf16>, vector<16x64xf32> -> vector<16x64xf32>
    %c0_15 = arith.constant 0 : index
    %c0_16 = arith.constant 0 : index
    %c0_17 = arith.constant 0 : index
    %25 = vector.load %arg6[%c0_15, %c0_16, %c0_17] : memref<3x1x64xf32, #tpu.memory_space<vmem>>, vector<1x1x64xf32>
    %26 = vector.shape_cast %25 : vector<1x1x64xf32> to vector<1x64xf32>
    %27 = vector.broadcast %26 : vector<1x64xf32> to vector<16x64xf32>
    %28 = arith.addf %24, %27 : vector<16x64xf32>
    %29 = vector.extract_strided_slice %28 {offsets = [0, 0], sizes = [16, 32], strides = [1, 1]} : vector<16x64xf32> to vector<16x32xf32>
    %30 = vector.extract_strided_slice %28 {offsets = [0, 32], sizes = [16, 32], strides = [1, 1]} : vector<16x64xf32> to vector<16x32xf32>
    %cst_18 = arith.constant 0.000000e+00 : f32
    %31 = vector.broadcast %cst_18 : f32 to vector<16x32xf32>
    %32 = arith.subf %31, %30 : vector<16x32xf32>
    %33 = math.exp %32 : vector<16x32xf32>
    %cst_19 = arith.constant 1.000000e+00 : f32
    %34 = vector.broadcast %cst_19 : f32 to vector<16x32xf32>
    %35 = arith.addf %34, %33 : vector<16x32xf32>
    %cst_20 = arith.constant 1.000000e+00 : f32
    %36 = vector.broadcast %cst_20 : f32 to vector<16x32xf32>
    %37 = arith.divf %36, %35 : vector<16x32xf32>
    %38 = arith.mulf %30, %37 : vector<16x32xf32>
    %cst_21 = arith.constant 0.000000e+00 : f32
    %39 = vector.broadcast %cst_21 : f32 to vector<8x1xf32>
    %40 = vector.extract_strided_slice %29 {offsets = [0, 0], sizes = [8, 32], strides = [1, 1]} : vector<16x32xf32> to vector<8x32xf32>
    %41 = arith.truncf %40 : vector<8x32xf32> to vector<8x32xbf16>
    %c0_22 = arith.constant 0 : index
    %c0_23 = arith.constant 0 : index
    %c0_24 = arith.constant 0 : index
    %42 = vector.load %arg7[%c0_22, %c0_23, %c0_24] : memref<3x24x8xbf16, #tpu.memory_space<vmem>>, vector<1x24x8xbf16>
    %43 = vector.shape_cast %42 : vector<1x24x8xbf16> to vector<24x8xbf16>
    %cst_25 = arith.constant dense<0.000000e+00> : vector<24x32xf32>
    %44 = tpu.matmul %43, %41, %cst_25 {dimension_numbers = #tpu.dot_dimension_numbers<[1], [0], [0], [1], [0, 0, 1, 1], [], []>} : vector<24x8xbf16>, vector<8x32xbf16>, vector<24x32xf32> -> vector<24x32xf32>
    %45 = vector.extract_strided_slice %44 {offsets = [0, 0], sizes = [8, 32], strides = [1, 1]} : vector<24x32xf32> to vector<8x32xf32>
    %46 = vector.extract_strided_slice %44 {offsets = [8, 0], sizes = [8, 32], strides = [1, 1]} : vector<24x32xf32> to vector<8x32xf32>
    %47 = vector.extract_strided_slice %44 {offsets = [16, 0], sizes = [8, 32], strides = [1, 1]} : vector<24x32xf32> to vector<8x32xf32>
    %48 = vector.extract_strided_slice %45 {offsets = [0, 0], sizes = [8, 31], strides = [1, 1]} : vector<8x32xf32> to vector<8x31xf32>
    %49 = tpu.concatenate %39, %48 in 1 : vector<8x1xf32>, vector<8x31xf32> -> vector<8x32xf32>
    %50 = arith.addf %49, %46 : vector<8x32xf32>
    %51 = vector.extract_strided_slice %47 {offsets = [0, 1], sizes = [8, 31], strides = [1, 1]} : vector<8x32xf32> to vector<8x31xf32>
    %52 = tpu.concatenate %51, %39 in 1 : vector<8x31xf32>, vector<8x1xf32> -> vector<8x32xf32>
    %53 = arith.addf %50, %52 : vector<8x32xf32>
    %c0_26 = arith.constant 0 : index
    %c0_27 = arith.constant 0 : index
    %c0_28 = arith.constant 0 : index
    %54 = vector.load %arg8[%c0_26, %c0_27, %c0_28] : memref<3x8x1xf32, #tpu.memory_space<vmem>>, vector<1x8x1xf32>
    %55 = vector.shape_cast %54 : vector<1x8x1xf32> to vector<8x1xf32>
    %56 = vector.broadcast %55 : vector<8x1xf32> to vector<8x32xf32>
    %57 = arith.addf %53, %56 : vector<8x32xf32>
    %58 = vector.extract_strided_slice %29 {offsets = [8, 0], sizes = [8, 32], strides = [1, 1]} : vector<16x32xf32> to vector<8x32xf32>
    %59 = arith.truncf %58 : vector<8x32xf32> to vector<8x32xbf16>
    %c0_29 = arith.constant 0 : index
    %c0_30 = arith.constant 0 : index
    %c0_31 = arith.constant 0 : index
    %60 = vector.load %arg7[%c0_29, %c0_30, %c0_31] : memref<3x24x8xbf16, #tpu.memory_space<vmem>>, vector<1x24x8xbf16>
    %61 = vector.shape_cast %60 : vector<1x24x8xbf16> to vector<24x8xbf16>
    %cst_32 = arith.constant dense<0.000000e+00> : vector<24x32xf32>
    %62 = tpu.matmul %61, %59, %cst_32 {dimension_numbers = #tpu.dot_dimension_numbers<[1], [0], [0], [1], [0, 0, 1, 1], [], []>} : vector<24x8xbf16>, vector<8x32xbf16>, vector<24x32xf32> -> vector<24x32xf32>
    %63 = vector.extract_strided_slice %62 {offsets = [0, 0], sizes = [8, 32], strides = [1, 1]} : vector<24x32xf32> to vector<8x32xf32>
    %64 = vector.extract_strided_slice %62 {offsets = [8, 0], sizes = [8, 32], strides = [1, 1]} : vector<24x32xf32> to vector<8x32xf32>
    %65 = vector.extract_strided_slice %62 {offsets = [16, 0], sizes = [8, 32], strides = [1, 1]} : vector<24x32xf32> to vector<8x32xf32>
    %66 = vector.extract_strided_slice %63 {offsets = [0, 0], sizes = [8, 31], strides = [1, 1]} : vector<8x32xf32> to vector<8x31xf32>
    %67 = tpu.concatenate %39, %66 in 1 : vector<8x1xf32>, vector<8x31xf32> -> vector<8x32xf32>
    %68 = arith.addf %67, %64 : vector<8x32xf32>
    %69 = vector.extract_strided_slice %65 {offsets = [0, 1], sizes = [8, 31], strides = [1, 1]} : vector<8x32xf32> to vector<8x31xf32>
    %70 = tpu.concatenate %69, %39 in 1 : vector<8x31xf32>, vector<8x1xf32> -> vector<8x32xf32>
    %71 = arith.addf %68, %70 : vector<8x32xf32>
    %c0_33 = arith.constant 0 : index
    %c0_34 = arith.constant 0 : index
    %c0_35 = arith.constant 0 : index
    %72 = vector.load %arg8[%c0_33, %c0_34, %c0_35] : memref<3x8x1xf32, #tpu.memory_space<vmem>>, vector<1x8x1xf32>
    %73 = vector.shape_cast %72 : vector<1x8x1xf32> to vector<8x1xf32>
    %74 = vector.broadcast %73 : vector<8x1xf32> to vector<8x32xf32>
    %75 = arith.addf %71, %74 : vector<8x32xf32>
    %76 = tpu.concatenate %57, %75 in 0 : vector<8x32xf32>, vector<8x32xf32> -> vector<16x32xf32>
    %cst_36 = arith.constant 0.000000e+00 : f32
    %77 = vector.broadcast %cst_36 : f32 to vector<16x32xf32>
    %78 = arith.subf %77, %76 : vector<16x32xf32>
    %79 = math.exp %78 : vector<16x32xf32>
    %cst_37 = arith.constant 1.000000e+00 : f32
    %80 = vector.broadcast %cst_37 : f32 to vector<16x32xf32>
    %81 = arith.addf %80, %79 : vector<16x32xf32>
    %cst_38 = arith.constant 1.000000e+00 : f32
    %82 = vector.broadcast %cst_38 : f32 to vector<16x32xf32>
    %83 = arith.divf %82, %81 : vector<16x32xf32>
    %84 = arith.mulf %76, %83 : vector<16x32xf32>
    %c0_39 = arith.constant 0 : index
    %c0_40 = arith.constant 0 : index
    %c0_41 = arith.constant 0 : index
    %85 = vector.load %arg9[%c0_39, %c0_40, %c0_41] : memref<3x32x32xbf16, #tpu.memory_space<vmem>>, vector<1x32x32xbf16>
    %86 = vector.shape_cast %85 : vector<1x32x32xbf16> to vector<32x32xbf16>
    %87 = arith.truncf %84 : vector<16x32xf32> to vector<16x32xbf16>
    %cst_42 = arith.constant dense<0.000000e+00> : vector<16x32xf32>
    %88 = tpu.matmul %87, %86, %cst_42 {dimension_numbers = #tpu.dot_dimension_numbers<[1], [0], [0], [1], [0, 0, 1, 1], [], []>} : vector<16x32xbf16>, vector<32x32xbf16>, vector<16x32xf32> -> vector<16x32xf32>
    %c0_43 = arith.constant 0 : index
    %c0_44 = arith.constant 0 : index
    %c0_45 = arith.constant 0 : index
    %89 = vector.load %arg10[%c0_43, %c0_44, %c0_45] : memref<3x1x32xf32, #tpu.memory_space<vmem>>, vector<1x1x32xf32>
    %90 = vector.shape_cast %89 : vector<1x1x32xf32> to vector<1x32xf32>
    %91 = vector.broadcast %90 : vector<1x32xf32> to vector<16x32xf32>
    %92 = arith.addf %88, %91 : vector<16x32xf32>
    %93 = arith.truncf %92 : vector<16x32xf32> to vector<16x32xbf16>
    %c0_46 = arith.constant 0 : index
    %c0_47 = arith.constant 0 : index
    %c0_48 = arith.constant 0 : index
    %94 = vector.load %arg11[%c0_46, %c0_47, %c0_48] : memref<3x32x48xbf16, #tpu.memory_space<vmem>>, vector<1x32x48xbf16>
    %95 = vector.shape_cast %94 : vector<1x32x48xbf16> to vector<32x48xbf16>
    %cst_49 = arith.constant dense<0.000000e+00> : vector<16x48xf32>
    %96 = tpu.matmul %93, %95, %cst_49 {dimension_numbers = #tpu.dot_dimension_numbers<[1], [0], [0], [1], [0, 0, 1, 1], [], []>} : vector<16x32xbf16>, vector<32x48xbf16>, vector<16x48xf32> -> vector<16x48xf32>
    %c0_50 = arith.constant 0 : index
    %c0_51 = arith.constant 0 : index
    %c0_52 = arith.constant 0 : index
    %97 = vector.load %arg12[%c0_50, %c0_51, %c0_52] : memref<3x1x48xf32, #tpu.memory_space<vmem>>, vector<1x1x48xf32>
    %98 = vector.shape_cast %97 : vector<1x1x48xf32> to vector<1x48xf32>
    %99 = vector.broadcast %98 : vector<1x48xf32> to vector<16x48xf32>
    %100 = arith.addf %96, %99 : vector<16x48xf32>
    %101 = vector.extract_strided_slice %100 {offsets = [0, 0], sizes = [16, 32], strides = [1, 1]} : vector<16x48xf32> to vector<16x32xf32>
    %cst_53 = arith.constant 0.000000e+00 : f32
    %102 = vector.broadcast %cst_53 : f32 to vector<16x32xf32>
    %103 = arith.maximumf %101, %102 : vector<16x32xf32>
    %104 = math.absf %101 : vector<16x32xf32>
    %cst_54 = arith.constant 0.000000e+00 : f32
    %105 = vector.broadcast %cst_54 : f32 to vector<16x32xf32>
    %106 = arith.subf %105, %104 : vector<16x32xf32>
    %107 = math.exp %106 : vector<16x32xf32>
    %cst_55 = arith.constant 1.000000e+00 : f32
    %108 = vector.broadcast %cst_55 : f32 to vector<16x32xf32>
    %109 = arith.addf %108, %107 : vector<16x32xf32>
    %110 = math.log %109 : vector<16x32xf32>
    %111 = arith.addf %103, %110 : vector<16x32xf32>
    %112 = vector.extract_strided_slice %100 {offsets = [0, 32], sizes = [16, 8], strides = [1, 1]} : vector<16x48xf32> to vector<16x8xf32>
    %113 = vector.extract_strided_slice %100 {offsets = [0, 40], sizes = [16, 8], strides = [1, 1]} : vector<16x48xf32> to vector<16x8xf32>
    %114 = arith.mulf %92, %111 : vector<16x32xf32>
    %115 = arith.mulf %112, %113 : vector<16x8xf32>
    %cst_56 = arith.constant dense<0.000000e+00> : vector<16xf32>
    %116 = vector.multi_reduction <add>, %115, %cst_56 [1] : vector<16x8xf32> to vector<16xf32>
    %117 = vector.shape_cast %116 : vector<16xf32> to vector<16x1xf32>
    %118 = vector.broadcast %117 : vector<16x1xf32> to vector<16x32xf32>
    %119 = arith.mulf %114, %118 : vector<16x32xf32>
    %cst_57 = arith.constant 0.000000e+00 : f32
    %120 = vector.broadcast %cst_57 : f32 to vector<16x32xf32>
    %121 = arith.subf %120, %119 : vector<16x32xf32>
    %122 = math.exp %121 : vector<16x32xf32>
    %cst_58 = arith.constant 1.000000e+00 : f32
    %123 = vector.broadcast %cst_58 : f32 to vector<16x32xf32>
    %124 = arith.addf %123, %122 : vector<16x32xf32>
    %cst_59 = arith.constant 1.000000e+00 : f32
    %125 = vector.broadcast %cst_59 : f32 to vector<16x32xf32>
    %126 = arith.divf %125, %124 : vector<16x32xf32>
    %127 = arith.mulf %119, %126 : vector<16x32xf32>
    %128 = arith.mulf %127, %38 : vector<16x32xf32>
    %c0_60 = arith.constant 0 : index
    %c0_61 = arith.constant 0 : index
    %c0_62 = arith.constant 0 : index
    %129 = vector.load %arg13[%c0_60, %c0_61, %c0_62] : memref<3x32x16xbf16, #tpu.memory_space<vmem>>, vector<1x32x16xbf16>
    %130 = vector.shape_cast %129 : vector<1x32x16xbf16> to vector<32x16xbf16>
    %131 = arith.truncf %128 : vector<16x32xf32> to vector<16x32xbf16>
    %cst_63 = arith.constant dense<0.000000e+00> : vector<16x16xf32>
    %132 = tpu.matmul %131, %130, %cst_63 {dimension_numbers = #tpu.dot_dimension_numbers<[1], [0], [0], [1], [0, 0, 1, 1], [], []>} : vector<16x32xbf16>, vector<32x16xbf16>, vector<16x16xf32> -> vector<16x16xf32>
    %c0_64 = arith.constant 0 : index
    %c0_65 = arith.constant 0 : index
    %c0_66 = arith.constant 0 : index
    %133 = vector.load %arg14[%c0_64, %c0_65, %c0_66] : memref<3x1x16xf32, #tpu.memory_space<vmem>>, vector<1x1x16xf32>
    %134 = vector.shape_cast %133 : vector<1x1x16xf32> to vector<1x16xf32>
    %135 = vector.broadcast %134 : vector<1x16xf32> to vector<16x16xf32>
    %136 = arith.addf %132, %135 : vector<16x16xf32>
    %137 = arith.mulf %136, %136 : vector<16x16xf32>
    %cst_67 = arith.constant dense<0.000000e+00> : vector<16xf32>
    %138 = vector.multi_reduction <add>, %137, %cst_67 [1] : vector<16x16xf32> to vector<16xf32>
    %139 = vector.shape_cast %138 : vector<16xf32> to vector<16x1xf32>
    %cst_68 = arith.constant 1.600000e+01 : f32
    %140 = vector.broadcast %cst_68 : f32 to vector<16x1xf32>
    %141 = arith.divf %139, %140 : vector<16x1xf32>
    %cst_69 = arith.constant 9.99999974E-6 : f32
    %142 = vector.broadcast %cst_69 : f32 to vector<16x1xf32>
    %143 = arith.addf %141, %142 : vector<16x1xf32>
    %144 = math.rsqrt %143 : vector<16x1xf32>
    %145 = vector.broadcast %144 : vector<16x1xf32> to vector<16x16xf32>
    %146 = arith.mulf %136, %145 : vector<16x16xf32>
    %c1 = arith.constant 1 : index
    %c0_70 = arith.constant 0 : index
    %c0_71 = arith.constant 0 : index
    %147 = vector.load %arg4[%c1, %c0_70, %c0_71] : memref<3x1x16xf32, #tpu.memory_space<vmem>>, vector<1x1x16xf32>
    %148 = vector.shape_cast %147 : vector<1x1x16xf32> to vector<1x16xf32>
    %149 = vector.broadcast %148 : vector<1x16xf32> to vector<16x16xf32>
    %150 = arith.mulf %146, %149 : vector<16x16xf32>
    %151 = arith.truncf %150 : vector<16x16xf32> to vector<16x16xbf16>
    %c1_72 = arith.constant 1 : index
    %c0_73 = arith.constant 0 : index
    %c0_74 = arith.constant 0 : index
    %152 = vector.load %arg5[%c1_72, %c0_73, %c0_74] : memref<3x16x64xbf16, #tpu.memory_space<vmem>>, vector<1x16x64xbf16>
    %153 = vector.shape_cast %152 : vector<1x16x64xbf16> to vector<16x64xbf16>
    %cst_75 = arith.constant dense<0.000000e+00> : vector<16x64xf32>
    %154 = tpu.matmul %151, %153, %cst_75 {dimension_numbers = #tpu.dot_dimension_numbers<[1], [0], [0], [1], [0, 0, 1, 1], [], []>} : vector<16x16xbf16>, vector<16x64xbf16>, vector<16x64xf32> -> vector<16x64xf32>
    %c1_76 = arith.constant 1 : index
    %c0_77 = arith.constant 0 : index
    %c0_78 = arith.constant 0 : index
    %155 = vector.load %arg6[%c1_76, %c0_77, %c0_78] : memref<3x1x64xf32, #tpu.memory_space<vmem>>, vector<1x1x64xf32>
    %156 = vector.shape_cast %155 : vector<1x1x64xf32> to vector<1x64xf32>
    %157 = vector.broadcast %156 : vector<1x64xf32> to vector<16x64xf32>
    %158 = arith.addf %154, %157 : vector<16x64xf32>
    %159 = vector.extract_strided_slice %158 {offsets = [0, 0], sizes = [16, 32], strides = [1, 1]} : vector<16x64xf32> to vector<16x32xf32>
    %160 = vector.extract_strided_slice %158 {offsets = [0, 32], sizes = [16, 32], strides = [1, 1]} : vector<16x64xf32> to vector<16x32xf32>
    %cst_79 = arith.constant 0.000000e+00 : f32
    %161 = vector.broadcast %cst_79 : f32 to vector<16x32xf32>
    %162 = arith.subf %161, %160 : vector<16x32xf32>
    %163 = math.exp %162 : vector<16x32xf32>
    %cst_80 = arith.constant 1.000000e+00 : f32
    %164 = vector.broadcast %cst_80 : f32 to vector<16x32xf32>
    %165 = arith.addf %164, %163 : vector<16x32xf32>
    %cst_81 = arith.constant 1.000000e+00 : f32
    %166 = vector.broadcast %cst_81 : f32 to vector<16x32xf32>
    %167 = arith.divf %166, %165 : vector<16x32xf32>
    %168 = arith.mulf %160, %167 : vector<16x32xf32>
    %cst_82 = arith.constant 0.000000e+00 : f32
    %169 = vector.broadcast %cst_82 : f32 to vector<8x1xf32>
    %170 = vector.extract_strided_slice %159 {offsets = [0, 0], sizes = [8, 32], strides = [1, 1]} : vector<16x32xf32> to vector<8x32xf32>
    %171 = arith.truncf %170 : vector<8x32xf32> to vector<8x32xbf16>
    %c1_83 = arith.constant 1 : index
    %c0_84 = arith.constant 0 : index
    %c0_85 = arith.constant 0 : index
    %172 = vector.load %arg7[%c1_83, %c0_84, %c0_85] : memref<3x24x8xbf16, #tpu.memory_space<vmem>>, vector<1x24x8xbf16>
    %173 = vector.shape_cast %172 : vector<1x24x8xbf16> to vector<24x8xbf16>
    %cst_86 = arith.constant dense<0.000000e+00> : vector<24x32xf32>
    %174 = tpu.matmul %173, %171, %cst_86 {dimension_numbers = #tpu.dot_dimension_numbers<[1], [0], [0], [1], [0, 0, 1, 1], [], []>} : vector<24x8xbf16>, vector<8x32xbf16>, vector<24x32xf32> -> vector<24x32xf32>
    %175 = vector.extract_strided_slice %174 {offsets = [0, 0], sizes = [8, 32], strides = [1, 1]} : vector<24x32xf32> to vector<8x32xf32>
    %176 = vector.extract_strided_slice %174 {offsets = [8, 0], sizes = [8, 32], strides = [1, 1]} : vector<24x32xf32> to vector<8x32xf32>
    %177 = vector.extract_strided_slice %174 {offsets = [16, 0], sizes = [8, 32], strides = [1, 1]} : vector<24x32xf32> to vector<8x32xf32>
    %178 = vector.extract_strided_slice %175 {offsets = [0, 0], sizes = [8, 31], strides = [1, 1]} : vector<8x32xf32> to vector<8x31xf32>
    %179 = tpu.concatenate %169, %178 in 1 : vector<8x1xf32>, vector<8x31xf32> -> vector<8x32xf32>
    %180 = arith.addf %179, %176 : vector<8x32xf32>
    %181 = vector.extract_strided_slice %177 {offsets = [0, 1], sizes = [8, 31], strides = [1, 1]} : vector<8x32xf32> to vector<8x31xf32>
    %182 = tpu.concatenate %181, %169 in 1 : vector<8x31xf32>, vector<8x1xf32> -> vector<8x32xf32>
    %183 = arith.addf %180, %182 : vector<8x32xf32>
    %c1_87 = arith.constant 1 : index
    %c0_88 = arith.constant 0 : index
    %c0_89 = arith.constant 0 : index
    %184 = vector.load %arg8[%c1_87, %c0_88, %c0_89] : memref<3x8x1xf32, #tpu.memory_space<vmem>>, vector<1x8x1xf32>
    %185 = vector.shape_cast %184 : vector<1x8x1xf32> to vector<8x1xf32>
    %186 = vector.broadcast %185 : vector<8x1xf32> to vector<8x32xf32>
    %187 = arith.addf %183, %186 : vector<8x32xf32>
    %188 = vector.extract_strided_slice %159 {offsets = [8, 0], sizes = [8, 32], strides = [1, 1]} : vector<16x32xf32> to vector<8x32xf32>
    %189 = arith.truncf %188 : vector<8x32xf32> to vector<8x32xbf16>
    %c1_90 = arith.constant 1 : index
    %c0_91 = arith.constant 0 : index
    %c0_92 = arith.constant 0 : index
    %190 = vector.load %arg7[%c1_90, %c0_91, %c0_92] : memref<3x24x8xbf16, #tpu.memory_space<vmem>>, vector<1x24x8xbf16>
    %191 = vector.shape_cast %190 : vector<1x24x8xbf16> to vector<24x8xbf16>
    %cst_93 = arith.constant dense<0.000000e+00> : vector<24x32xf32>
    %192 = tpu.matmul %191, %189, %cst_93 {dimension_numbers = #tpu.dot_dimension_numbers<[1], [0], [0], [1], [0, 0, 1, 1], [], []>} : vector<24x8xbf16>, vector<8x32xbf16>, vector<24x32xf32> -> vector<24x32xf32>
    %193 = vector.extract_strided_slice %192 {offsets = [0, 0], sizes = [8, 32], strides = [1, 1]} : vector<24x32xf32> to vector<8x32xf32>
    %194 = vector.extract_strided_slice %192 {offsets = [8, 0], sizes = [8, 32], strides = [1, 1]} : vector<24x32xf32> to vector<8x32xf32>
    %195 = vector.extract_strided_slice %192 {offsets = [16, 0], sizes = [8, 32], strides = [1, 1]} : vector<24x32xf32> to vector<8x32xf32>
    %196 = vector.extract_strided_slice %193 {offsets = [0, 0], sizes = [8, 31], strides = [1, 1]} : vector<8x32xf32> to vector<8x31xf32>
    %197 = tpu.concatenate %169, %196 in 1 : vector<8x1xf32>, vector<8x31xf32> -> vector<8x32xf32>
    %198 = arith.addf %197, %194 : vector<8x32xf32>
    %199 = vector.extract_strided_slice %195 {offsets = [0, 1], sizes = [8, 31], strides = [1, 1]} : vector<8x32xf32> to vector<8x31xf32>
    %200 = tpu.concatenate %199, %169 in 1 : vector<8x31xf32>, vector<8x1xf32> -> vector<8x32xf32>
    %201 = arith.addf %198, %200 : vector<8x32xf32>
    %c1_94 = arith.constant 1 : index
    %c0_95 = arith.constant 0 : index
    %c0_96 = arith.constant 0 : index
    %202 = vector.load %arg8[%c1_94, %c0_95, %c0_96] : memref<3x8x1xf32, #tpu.memory_space<vmem>>, vector<1x8x1xf32>
    %203 = vector.shape_cast %202 : vector<1x8x1xf32> to vector<8x1xf32>
    %204 = vector.broadcast %203 : vector<8x1xf32> to vector<8x32xf32>
    %205 = arith.addf %201, %204 : vector<8x32xf32>
    %206 = tpu.concatenate %187, %205 in 0 : vector<8x32xf32>, vector<8x32xf32> -> vector<16x32xf32>
    %cst_97 = arith.constant 0.000000e+00 : f32
    %207 = vector.broadcast %cst_97 : f32 to vector<16x32xf32>
    %208 = arith.subf %207, %206 : vector<16x32xf32>
    %209 = math.exp %208 : vector<16x32xf32>
    %cst_98 = arith.constant 1.000000e+00 : f32
    %210 = vector.broadcast %cst_98 : f32 to vector<16x32xf32>
    %211 = arith.addf %210, %209 : vector<16x32xf32>
    %cst_99 = arith.constant 1.000000e+00 : f32
    %212 = vector.broadcast %cst_99 : f32 to vector<16x32xf32>
    %213 = arith.divf %212, %211 : vector<16x32xf32>
    %214 = arith.mulf %206, %213 : vector<16x32xf32>
    %c1_100 = arith.constant 1 : index
    %c0_101 = arith.constant 0 : index
    %c0_102 = arith.constant 0 : index
    %215 = vector.load %arg9[%c1_100, %c0_101, %c0_102] : memref<3x32x32xbf16, #tpu.memory_space<vmem>>, vector<1x32x32xbf16>
    %216 = vector.shape_cast %215 : vector<1x32x32xbf16> to vector<32x32xbf16>
    %217 = arith.truncf %214 : vector<16x32xf32> to vector<16x32xbf16>
    %cst_103 = arith.constant dense<0.000000e+00> : vector<16x32xf32>
    %218 = tpu.matmul %217, %216, %cst_103 {dimension_numbers = #tpu.dot_dimension_numbers<[1], [0], [0], [1], [0, 0, 1, 1], [], []>} : vector<16x32xbf16>, vector<32x32xbf16>, vector<16x32xf32> -> vector<16x32xf32>
    %c1_104 = arith.constant 1 : index
    %c0_105 = arith.constant 0 : index
    %c0_106 = arith.constant 0 : index
    %219 = vector.load %arg10[%c1_104, %c0_105, %c0_106] : memref<3x1x32xf32, #tpu.memory_space<vmem>>, vector<1x1x32xf32>
    %220 = vector.shape_cast %219 : vector<1x1x32xf32> to vector<1x32xf32>
    %221 = vector.broadcast %220 : vector<1x32xf32> to vector<16x32xf32>
    %222 = arith.addf %218, %221 : vector<16x32xf32>
    %223 = arith.truncf %222 : vector<16x32xf32> to vector<16x32xbf16>
    %c1_107 = arith.constant 1 : index
    %c0_108 = arith.constant 0 : index
    %c0_109 = arith.constant 0 : index
    %224 = vector.load %arg11[%c1_107, %c0_108, %c0_109] : memref<3x32x48xbf16, #tpu.memory_space<vmem>>, vector<1x32x48xbf16>
    %225 = vector.shape_cast %224 : vector<1x32x48xbf16> to vector<32x48xbf16>
    %cst_110 = arith.constant dense<0.000000e+00> : vector<16x48xf32>
    %226 = tpu.matmul %223, %225, %cst_110 {dimension_numbers = #tpu.dot_dimension_numbers<[1], [0], [0], [1], [0, 0, 1, 1], [], []>} : vector<16x32xbf16>, vector<32x48xbf16>, vector<16x48xf32> -> vector<16x48xf32>
    %c1_111 = arith.constant 1 : index
    %c0_112 = arith.constant 0 : index
    %c0_113 = arith.constant 0 : index
    %227 = vector.load %arg12[%c1_111, %c0_112, %c0_113] : memref<3x1x48xf32, #tpu.memory_space<vmem>>, vector<1x1x48xf32>
    %228 = vector.shape_cast %227 : vector<1x1x48xf32> to vector<1x48xf32>
    %229 = vector.broadcast %228 : vector<1x48xf32> to vector<16x48xf32>
    %230 = arith.addf %226, %229 : vector<16x48xf32>
    %231 = vector.extract_strided_slice %230 {offsets = [0, 0], sizes = [16, 32], strides = [1, 1]} : vector<16x48xf32> to vector<16x32xf32>
    %cst_114 = arith.constant 0.000000e+00 : f32
    %232 = vector.broadcast %cst_114 : f32 to vector<16x32xf32>
    %233 = arith.maximumf %231, %232 : vector<16x32xf32>
    %234 = math.absf %231 : vector<16x32xf32>
    %cst_115 = arith.constant 0.000000e+00 : f32
    %235 = vector.broadcast %cst_115 : f32 to vector<16x32xf32>
    %236 = arith.subf %235, %234 : vector<16x32xf32>
    %237 = math.exp %236 : vector<16x32xf32>
    %cst_116 = arith.constant 1.000000e+00 : f32
    %238 = vector.broadcast %cst_116 : f32 to vector<16x32xf32>
    %239 = arith.addf %238, %237 : vector<16x32xf32>
    %240 = math.log %239 : vector<16x32xf32>
    %241 = arith.addf %233, %240 : vector<16x32xf32>
    %242 = vector.extract_strided_slice %230 {offsets = [0, 32], sizes = [16, 8], strides = [1, 1]} : vector<16x48xf32> to vector<16x8xf32>
    %243 = vector.extract_strided_slice %230 {offsets = [0, 40], sizes = [16, 8], strides = [1, 1]} : vector<16x48xf32> to vector<16x8xf32>
    %244 = arith.mulf %222, %241 : vector<16x32xf32>
    %245 = arith.mulf %242, %243 : vector<16x8xf32>
    %cst_117 = arith.constant dense<0.000000e+00> : vector<16xf32>
    %246 = vector.multi_reduction <add>, %245, %cst_117 [1] : vector<16x8xf32> to vector<16xf32>
    %247 = vector.shape_cast %246 : vector<16xf32> to vector<16x1xf32>
    %248 = vector.broadcast %247 : vector<16x1xf32> to vector<16x32xf32>
    %249 = arith.mulf %244, %248 : vector<16x32xf32>
    %cst_118 = arith.constant 0.000000e+00 : f32
    %250 = vector.broadcast %cst_118 : f32 to vector<16x32xf32>
    %251 = arith.subf %250, %249 : vector<16x32xf32>
    %252 = math.exp %251 : vector<16x32xf32>
    %cst_119 = arith.constant 1.000000e+00 : f32
    %253 = vector.broadcast %cst_119 : f32 to vector<16x32xf32>
    %254 = arith.addf %253, %252 : vector<16x32xf32>
    %cst_120 = arith.constant 1.000000e+00 : f32
    %255 = vector.broadcast %cst_120 : f32 to vector<16x32xf32>
    %256 = arith.divf %255, %254 : vector<16x32xf32>
    %257 = arith.mulf %249, %256 : vector<16x32xf32>
    %258 = arith.mulf %257, %168 : vector<16x32xf32>
    %c1_121 = arith.constant 1 : index
    %c0_122 = arith.constant 0 : index
    %c0_123 = arith.constant 0 : index
    %259 = vector.load %arg13[%c1_121, %c0_122, %c0_123] : memref<3x32x16xbf16, #tpu.memory_space<vmem>>, vector<1x32x16xbf16>
    %260 = vector.shape_cast %259 : vector<1x32x16xbf16> to vector<32x16xbf16>
    %261 = arith.truncf %258 : vector<16x32xf32> to vector<16x32xbf16>
    %cst_124 = arith.constant dense<0.000000e+00> : vector<16x16xf32>
    %262 = tpu.matmul %261, %260, %cst_124 {dimension_numbers = #tpu.dot_dimension_numbers<[1], [0], [0], [1], [0, 0, 1, 1], [], []>} : vector<16x32xbf16>, vector<32x16xbf16>, vector<16x16xf32> -> vector<16x16xf32>
    %c1_125 = arith.constant 1 : index
    %c0_126 = arith.constant 0 : index
    %c0_127 = arith.constant 0 : index
    %263 = vector.load %arg14[%c1_125, %c0_126, %c0_127] : memref<3x1x16xf32, #tpu.memory_space<vmem>>, vector<1x1x16xf32>
    %264 = vector.shape_cast %263 : vector<1x1x16xf32> to vector<1x16xf32>
    %265 = vector.broadcast %264 : vector<1x16xf32> to vector<16x16xf32>
    %266 = arith.addf %262, %265 : vector<16x16xf32>
    %267 = arith.mulf %266, %266 : vector<16x16xf32>
    %cst_128 = arith.constant dense<0.000000e+00> : vector<16xf32>
    %268 = vector.multi_reduction <add>, %267, %cst_128 [1] : vector<16x16xf32> to vector<16xf32>
    %269 = vector.shape_cast %268 : vector<16xf32> to vector<16x1xf32>
    %cst_129 = arith.constant 1.600000e+01 : f32
    %270 = vector.broadcast %cst_129 : f32 to vector<16x1xf32>
    %271 = arith.divf %269, %270 : vector<16x1xf32>
    %cst_130 = arith.constant 9.99999974E-6 : f32
    %272 = vector.broadcast %cst_130 : f32 to vector<16x1xf32>
    %273 = arith.addf %271, %272 : vector<16x1xf32>
    %274 = math.rsqrt %273 : vector<16x1xf32>
    %275 = vector.broadcast %274 : vector<16x1xf32> to vector<16x16xf32>
    %276 = arith.mulf %266, %275 : vector<16x16xf32>
    %c2 = arith.constant 2 : index
    %c0_131 = arith.constant 0 : index
    %c0_132 = arith.constant 0 : index
    %277 = vector.load %arg4[%c2, %c0_131, %c0_132] : memref<3x1x16xf32, #tpu.memory_space<vmem>>, vector<1x1x16xf32>
    %278 = vector.shape_cast %277 : vector<1x1x16xf32> to vector<1x16xf32>
    %279 = vector.broadcast %278 : vector<1x16xf32> to vector<16x16xf32>
    %280 = arith.mulf %276, %279 : vector<16x16xf32>
    %281 = arith.truncf %280 : vector<16x16xf32> to vector<16x16xbf16>
    %c2_133 = arith.constant 2 : index
    %c0_134 = arith.constant 0 : index
    %c0_135 = arith.constant 0 : index
    %282 = vector.load %arg5[%c2_133, %c0_134, %c0_135] : memref<3x16x64xbf16, #tpu.memory_space<vmem>>, vector<1x16x64xbf16>
    %283 = vector.shape_cast %282 : vector<1x16x64xbf16> to vector<16x64xbf16>
    %cst_136 = arith.constant dense<0.000000e+00> : vector<16x64xf32>
    %284 = tpu.matmul %281, %283, %cst_136 {dimension_numbers = #tpu.dot_dimension_numbers<[1], [0], [0], [1], [0, 0, 1, 1], [], []>} : vector<16x16xbf16>, vector<16x64xbf16>, vector<16x64xf32> -> vector<16x64xf32>
    %c2_137 = arith.constant 2 : index
    %c0_138 = arith.constant 0 : index
    %c0_139 = arith.constant 0 : index
    %285 = vector.load %arg6[%c2_137, %c0_138, %c0_139] : memref<3x1x64xf32, #tpu.memory_space<vmem>>, vector<1x1x64xf32>
    %286 = vector.shape_cast %285 : vector<1x1x64xf32> to vector<1x64xf32>
    %287 = vector.broadcast %286 : vector<1x64xf32> to vector<16x64xf32>
    %288 = arith.addf %284, %287 : vector<16x64xf32>
    %289 = vector.extract_strided_slice %288 {offsets = [0, 0], sizes = [16, 32], strides = [1, 1]} : vector<16x64xf32> to vector<16x32xf32>
    %290 = vector.extract_strided_slice %288 {offsets = [0, 32], sizes = [16, 32], strides = [1, 1]} : vector<16x64xf32> to vector<16x32xf32>
    %cst_140 = arith.constant 0.000000e+00 : f32
    %291 = vector.broadcast %cst_140 : f32 to vector<16x32xf32>
    %292 = arith.subf %291, %290 : vector<16x32xf32>
    %293 = math.exp %292 : vector<16x32xf32>
    %cst_141 = arith.constant 1.000000e+00 : f32
    %294 = vector.broadcast %cst_141 : f32 to vector<16x32xf32>
    %295 = arith.addf %294, %293 : vector<16x32xf32>
    %cst_142 = arith.constant 1.000000e+00 : f32
    %296 = vector.broadcast %cst_142 : f32 to vector<16x32xf32>
    %297 = arith.divf %296, %295 : vector<16x32xf32>
    %298 = arith.mulf %290, %297 : vector<16x32xf32>
    %cst_143 = arith.constant 0.000000e+00 : f32
    %299 = vector.broadcast %cst_143 : f32 to vector<8x1xf32>
    %300 = vector.extract_strided_slice %289 {offsets = [0, 0], sizes = [8, 32], strides = [1, 1]} : vector<16x32xf32> to vector<8x32xf32>
    %301 = arith.truncf %300 : vector<8x32xf32> to vector<8x32xbf16>
    %c2_144 = arith.constant 2 : index
    %c0_145 = arith.constant 0 : index
    %c0_146 = arith.constant 0 : index
    %302 = vector.load %arg7[%c2_144, %c0_145, %c0_146] : memref<3x24x8xbf16, #tpu.memory_space<vmem>>, vector<1x24x8xbf16>
    %303 = vector.shape_cast %302 : vector<1x24x8xbf16> to vector<24x8xbf16>
    %cst_147 = arith.constant dense<0.000000e+00> : vector<24x32xf32>
    %304 = tpu.matmul %303, %301, %cst_147 {dimension_numbers = #tpu.dot_dimension_numbers<[1], [0], [0], [1], [0, 0, 1, 1], [], []>} : vector<24x8xbf16>, vector<8x32xbf16>, vector<24x32xf32> -> vector<24x32xf32>
    %305 = vector.extract_strided_slice %304 {offsets = [0, 0], sizes = [8, 32], strides = [1, 1]} : vector<24x32xf32> to vector<8x32xf32>
    %306 = vector.extract_strided_slice %304 {offsets = [8, 0], sizes = [8, 32], strides = [1, 1]} : vector<24x32xf32> to vector<8x32xf32>
    %307 = vector.extract_strided_slice %304 {offsets = [16, 0], sizes = [8, 32], strides = [1, 1]} : vector<24x32xf32> to vector<8x32xf32>
    %308 = vector.extract_strided_slice %305 {offsets = [0, 0], sizes = [8, 31], strides = [1, 1]} : vector<8x32xf32> to vector<8x31xf32>
    %309 = tpu.concatenate %299, %308 in 1 : vector<8x1xf32>, vector<8x31xf32> -> vector<8x32xf32>
    %310 = arith.addf %309, %306 : vector<8x32xf32>
    %311 = vector.extract_strided_slice %307 {offsets = [0, 1], sizes = [8, 31], strides = [1, 1]} : vector<8x32xf32> to vector<8x31xf32>
    %312 = tpu.concatenate %311, %299 in 1 : vector<8x31xf32>, vector<8x1xf32> -> vector<8x32xf32>
    %313 = arith.addf %310, %312 : vector<8x32xf32>
    %c2_148 = arith.constant 2 : index
    %c0_149 = arith.constant 0 : index
    %c0_150 = arith.constant 0 : index
    %314 = vector.load %arg8[%c2_148, %c0_149, %c0_150] : memref<3x8x1xf32, #tpu.memory_space<vmem>>, vector<1x8x1xf32>
    %315 = vector.shape_cast %314 : vector<1x8x1xf32> to vector<8x1xf32>
    %316 = vector.broadcast %315 : vector<8x1xf32> to vector<8x32xf32>
    %317 = arith.addf %313, %316 : vector<8x32xf32>
    %318 = vector.extract_strided_slice %289 {offsets = [8, 0], sizes = [8, 32], strides = [1, 1]} : vector<16x32xf32> to vector<8x32xf32>
    %319 = arith.truncf %318 : vector<8x32xf32> to vector<8x32xbf16>
    %c2_151 = arith.constant 2 : index
    %c0_152 = arith.constant 0 : index
    %c0_153 = arith.constant 0 : index
    %320 = vector.load %arg7[%c2_151, %c0_152, %c0_153] : memref<3x24x8xbf16, #tpu.memory_space<vmem>>, vector<1x24x8xbf16>
    %321 = vector.shape_cast %320 : vector<1x24x8xbf16> to vector<24x8xbf16>
    %cst_154 = arith.constant dense<0.000000e+00> : vector<24x32xf32>
    %322 = tpu.matmul %321, %319, %cst_154 {dimension_numbers = #tpu.dot_dimension_numbers<[1], [0], [0], [1], [0, 0, 1, 1], [], []>} : vector<24x8xbf16>, vector<8x32xbf16>, vector<24x32xf32> -> vector<24x32xf32>
    %323 = vector.extract_strided_slice %322 {offsets = [0, 0], sizes = [8, 32], strides = [1, 1]} : vector<24x32xf32> to vector<8x32xf32>
    %324 = vector.extract_strided_slice %322 {offsets = [8, 0], sizes = [8, 32], strides = [1, 1]} : vector<24x32xf32> to vector<8x32xf32>
    %325 = vector.extract_strided_slice %322 {offsets = [16, 0], sizes = [8, 32], strides = [1, 1]} : vector<24x32xf32> to vector<8x32xf32>
    %326 = vector.extract_strided_slice %323 {offsets = [0, 0], sizes = [8, 31], strides = [1, 1]} : vector<8x32xf32> to vector<8x31xf32>
    %327 = tpu.concatenate %299, %326 in 1 : vector<8x1xf32>, vector<8x31xf32> -> vector<8x32xf32>
    %328 = arith.addf %327, %324 : vector<8x32xf32>
    %329 = vector.extract_strided_slice %325 {offsets = [0, 1], sizes = [8, 31], strides = [1, 1]} : vector<8x32xf32> to vector<8x31xf32>
    %330 = tpu.concatenate %329, %299 in 1 : vector<8x31xf32>, vector<8x1xf32> -> vector<8x32xf32>
    %331 = arith.addf %328, %330 : vector<8x32xf32>
    %c2_155 = arith.constant 2 : index
    %c0_156 = arith.constant 0 : index
    %c0_157 = arith.constant 0 : index
    %332 = vector.load %arg8[%c2_155, %c0_156, %c0_157] : memref<3x8x1xf32, #tpu.memory_space<vmem>>, vector<1x8x1xf32>
    %333 = vector.shape_cast %332 : vector<1x8x1xf32> to vector<8x1xf32>
    %334 = vector.broadcast %333 : vector<8x1xf32> to vector<8x32xf32>
    %335 = arith.addf %331, %334 : vector<8x32xf32>
    %336 = tpu.concatenate %317, %335 in 0 : vector<8x32xf32>, vector<8x32xf32> -> vector<16x32xf32>
    %cst_158 = arith.constant 0.000000e+00 : f32
    %337 = vector.broadcast %cst_158 : f32 to vector<16x32xf32>
    %338 = arith.subf %337, %336 : vector<16x32xf32>
    %339 = math.exp %338 : vector<16x32xf32>
    %cst_159 = arith.constant 1.000000e+00 : f32
    %340 = vector.broadcast %cst_159 : f32 to vector<16x32xf32>
    %341 = arith.addf %340, %339 : vector<16x32xf32>
    %cst_160 = arith.constant 1.000000e+00 : f32
    %342 = vector.broadcast %cst_160 : f32 to vector<16x32xf32>
    %343 = arith.divf %342, %341 : vector<16x32xf32>
    %344 = arith.mulf %336, %343 : vector<16x32xf32>
    %c2_161 = arith.constant 2 : index
    %c0_162 = arith.constant 0 : index
    %c0_163 = arith.constant 0 : index
    %345 = vector.load %arg9[%c2_161, %c0_162, %c0_163] : memref<3x32x32xbf16, #tpu.memory_space<vmem>>, vector<1x32x32xbf16>
    %346 = vector.shape_cast %345 : vector<1x32x32xbf16> to vector<32x32xbf16>
    %347 = arith.truncf %344 : vector<16x32xf32> to vector<16x32xbf16>
    %cst_164 = arith.constant dense<0.000000e+00> : vector<16x32xf32>
    %348 = tpu.matmul %347, %346, %cst_164 {dimension_numbers = #tpu.dot_dimension_numbers<[1], [0], [0], [1], [0, 0, 1, 1], [], []>} : vector<16x32xbf16>, vector<32x32xbf16>, vector<16x32xf32> -> vector<16x32xf32>
    %c2_165 = arith.constant 2 : index
    %c0_166 = arith.constant 0 : index
    %c0_167 = arith.constant 0 : index
    %349 = vector.load %arg10[%c2_165, %c0_166, %c0_167] : memref<3x1x32xf32, #tpu.memory_space<vmem>>, vector<1x1x32xf32>
    %350 = vector.shape_cast %349 : vector<1x1x32xf32> to vector<1x32xf32>
    %351 = vector.broadcast %350 : vector<1x32xf32> to vector<16x32xf32>
    %352 = arith.addf %348, %351 : vector<16x32xf32>
    %353 = arith.truncf %352 : vector<16x32xf32> to vector<16x32xbf16>
    %c2_168 = arith.constant 2 : index
    %c0_169 = arith.constant 0 : index
    %c0_170 = arith.constant 0 : index
    %354 = vector.load %arg11[%c2_168, %c0_169, %c0_170] : memref<3x32x48xbf16, #tpu.memory_space<vmem>>, vector<1x32x48xbf16>
    %355 = vector.shape_cast %354 : vector<1x32x48xbf16> to vector<32x48xbf16>
    %cst_171 = arith.constant dense<0.000000e+00> : vector<16x48xf32>
    %356 = tpu.matmul %353, %355, %cst_171 {dimension_numbers = #tpu.dot_dimension_numbers<[1], [0], [0], [1], [0, 0, 1, 1], [], []>} : vector<16x32xbf16>, vector<32x48xbf16>, vector<16x48xf32> -> vector<16x48xf32>
    %c2_172 = arith.constant 2 : index
    %c0_173 = arith.constant 0 : index
    %c0_174 = arith.constant 0 : index
    %357 = vector.load %arg12[%c2_172, %c0_173, %c0_174] : memref<3x1x48xf32, #tpu.memory_space<vmem>>, vector<1x1x48xf32>
    %358 = vector.shape_cast %357 : vector<1x1x48xf32> to vector<1x48xf32>
    %359 = vector.broadcast %358 : vector<1x48xf32> to vector<16x48xf32>
    %360 = arith.addf %356, %359 : vector<16x48xf32>
    %361 = vector.extract_strided_slice %360 {offsets = [0, 0], sizes = [16, 32], strides = [1, 1]} : vector<16x48xf32> to vector<16x32xf32>
    %cst_175 = arith.constant 0.000000e+00 : f32
    %362 = vector.broadcast %cst_175 : f32 to vector<16x32xf32>
    %363 = arith.maximumf %361, %362 : vector<16x32xf32>
    %364 = math.absf %361 : vector<16x32xf32>
    %cst_176 = arith.constant 0.000000e+00 : f32
    %365 = vector.broadcast %cst_176 : f32 to vector<16x32xf32>
    %366 = arith.subf %365, %364 : vector<16x32xf32>
    %367 = math.exp %366 : vector<16x32xf32>
    %cst_177 = arith.constant 1.000000e+00 : f32
    %368 = vector.broadcast %cst_177 : f32 to vector<16x32xf32>
    %369 = arith.addf %368, %367 : vector<16x32xf32>
    %370 = math.log %369 : vector<16x32xf32>
    %371 = arith.addf %363, %370 : vector<16x32xf32>
    %372 = vector.extract_strided_slice %360 {offsets = [0, 32], sizes = [16, 8], strides = [1, 1]} : vector<16x48xf32> to vector<16x8xf32>
    %373 = vector.extract_strided_slice %360 {offsets = [0, 40], sizes = [16, 8], strides = [1, 1]} : vector<16x48xf32> to vector<16x8xf32>
    %374 = arith.mulf %352, %371 : vector<16x32xf32>
    %375 = arith.mulf %372, %373 : vector<16x8xf32>
    %cst_178 = arith.constant dense<0.000000e+00> : vector<16xf32>
    %376 = vector.multi_reduction <add>, %375, %cst_178 [1] : vector<16x8xf32> to vector<16xf32>
    %377 = vector.shape_cast %376 : vector<16xf32> to vector<16x1xf32>
    %378 = vector.broadcast %377 : vector<16x1xf32> to vector<16x32xf32>
    %379 = arith.mulf %374, %378 : vector<16x32xf32>
    %cst_179 = arith.constant 0.000000e+00 : f32
    %380 = vector.broadcast %cst_179 : f32 to vector<16x32xf32>
    %381 = arith.subf %380, %379 : vector<16x32xf32>
    %382 = math.exp %381 : vector<16x32xf32>
    %cst_180 = arith.constant 1.000000e+00 : f32
    %383 = vector.broadcast %cst_180 : f32 to vector<16x32xf32>
    %384 = arith.addf %383, %382 : vector<16x32xf32>
    %cst_181 = arith.constant 1.000000e+00 : f32
    %385 = vector.broadcast %cst_181 : f32 to vector<16x32xf32>
    %386 = arith.divf %385, %384 : vector<16x32xf32>
    %387 = arith.mulf %379, %386 : vector<16x32xf32>
    %388 = arith.mulf %387, %298 : vector<16x32xf32>
    %c2_182 = arith.constant 2 : index
    %c0_183 = arith.constant 0 : index
    %c0_184 = arith.constant 0 : index
    %389 = vector.load %arg13[%c2_182, %c0_183, %c0_184] : memref<3x32x16xbf16, #tpu.memory_space<vmem>>, vector<1x32x16xbf16>
    %390 = vector.shape_cast %389 : vector<1x32x16xbf16> to vector<32x16xbf16>
    %391 = arith.truncf %388 : vector<16x32xf32> to vector<16x32xbf16>
    %cst_185 = arith.constant dense<0.000000e+00> : vector<16x16xf32>
    %392 = tpu.matmul %391, %390, %cst_185 {dimension_numbers = #tpu.dot_dimension_numbers<[1], [0], [0], [1], [0, 0, 1, 1], [], []>} : vector<16x32xbf16>, vector<32x16xbf16>, vector<16x16xf32> -> vector<16x16xf32>
    %c2_186 = arith.constant 2 : index
    %c0_187 = arith.constant 0 : index
    %c0_188 = arith.constant 0 : index
    %393 = vector.load %arg14[%c2_186, %c0_187, %c0_188] : memref<3x1x16xf32, #tpu.memory_space<vmem>>, vector<1x1x16xf32>
    %394 = vector.shape_cast %393 : vector<1x1x16xf32> to vector<1x16xf32>
    %395 = vector.broadcast %394 : vector<1x16xf32> to vector<16x16xf32>
    %396 = arith.addf %392, %395 : vector<16x16xf32>
    %397 = vector.extract_strided_slice %396 {offsets = [0, 0], sizes = [8, 16], strides = [1, 1]} : vector<16x16xf32> to vector<8x16xf32>
    %cst_189 = arith.constant dense<0.000000e+00> : vector<16xf32>
    %398 = vector.multi_reduction <add>, %397, %cst_189 [0] : vector<8x16xf32> to vector<16xf32>
    %399 = vector.shape_cast %398 : vector<16xf32> to vector<1x16xf32>
    %cst_190 = arith.constant 8.000000e+00 : f32
    %400 = vector.broadcast %cst_190 : f32 to vector<1x16xf32>
    %401 = arith.divf %399, %400 : vector<1x16xf32>
    %402 = vector.extract_strided_slice %396 {offsets = [8, 0], sizes = [8, 16], strides = [1, 1]} : vector<16x16xf32> to vector<8x16xf32>
    %cst_191 = arith.constant dense<0.000000e+00> : vector<16xf32>
    %403 = vector.multi_reduction <add>, %402, %cst_191 [0] : vector<8x16xf32> to vector<16xf32>
    %404 = vector.shape_cast %403 : vector<16xf32> to vector<1x16xf32>
    %cst_192 = arith.constant 8.000000e+00 : f32
    %405 = vector.broadcast %cst_192 : f32 to vector<1x16xf32>
    %406 = arith.divf %404, %405 : vector<1x16xf32>
    %407 = tpu.concatenate %401, %406 in 0 : vector<1x16xf32>, vector<1x16xf32> -> vector<2x16xf32>
    %c0_193 = arith.constant 0 : index
    %c0_194 = arith.constant 0 : index
    %408 = vector.load %arg15[%c0_193, %c0_194] : memref<16x4xbf16, #tpu.memory_space<vmem>>, vector<16x4xbf16>
    %409 = arith.truncf %407 : vector<2x16xf32> to vector<2x16xbf16>
    %cst_195 = arith.constant dense<0.000000e+00> : vector<2x4xf32>
    %410 = tpu.matmul %409, %408, %cst_195 {dimension_numbers = #tpu.dot_dimension_numbers<[1], [0], [0], [1], [0, 0, 1, 1], [], []>} : vector<2x16xbf16>, vector<16x4xbf16>, vector<2x4xf32> -> vector<2x4xf32>
    %c0_196 = arith.constant 0 : index
    %c0_197 = arith.constant 0 : index
    %411 = vector.load %arg16[%c0_196, %c0_197] : memref<1x4xf32, #tpu.memory_space<vmem>>, vector<1x4xf32>
    %412 = vector.broadcast %411 : vector<1x4xf32> to vector<2x4xf32>
    %413 = arith.addf %410, %412 : vector<2x4xf32>
    %cst_198 = arith.constant 0.000000e+00 : f32
    %414 = vector.broadcast %cst_198 : f32 to vector<2x108xf32>
    %415 = tpu.concatenate %407, %413, %414 in 1 : vector<2x16xf32>, vector<2x4xf32>, vector<2x108xf32> -> vector<2x128xf32>
    %c0_199 = arith.constant 0 : index
    %c0_200 = arith.constant 0 : index
    %416 = vector.load %arg17[%c0_199, %c0_200] : memref<2x128xf32, #tpu.memory_space<vmem>>, vector<2x128xf32>
    tpu.vector_store %arg17[%c0_199, %c0_200], %415 {strides = array<i32>} : memref<2x128xf32, #tpu.memory_space<vmem>>, vector<2x128xf32>,
    return
  }
  func.func @transform_0(%arg0: i32) -> (i32, i32) {
    %c0_i32 = arith.constant 0 : i32
    %c0_i32_0 = arith.constant 0 : i32
    return %arg0, %c0_i32 : i32, i32
  }
  func.func @transform_1(%arg0: i32) -> (i32, i32) {
    %c0_i32 = arith.constant 0 : i32
    %c0_i32_0 = arith.constant 0 : i32
    %c0_i32_1 = arith.constant 0 : i32
    return %c0_i32, %c0_i32_0 : i32, i32
  }
  func.func @transform_2(%arg0: i32) -> (i32, i32) {
    %c0_i32 = arith.constant 0 : i32
    %c0_i32_0 = arith.constant 0 : i32
    %c0_i32_1 = arith.constant 0 : i32
    return %c0_i32, %c0_i32_0 : i32, i32
  }
  func.func @transform_3(%arg0: i32) -> (i32, i32, i32) {
    %c0_i32 = arith.constant 0 : i32
    %c0_i32_0 = arith.constant 0 : i32
    %c0_i32_1 = arith.constant 0 : i32
    %c0_i32_2 = arith.constant 0 : i32
    return %c0_i32, %c0_i32_0, %c0_i32_1 : i32, i32, i32
  }
  func.func @transform_4(%arg0: i32) -> (i32, i32, i32) {
    %c0_i32 = arith.constant 0 : i32
    %c0_i32_0 = arith.constant 0 : i32
    %c0_i32_1 = arith.constant 0 : i32
    %c0_i32_2 = arith.constant 0 : i32
    return %c0_i32, %c0_i32_0, %c0_i32_1 : i32, i32, i32
  }
  func.func @transform_5(%arg0: i32) -> (i32, i32, i32) {
    %c0_i32 = arith.constant 0 : i32
    %c0_i32_0 = arith.constant 0 : i32
    %c0_i32_1 = arith.constant 0 : i32
    %c0_i32_2 = arith.constant 0 : i32
    return %c0_i32, %c0_i32_0, %c0_i32_1 : i32, i32, i32
  }
  func.func @transform_6(%arg0: i32) -> (i32, i32, i32) {
    %c0_i32 = arith.constant 0 : i32
    %c0_i32_0 = arith.constant 0 : i32
    %c0_i32_1 = arith.constant 0 : i32
    %c0_i32_2 = arith.constant 0 : i32
    return %c0_i32, %c0_i32_0, %c0_i32_1 : i32, i32, i32
  }
  func.func @transform_7(%arg0: i32) -> (i32, i32, i32) {
    %c0_i32 = arith.constant 0 : i32
    %c0_i32_0 = arith.constant 0 : i32
    %c0_i32_1 = arith.constant 0 : i32
    %c0_i32_2 = arith.constant 0 : i32
    return %c0_i32, %c0_i32_0, %c0_i32_1 : i32, i32, i32
  }
  func.func @transform_8(%arg0: i32) -> (i32, i32, i32) {
    %c0_i32 = arith.constant 0 : i32
    %c0_i32_0 = arith.constant 0 : i32
    %c0_i32_1 = arith.constant 0 : i32
    %c0_i32_2 = arith.constant 0 : i32
    return %c0_i32, %c0_i32_0, %c0_i32_1 : i32, i32, i32
  }
  func.func @transform_9(%arg0: i32) -> (i32, i32, i32) {
    %c0_i32 = arith.constant 0 : i32
    %c0_i32_0 = arith.constant 0 : i32
    %c0_i32_1 = arith.constant 0 : i32
    %c0_i32_2 = arith.constant 0 : i32
    return %c0_i32, %c0_i32_0, %c0_i32_1 : i32, i32, i32
  }
  func.func @transform_10(%arg0: i32) -> (i32, i32, i32) {
    %c0_i32 = arith.constant 0 : i32
    %c0_i32_0 = arith.constant 0 : i32
    %c0_i32_1 = arith.constant 0 : i32
    %c0_i32_2 = arith.constant 0 : i32
    return %c0_i32, %c0_i32_0, %c0_i32_1 : i32, i32, i32
  }
  func.func @transform_11(%arg0: i32) -> (i32, i32, i32) {
    %c0_i32 = arith.constant 0 : i32
    %c0_i32_0 = arith.constant 0 : i32
    %c0_i32_1 = arith.constant 0 : i32
    %c0_i32_2 = arith.constant 0 : i32
    return %c0_i32, %c0_i32_0, %c0_i32_1 : i32, i32, i32
  }
  func.func @transform_12(%arg0: i32) -> (i32, i32, i32) {
    %c0_i32 = arith.constant 0 : i32
    %c0_i32_0 = arith.constant 0 : i32
    %c0_i32_1 = arith.constant 0 : i32
    %c0_i32_2 = arith.constant 0 : i32
    return %c0_i32, %c0_i32_0, %c0_i32_1 : i32, i32, i32
  }
  func.func @transform_13(%arg0: i32) -> (i32, i32, i32) {
    %c0_i32 = arith.constant 0 : i32
    %c0_i32_0 = arith.constant 0 : i32
    %c0_i32_1 = arith.constant 0 : i32
    %c0_i32_2 = arith.constant 0 : i32
    return %c0_i32, %c0_i32_0, %c0_i32_1 : i32, i32, i32
  }
  func.func @transform_14(%arg0: i32) -> (i32, i32) {
    %c0_i32 = arith.constant 0 : i32
    %c0_i32_0 = arith.constant 0 : i32
    %c0_i32_1 = arith.constant 0 : i32
    return %c0_i32, %c0_i32_0 : i32, i32
  }
  func.func @transform_15(%arg0: i32) -> (i32, i32) {
    %c0_i32 = arith.constant 0 : i32
    %c0_i32_0 = arith.constant 0 : i32
    %c0_i32_1 = arith.constant 0 : i32
    return %c0_i32, %c0_i32_0 : i32, i32
  }
  func.func @transform_16(%arg0: i32) -> (i32, i32) {
    %c0_i32 = arith.constant 0 : i32
    %c0_i32_0 = arith.constant 0 : i32
    return %arg0, %c0_i32 : i32, i32
  }
}

</mosaic_0001>

<llo_original>
// kernel: tpu_custom_call.1
$region0: #{tpu_custom_call.1}
  #allocation0 [shape = 'u32[]', space=smem, size = 0x4, offset = 0x4, fixed_abs, tag = 'smem constant byte address 0x4 - core index']
  #allocation1 [shape = 'u32[144,128]{1,0:T(1,128)}', space=vmem, size = 0x12000, scoped, tag = 'internal scratch']
  %s0 = inlined_call_operand.vmem [shape: f32[16,4], index: 0, kind: input, shape index: {}]
  %s1 = inlined_call_operand.vmem [shape: bf16[4,16], index: 1, kind: input, shape index: {}]
  %s2 = inlined_call_operand.vmem [shape: f32[1,16], index: 2, kind: input, shape index: {}]
  %s3 = inlined_call_operand.vmem [shape: f32[3,1,16], index: 3, kind: input, shape index: {}]
  %s4 = inlined_call_operand.vmem [shape: bf16[3,16,64], index: 4, kind: input, shape index: {}]
  %s5 = inlined_call_operand.vmem [shape: f32[3,1,64], index: 5, kind: input, shape index: {}]
  %s6 = inlined_call_operand.vmem [shape: bf16[3,24,8], index: 6, kind: input, shape index: {}]
  %s7 = inlined_call_operand.vmem [shape: f32[3,8,1], index: 7, kind: input, shape index: {}]
  %s8 = inlined_call_operand.vmem [shape: bf16[3,32,32], index: 8, kind: input, shape index: {}]
  %s9 = inlined_call_operand.vmem [shape: f32[3,1,32], index: 9, kind: input, shape index: {}]
  %s10 = inlined_call_operand.vmem [shape: bf16[3,32,48], index: 10, kind: input, shape index: {}]
  %s11 = inlined_call_operand.vmem [shape: f32[3,1,48], index: 11, kind: input, shape index: {}]
  %s12 = inlined_call_operand.vmem [shape: bf16[3,32,16], index: 12, kind: input, shape index: {}]
  %s13 = inlined_call_operand.vmem [shape: f32[3,1,16], index: 13, kind: input, shape index: {}]
  %s14 = inlined_call_operand.vmem [shape: bf16[16,4], index: 14, kind: input, shape index: {}]
  %s15 = inlined_call_operand.vmem [shape: f32[1,4], index: 15, kind: input, shape index: {}]
  %s16 = inlined_call_operand.hbm [shape: f32[2,128], index: 16, kind: output, shape index: {}]
  %s17 = sld [smem:[#allocation0]]
  $region74: #{tpu_custom_call.1} parent=0
    _
  %s19 = ssub.s32 1, %s17
  %s20 = scalar_select 0, %s19, %s17
  $region1: #{tpu_custom_call.1} parent=0
    #allocation2 [shape = 'u8[1024]{0}', space=vmem, size = 0x400, scoped, tag = 'output window, operand 0, single buffered']
    #allocation3 [shape = 's32[1]{0}', space=sflag, size = 0x4, scoped, tag = 'scoped memory for tpu_custom_call.1']
    %21 = vsyncpa [#allocation3], 0
    // Predicated region
    $region2: #{tpu_custom_call.1} parent=1 // pred_check
      _
    $region3: #{tpu_custom_call.1} parent=1 // pred_check_branch
      %23 = sbr.rel (0) target = $region5
    $region4: #{tpu_custom_call.1} parent=1 // pred_region
      _
    $region5: #{tpu_custom_call.1} parent=1 // pred_fallthru
      _
    // Predicated region
    $region6: #{tpu_custom_call.1} parent=1 // pred_check
      _
    $region7: #{tpu_custom_call.1} parent=1 // pred_check_branch
      %25 = sbr.rel (0) target = $region9
    $region8: #{tpu_custom_call.1} parent=1 // pred_region
      _
    $region9: #{tpu_custom_call.1} parent=1 // pred_fallthru
      _
    // Predicated region
    $region10: #{tpu_custom_call.1} parent=1 // pred_check
      _
    $region11: #{tpu_custom_call.1} parent=1 // pred_check_branch
      %27 = sbr.rel (0) target = $region13
    $region12: #{tpu_custom_call.1} parent=1 // pred_region
      _
    $region13: #{tpu_custom_call.1} parent=1 // pred_fallthru
      _
    // Predicated region
    $region14: #{tpu_custom_call.1} parent=1 // pred_check
      _
    $region15: #{tpu_custom_call.1} parent=1 // pred_check_branch
      %29 = sbr.rel (0) target = $region17
    $region16: #{tpu_custom_call.1} parent=1 // pred_region
      _
    $region17: #{tpu_custom_call.1} parent=1 // pred_fallthru
      _
    // Predicated region
    $region18: #{tpu_custom_call.1} parent=1 // pred_check
      _
    $region19: #{tpu_custom_call.1} parent=1 // pred_check_branch
      %31 = sbr.rel (0) target = $region21
    $region20: #{tpu_custom_call.1} parent=1 // pred_region
      _
    $region21: #{tpu_custom_call.1} parent=1 // pred_fallthru
      _
    // Predicated region
    $region22: #{tpu_custom_call.1} parent=1 // pred_check
      _
    $region23: #{tpu_custom_call.1} parent=1 // pred_check_branch
      %33 = sbr.rel (0) target = $region25
    $region24: #{tpu_custom_call.1} parent=1 // pred_region
      _
    $region25: #{tpu_custom_call.1} parent=1 // pred_fallthru
      _
    // Predicated region
    $region26: #{tpu_custom_call.1} parent=1 // pred_check
      _
    $region27: #{tpu_custom_call.1} parent=1 // pred_check_branch
      %35 = sbr.rel (0) target = $region29
    $region28: #{tpu_custom_call.1} parent=1 // pred_region
      _
    $region29: #{tpu_custom_call.1} parent=1 // pred_fallthru
      _
    // Predicated region
    $region30: #{tpu_custom_call.1} parent=1 // pred_check
      _
    $region31: #{tpu_custom_call.1} parent=1 // pred_check_branch
      %37 = sbr.rel (0) target = $region33
    $region32: #{tpu_custom_call.1} parent=1 // pred_region
      _
    $region33: #{tpu_custom_call.1} parent=1 // pred_fallthru
      _
    // Predicated region
    $region34: #{tpu_custom_call.1} parent=1 // pred_check
      _
    $region35: #{tpu_custom_call.1} parent=1 // pred_check_branch
      %39 = sbr.rel (0) target = $region37
    $region36: #{tpu_custom_call.1} parent=1 // pred_region
      _
    $region37: #{tpu_custom_call.1} parent=1 // pred_fallthru
      _
    // Predicated region
    $region38: #{tpu_custom_call.1} parent=1 // pred_check
      _
    $region39: #{tpu_custom_call.1} parent=1 // pred_check_branch
      %41 = sbr.rel (0) target = $region41
    $region40: #{tpu_custom_call.1} parent=1 // pred_region
      _
    $region41: #{tpu_custom_call.1} parent=1 // pred_fallthru
      _
    // Predicated region
    $region42: #{tpu_custom_call.1} parent=1 // pred_check
      _
    $region43: #{tpu_custom_call.1} parent=1 // pred_check_branch
      %43 = sbr.rel (0) target = $region45
    $region44: #{tpu_custom_call.1} parent=1 // pred_region
      _
    $region45: #{tpu_custom_call.1} parent=1 // pred_fallthru
      _
    // Predicated region
    $region46: #{tpu_custom_call.1} parent=1 // pred_check
      _
    $region47: #{tpu_custom_call.1} parent=1 // pred_check_branch
      %45 = sbr.rel (0) target = $region49
    $region48: #{tpu_custom_call.1} parent=1 // pred_region
      _
    $region49: #{tpu_custom_call.1} parent=1 // pred_fallthru
      _
    // Predicated region
    $region50: #{tpu_custom_call.1} parent=1 // pred_check
      _
    $region51: #{tpu_custom_call.1} parent=1 // pred_check_branch
      %47 = sbr.rel (0) target = $region53
    $region52: #{tpu_custom_call.1} parent=1 // pred_region
      _
    $region53: #{tpu_custom_call.1} parent=1 // pred_fallthru
      _
    // Predicated region
    $region54: #{tpu_custom_call.1} parent=1 // pred_check
      _
    $region55: #{tpu_custom_call.1} parent=1 // pred_check_branch
      %49 = sbr.rel (0) target = $region57
    $region56: #{tpu_custom_call.1} parent=1 // pred_region
      _
    $region57: #{tpu_custom_call.1} parent=1 // pred_fallthru
      _
    // Predicated region
    $region58: #{tpu_custom_call.1} parent=1 // pred_check
      _
    $region59: #{tpu_custom_call.1} parent=1 // pred_check_branch
      %51 = sbr.rel (0) target = $region61
    $region60: #{tpu_custom_call.1} parent=1 // pred_region
      _
    $region61: #{tpu_custom_call.1} parent=1 // pred_fallthru
      _
    // Predicated region
    $region62: #{tpu_custom_call.1} parent=1 // pred_check
      _
    $region63: #{tpu_custom_call.1} parent=1 // pred_check_branch
      %53 = sbr.rel (0) target = $region65
    $region64: #{tpu_custom_call.1} parent=1 // pred_region
      _
    $region65: #{tpu_custom_call.1} parent=1 // pred_fallthru
      _
    %v55 = vld [vmem:[%s0] sm:$0xff]
    %v56 = vld [vmem:[%s0 + $0x8] sm:$0xff]
    %v57 = vld [vmem:[%s1] sm:$0x3]
    %v58 = vpack.c.bf16 %v56, %v55
    %v59 = vld [vmem:[%s2] sm:$0x1]
    %v61 = vlaneseq
    %v62 = vshrl.u32 %v61, 7
    %v63 = vsub.s32 0, %v62
    %v64 = vrot.slane %v59, %v63
    %vm66 = vcmask 31744
    %v68 = vsel %vm66, %v58, 0
    %vm70 = vcmask 1041408
    %v72 = vsel %vm70, %v57, 0
    %74 = vmatprep.subr.bf16.mxu0 0
    %75 = vmatpush1.bf16.msra.mxu0 %v72
    %76 = vmatprep.subr.bf16.mxu0 0
    %77 = vmatpush1.bf16.msra.mxu0 0
    %78 = vmatprep.subr.bf16.mxu0 0
    %79 = vmatpush1.bf16.msra.mxu0 0
    %80 = vmatprep.subr.bf16.mxu0 0
    %81 = vmatpush1.bf16.msra.mxu0 0
    %82 = vmatprep.subr.bf16.mxu0 0
    %83 = vmatpush1.bf16.msra.mxu0 0
    %84 = vmatprep.subr.bf16.mxu0 0
    %85 = vmatpush1.bf16.msra.mxu0 0
    %86 = vmatprep.subr.bf16.mxu0 0
    %87 = vmatpush1.bf16.msra.mxu0 0
    %88 = vmatprep.subr.bf16.mxu0 0
    %89 = vmatpush1.bf16.msra.mxu0 0
    %90 = vmatprep.subr.bf16.mxu0 0
    %91 = vmatpush1.bf16.msra.mxu0 0
    %92 = vmatprep.subr.bf16.mxu0 0
    %93 = vmatpush1.bf16.msra.mxu0 0
    %94 = vmatprep.subr.bf16.mxu0 0
    %95 = vmatpush1.bf16.msra.mxu0 0
    %96 = vmatprep.subr.bf16.mxu0 0
    %97 = vmatpush1.bf16.msra.mxu0 0
    %98 = vmatprep.subr.bf16.mxu0 0
    %99 = vmatpush1.bf16.msra.mxu0 0
    %100 = vmatprep.subr.bf16.mxu0 0
    %101 = vmatpush1.bf16.msra.mxu0 0
    %102 = vmatprep.subr.bf16.mxu0 0
    %103 = vmatpush1.bf16.msra.mxu0 0
    %104 = vmatprep.subr.bf16.mxu0 0
    %105 = vmatpush1.bf16.msra.mxu0 0
    %106 = vmatprep.mubr.bf16.mxu0 0
    %107 = vmatmul.mubr.bf16.gmra.mrb[0].mxu0 %v68
    %v108 = vpop.f32.mrb[0].mxu0
    %v109 = vadd.f32 %v64, %v108
    %v110 = vpop.f32.mrb[0].mxu0
    %v111 = vpop.f32.mrb[0].mxu0
    %v112 = vadd.f32 %v64, %v111
    %v113 = vpop.f32.mrb[0].mxu0
    %114 = vdwg.mxu0
    %v115 = vmul.f32 %v109, %v109
    %v116 = vmul.f32 %v112, %v112
    %vm117 = vcmask 130048
    %v118 = vsel %vm117, %v115, 0.0
    %119 = vadd.xlane.f32.xlu0 %v118
    %v120 = vpop.xlane.xlu0 %119
    %v121 = vsel %vm117, %v116, 0.0
    %122 = vadd.xlane.f32.xlu0 %v121
    %v123 = vpop.xlane.xlu0 %122
    %v124 = vrcp.pop 16.0
    %v125 = vmul.f32 %v120, %v124
    %v126 = vmul.f32 %v123, %v124
    %v127 = vadd.f32 %v125, 1e-05
    %v128 = vadd.f32 %v126, 1e-05
    %v129 = vrsqrt.pop %v127
    %v130 = vrsqrt.pop %v128
    %v131 = vmul.f32 %v109, %v129
    %v132 = vmul.f32 %v112, %v130
    %v133 = vld [vmem:[%s3] sm:$0x1]
    %v135 = vlaneseq
    %v136 = vshrl.u32 %v135, 7
    %v137 = vsub.s32 0, %v136
    %v138 = vrot.slane %v133, %v137
    %v140 = vmul.f32 %v131, %v138
    %v141 = vmul.f32 %v132, %v138
    %v142 = vpack.c.bf16 %v141, %v140
    %v143 = vld [vmem:[%s4] sm:$0xf]
    %v144 = vld [vmem:[%s4 + $0x4] sm:$0xf]
    %v145 = vld [vmem:[%s5] sm:$0x1]
    %v147 = vlaneseq
    %v148 = vshrl.u32 %v147, 7
    %v149 = vsub.s32 0, %v148
    %v150 = vrot.slane %v145, %v149
    %v154 = vunpack.c.l.b16 %v143
    %v155 = vunpack.c.l.b16 %v144
    %v156 = vpack.c.b16 %v155, %v154
    %v159 = vsel %vm117, %v142, 0
    %161 = vmatprep.subr.bf16.mxu0 0
    %162 = vmatpush1.bf16.msra.mxu0 %v156
    %163 = vmatprep.subr.bf16.mxu0 0
    %164 = vmatpush1.bf16.msra.mxu0 0
    %165 = vmatprep.subr.bf16.mxu0 0
    %166 = vmatpush1.bf16.msra.mxu0 0
    %167 = vmatprep.subr.bf16.mxu0 0
    %168 = vmatpush1.bf16.msra.mxu0 0
    %169 = vmatprep.subr.bf16.mxu0 0
    %170 = vmatpush1.bf16.msra.mxu0 0
    %171 = vmatprep.subr.bf16.mxu0 0
    %172 = vmatpush1.bf16.msra.mxu0 0
    %173 = vmatprep.subr.bf16.mxu0 0
    %174 = vmatpush1.bf16.msra.mxu0 0
    %175 = vmatprep.subr.bf16.mxu0 0
    %176 = vmatpush1.bf16.msra.mxu0 0
    %177 = vmatprep.subr.bf16.mxu0 0
    %178 = vmatpush1.bf16.msra.mxu0 0
    %179 = vmatprep.subr.bf16.mxu0 0
    %180 = vmatpush1.bf16.msra.mxu0 0
    %181 = vmatprep.subr.bf16.mxu0 0
    %182 = vmatpush1.bf16.msra.mxu0 0
    %183 = vmatprep.subr.bf16.mxu0 0
    %184 = vmatpush1.bf16.msra.mxu0 0
    %185 = vmatprep.subr.bf16.mxu0 0
    %186 = vmatpush1.bf16.msra.mxu0 0
    %187 = vmatprep.subr.bf16.mxu0 0
    %188 = vmatpush1.bf16.msra.mxu0 0
    %189 = vmatprep.subr.bf16.mxu0 0
    %190 = vmatpush1.bf16.msra.mxu0 0
    %191 = vmatprep.subr.bf16.mxu0 0
    %192 = vmatpush1.bf16.msra.mxu0 0
    %193 = vmatprep.mubr.bf16.mxu0 0
    %194 = vmatmul.mubr.bf16.gmra.mrb[0].mxu0 %v159
    %v195 = vpop.f32.mrb[0].mxu0
    %v196 = vadd.f32 %v150, %v195
    %v197 = vpop.f32.mrb[0].mxu0
    %v198 = vpop.f32.mrb[0].mxu0
    %v199 = vadd.f32 %v150, %v198
    %v200 = vpop.f32.mrb[0].mxu0
    %201 = vdwg.mxu0
    %v202 = vsub.f32 0.0, %v196
    %v203 = vsub.f32 0.0, %v199
    %v204 = vmul.f32 %v202, 1.442695
    %v205 = vpow.pop %v204
    %v206 = vmul.f32 %v203, 1.442695
    %v207 = vpow.pop %v206
    %v208 = vadd.f32 %v205, 1.0
    %v209 = vadd.f32 %v207, 1.0
    %v210 = vrcp.pop %v208
    %v211 = vmul.f32 1.0, %v210
    %v212 = vrcp.pop %v209
    %v213 = vmul.f32 1.0, %v212
    %v214 = vmul.f32 %v196, %v211
    %v215 = vmul.f32 %v199, %v213
    %v216 = vpack.c.bf16 %v196, %v196
    %v217 = vld [vmem:[%s6] sm:$0xf]
    %v218 = vld [vmem:[%s6 + $0x4] sm:$0xf]
    %v219 = vld [vmem:[%s6 + $0x8] sm:$0xf]
    %v223 = vunpack.c.l.b16 %v217
    %v224 = vunpack.c.l.b16 %v218
    %v225 = vunpack.c.l.b16 %v219
    %v226 = vpack.c.b16 %v224, %v223
    %v227 = vpack.c.b16 %v225, %v225
    %vm228 = vcmask 64512
    %v230 = vsel %vm228, %v226, 0
    %v233 = vsel %vm228, %v227, 0
    %vm235 = vcmask 1043456
    %v237 = vsel %vm235, %v216, 0
    %239 = vmatprep.subr.bf16.mxu0 0
    %240 = vmatpush1.bf16.msra.mxu0 %v237
    %241 = vmatprep.subr.bf16.mxu0 0
    %242 = vmatpush1.bf16.msra.mxu0 0
    %243 = vmatprep.subr.bf16.mxu0 0
    %244 = vmatpush1.bf16.msra.mxu0 0
    %245 = vmatprep.subr.bf16.mxu0 0
    %246 = vmatpush1.bf16.msra.mxu0 0
    %247 = vmatprep.subr.bf16.mxu0 0
    %248 = vmatpush1.bf16.msra.mxu0 0
    %249 = vmatprep.subr.bf16.mxu0 0
    %250 = vmatpush1.bf16.msra.mxu0 0
    %251 = vmatprep.subr.bf16.mxu0 0
    %252 = vmatpush1.bf16.msra.mxu0 0
    %253 = vmatprep.subr.bf16.mxu0 0
    %254 = vmatpush1.bf16.msra.mxu0 0
    %255 = vmatprep.subr.bf16.mxu0 0
    %256 = vmatpush1.bf16.msra.mxu0 0
    %257 = vmatprep.subr.bf16.mxu0 0
    %258 = vmatpush1.bf16.msra.mxu0 0
    %259 = vmatprep.subr.bf16.mxu0 0
    %260 = vmatpush1.bf16.msra.mxu0 0
    %261 = vmatprep.subr.bf16.mxu0 0
    %262 = vmatpush1.bf16.msra.mxu0 0
    %263 = vmatprep.subr.bf16.mxu0 0
    %264 = vmatpush1.bf16.msra.mxu0 0
    %265 = vmatprep.subr.bf16.mxu0 0
    %266 = vmatpush1.bf16.msra.mxu0 0
    %267 = vmatprep.subr.bf16.mxu0 0
    %268 = vmatpush1.bf16.msra.mxu0 0
    %269 = vmatprep.subr.bf16.mxu0 0
    %270 = vmatpush1.bf16.msra.mxu0 0
    %271 = vmatprep.mubr.bf16.mxu0 0
    %272 = vmatmul.mubr.bf16.gmra.mrb[0].mxu0 %v230
    %v273 = vpop.f32.mrb[0].mxu0
    %v274 = vadd.f32 0.0, %v273
    %v275 = vpop.f32.mrb[0].mxu0
    %v276 = vpop.f32.mrb[0].mxu0
    %v277 = vadd.f32 0.0, %v276
    %v278 = vpop.f32.mrb[0].mxu0
    %279 = vmatprep.mubr.bf16.mxu0 0
    %280 = vmatmul.mubr.bf16.gmra.mrb[0].mxu0 %v233
    %v281 = vpop.f32.mrb[0].mxu0
    %v282 = vadd.f32 0.0, %v281
    %v283 = vpop.f32.mrb[0].mxu0
    %v284 = vpop.f32.mrb[0].mxu0
    %v285 = vpop.f32.mrb[0].mxu0
    %286 = vdwg.mxu0
    %288 = vrot.lane.b32.xlu0 %v274, 1
    %v289 = vpop.permute.xlu0 %288
    %vm291 = vcmask 7168
    %v292 = vsel %vm291, 0.0, %v289
    %v293 = vadd.f32 %v292, %v277
    %295 = vrot.lane.b32.xlu0 %v282, 127
    %v296 = vpop.permute.xlu0 %295
    %vm298 = vcmask 252928
    %v299 = vsel %vm298, %v296, 0.0
    %v300 = vadd.f32 %v293, %v299
    %v301 = vld [vmem:[%s7] sm:$0xff]
    %303 = vset.pattern.permute.xlu0 0
    %304 = vperm.xlu0 %303, %v301
    %v305 = vpop.permute.xlu0 %304
    %v307 = vadd.f32 %v300, %v305
    %v308 = vpack.c.bf16 %v199, %v199
    %v310 = vsel %vm235, %v308, 0
    %312 = vmatprep.subr.bf16.mxu0 0
    %313 = vmatpush1.bf16.msra.mxu0 %v310
    %314 = vmatprep.subr.bf16.mxu0 0
    %315 = vmatpush1.bf16.msra.mxu0 0
    %316 = vmatprep.subr.bf16.mxu0 0
    %317 = vmatpush1.bf16.msra.mxu0 0
    %318 = vmatprep.subr.bf16.mxu0 0
    %319 = vmatpush1.bf16.msra.mxu0 0
    %320 = vmatprep.subr.bf16.mxu0 0
    %321 = vmatpush1.bf16.msra.mxu0 0
    %322 = vmatprep.subr.bf16.mxu0 0
    %323 = vmatpush1.bf16.msra.mxu0 0
    %324 = vmatprep.subr.bf16.mxu0 0
    %325 = vmatpush1.bf16.msra.mxu0 0
    %326 = vmatprep.subr.bf16.mxu0 0
    %327 = vmatpush1.bf16.msra.mxu0 0
    %328 = vmatprep.subr.bf16.mxu0 0
    %329 = vmatpush1.bf16.msra.mxu0 0
    %330 = vmatprep.subr.bf16.mxu0 0
    %331 = vmatpush1.bf16.msra.mxu0 0
    %332 = vmatprep.subr.bf16.mxu0 0
    %333 = vmatpush1.bf16.msra.mxu0 0
    %334 = vmatprep.subr.bf16.mxu0 0
    %335 = vmatpush1.bf16.msra.mxu0 0
    %336 = vmatprep.subr.bf16.mxu0 0
    %337 = vmatpush1.bf16.msra.mxu0 0
    %338 = vmatprep.subr.bf16.mxu0 0
    %339 = vmatpush1.bf16.msra.mxu0 0
    %340 = vmatprep.subr.bf16.mxu0 0
    %341 = vmatpush1.bf16.msra.mxu0 0
    %342 = vmatprep.subr.bf16.mxu0 0
    %343 = vmatpush1.bf16.msra.mxu0 0
    %344 = vmatprep.mubr.bf16.mxu0 0
    %345 = vmatmul.mubr.bf16.gmra.mrb[0].mxu0 %v230
    %v346 = vpop.f32.mrb[0].mxu0
    %v347 = vadd.f32 0.0, %v346
    %v348 = vpop.f32.mrb[0].mxu0
    %v349 = vpop.f32.mrb[0].mxu0
    %v350 = vadd.f32 0.0, %v349
    %v351 = vpop.f32.mrb[0].mxu0
    %352 = vmatprep.mubr.bf16.mxu0 0
    %353 = vmatmul.mubr.bf16.gmra.mrb[0].mxu0 %v233
    %v354 = vpop.f32.mrb[0].mxu0
    %v355 = vadd.f32 0.0, %v354
    %v356 = vpop.f32.mrb[0].mxu0
    %v357 = vpop.f32.mrb[0].mxu0
    %v358 = vpop.f32.mrb[0].mxu0
    %359 = vdwg.mxu0
    %361 = vrot.lane.b32.xlu0 %v347, 1
    %v362 = vpop.permute.xlu0 %361
    %v364 = vsel %vm291, 0.0, %v362
    %v365 = vadd.f32 %v364, %v350
    %367 = vrot.lane.b32.xlu0 %v355, 127
    %v368 = vpop.permute.xlu0 %367
    %v370 = vsel %vm298, %v368, 0.0
    %v371 = vadd.f32 %v365, %v370
    %v372 = vadd.f32 %v371, %v305
    %v373 = vsub.f32 0.0, %v307
    %v374 = vsub.f32 0.0, %v372
    %v375 = vmul.f32 %v373, 1.442695
    %v376 = vpow.pop %v375
    %v377 = vmul.f32 %v374, 1.442695
    %v378 = vpow.pop %v377
    %v379 = vadd.f32 %v376, 1.0
    %v380 = vadd.f32 %v378, 1.0
    %v381 = vrcp.pop %v379
    %v382 = vmul.f32 1.0, %v381
    %v383 = vrcp.pop %v380
    %v384 = vmul.f32 1.0, %v383
    %v385 = vmul.f32 %v307, %v382
    %v386 = vmul.f32 %v372, %v384
    %v387 = vld [vmem:[%s8] sm:$0xf]
    %v388 = vld [vmem:[%s8 + $0x4] sm:$0xf]
    %v389 = vld [vmem:[%s8 + $0x8] sm:$0xf]
    %v390 = vld [vmem:[%s8 + $0xc] sm:$0xf]
    %v391 = vpack.c.bf16 %v386, %v385
    %v392 = vld [vmem:[%s9] sm:$0x1]
    %v394 = vlaneseq
    %v395 = vshrl.u32 %v394, 7
    %v396 = vsub.s32 0, %v395
    %v397 = vrot.slane %v392, %v396
    %v403 = vunpack.c.l.b16 %v387
    %v404 = vunpack.c.l.b16 %v388
    %v405 = vunpack.c.l.b16 %v389
    %v406 = vunpack.c.l.b16 %v390
    %v407 = vpack.c.b16 %v404, %v403
    %v408 = vpack.c.b16 %v406, %v405
    %vm411 = vcmask 261120
    %v413 = vsel %vm411, %v391, 0
    %415 = vmatprep.subr.bf16.mxu0 0
    %416 = vmatpush1.bf16.msra.mxu0 %v407
    %417 = vmatprep.subr.bf16.mxu0 0
    %418 = vmatpush1.bf16.msra.mxu0 %v408
    %419 = vmatprep.subr.bf16.mxu0 0
    %420 = vmatpush1.bf16.msra.mxu0 0
    %421 = vmatprep.subr.bf16.mxu0 0
    %422 = vmatpush1.bf16.msra.mxu0 0
    %423 = vmatprep.subr.bf16.mxu0 0
    %424 = vmatpush1.bf16.msra.mxu0 0
    %425 = vmatprep.subr.bf16.mxu0 0
    %426 = vmatpush1.bf16.msra.mxu0 0
    %427 = vmatprep.subr.bf16.mxu0 0
    %428 = vmatpush1.bf16.msra.mxu0 0
    %429 = vmatprep.subr.bf16.mxu0 0
    %430 = vmatpush1.bf16.msra.mxu0 0
    %431 = vmatprep.subr.bf16.mxu0 0
    %432 = vmatpush1.bf16.msra.mxu0 0
    %433 = vmatprep.subr.bf16.mxu0 0
    %434 = vmatpush1.bf16.msra.mxu0 0
    %435 = vmatprep.subr.bf16.mxu0 0
    %436 = vmatpush1.bf16.msra.mxu0 0
    %437 = vmatprep.subr.bf16.mxu0 0
    %438 = vmatpush1.bf16.msra.mxu0 0
    %439 = vmatprep.subr.bf16.mxu0 0
    %440 = vmatpush1.bf16.msra.mxu0 0
    %441 = vmatprep.subr.bf16.mxu0 0
    %442 = vmatpush1.bf16.msra.mxu0 0
    %443 = vmatprep.subr.bf16.mxu0 0
    %444 = vmatpush1.bf16.msra.mxu0 0
    %445 = vmatprep.subr.bf16.mxu0 0
    %446 = vmatpush1.bf16.msra.mxu0 0
    %447 = vmatprep.mubr.bf16.mxu0 0
    %448 = vmatmul.mubr.bf16.gmra.mrb[0].mxu0 %v413
    %v449 = vpop.f32.mrb[0].mxu0
    %v450 = vadd.f32 %v397, %v449
    %v451 = vpop.f32.mrb[0].mxu0
    %v452 = vpop.f32.mrb[0].mxu0
    %v453 = vadd.f32 %v397, %v452
    %v454 = vpop.f32.mrb[0].mxu0
    %455 = vdwg.mxu0
    %v456 = vpack.c.bf16 %v453, %v450
    %v457 = vld [vmem:[%s10] sm:$0xf]
    %v458 = vld [vmem:[%s10 + $0x4] sm:$0xf]
    %v459 = vld [vmem:[%s10 + $0x8] sm:$0xf]
    %v460 = vld [vmem:[%s10 + $0xc] sm:$0xf]
    %v461 = vld [vmem:[%s11] sm:$0x1]
    %v463 = vlaneseq
    %v464 = vshrl.u32 %v463, 7
    %v465 = vsub.s32 0, %v464
    %v466 = vrot.slane %v461, %v465
    %v472 = vunpack.c.l.b16 %v457
    %v473 = vunpack.c.l.b16 %v458
    %v474 = vunpack.c.l.b16 %v459
    %v475 = vunpack.c.l.b16 %v460
    %v476 = vpack.c.b16 %v473, %v472
    %v477 = vpack.c.b16 %v475, %v474
    %v481 = vsel %vm411, %v456, 0
    %483 = vmatprep.subr.bf16.mxu0 0
    %484 = vmatpush1.bf16.msra.mxu0 %v476
    %485 = vmatprep.subr.bf16.mxu0 0
    %486 = vmatpush1.bf16.msra.mxu0 %v477
    %487 = vmatprep.subr.bf16.mxu0 0
    %488 = vmatpush1.bf16.msra.mxu0 0
    %489 = vmatprep.subr.bf16.mxu0 0
    %490 = vmatpush1.bf16.msra.mxu0 0
    %491 = vmatprep.subr.bf16.mxu0 0
    %492 = vmatpush1.bf16.msra.mxu0 0
    %493 = vmatprep.subr.bf16.mxu0 0
    %494 = vmatpush1.bf16.msra.mxu0 0
    %495 = vmatprep.subr.bf16.mxu0 0
    %496 = vmatpush1.bf16.msra.mxu0 0
    %497 = vmatprep.subr.bf16.mxu0 0
    %498 = vmatpush1.bf16.msra.mxu0 0
    %499 = vmatprep.subr.bf16.mxu0 0
    %500 = vmatpush1.bf16.msra.mxu0 0
    %501 = vmatprep.subr.bf16.mxu0 0
    %502 = vmatpush1.bf16.msra.mxu0 0
    %503 = vmatprep.subr.bf16.mxu0 0
    %504 = vmatpush1.bf16.msra.mxu0 0
    %505 = vmatprep.subr.bf16.mxu0 0
    %506 = vmatpush1.bf16.msra.mxu0 0
    %507 = vmatprep.subr.bf16.mxu0 0
    %508 = vmatpush1.bf16.msra.mxu0 0
    %509 = vmatprep.subr.bf16.mxu0 0
    %510 = vmatpush1.bf16.msra.mxu0 0
    %511 = vmatprep.subr.bf16.mxu0 0
    %512 = vmatpush1.bf16.msra.mxu0 0
    %513 = vmatprep.subr.bf16.mxu0 0
    %514 = vmatpush1.bf16.msra.mxu0 0
    %515 = vmatprep.mubr.bf16.mxu0 0
    %516 = vmatmul.mubr.bf16.gmra.mrb[0].mxu0 %v481
    %v517 = vpop.f32.mrb[0].mxu0
    %v518 = vadd.f32 %v466, %v517
    %v519 = vpop.f32.mrb[0].mxu0
    %v520 = vpop.f32.mrb[0].mxu0
    %v521 = vadd.f32 %v466, %v520
    %v522 = vpop.f32.mrb[0].mxu0
    %523 = vdwg.mxu0
    %v524 = vmax.f32 %v518, 0.0
    %v525 = vmax.f32 %v521, 0.0
    %v526 = vand.u32 2147483647, %v518
    %v527 = vand.u32 2147483647, %v521
    %v528 = vsub.f32 0.0, %v526
    %v529 = vsub.f32 0.0, %v527
    %v530 = vmul.f32 %v528, 1.442695
    %v531 = vpow.pop %v530
    %v532 = vmul.f32 %v529, 1.442695
    %v533 = vpow.pop %v532
    %v534 = vadd.f32 %v531, 1.0
    %v535 = vadd.f32 %v533, 1.0
    %v536 = vlog2.pop %v534
    %v537 = vmul.f32 %v536, 0.6931472
    %v538 = vlog2.pop %v535
    %v539 = vmul.f32 %v538, 0.6931472
    %v540 = vadd.f32 %v524, %v537
    %v541 = vadd.f32 %v525, %v539
    %v542 = vmul.f32 %v450, %v540
    %v543 = vmul.f32 %v453, %v541
    %546 = vrot.lane.b32.xlu0 %v518, 120
    %v547 = vpop.permute.xlu0 %546
    %548 = vrot.lane.b32.xlu0 %v521, 120
    %v549 = vpop.permute.xlu0 %548
    %v552 = vmul.f32 %v518, %v547
    %v553 = vmul.f32 %v521, %v549
    %556 = vrot.lane.b32.xlu0 %v552, 96
    %v557 = vpop.permute.xlu0 %556
    %558 = vrot.lane.b32.xlu0 %v553, 96
    %v559 = vpop.permute.xlu0 %558
    %v562 = vsel %vm228, %v557, 0.0
    %563 = vadd.xlane.f32.xlu0 %v562
    %v564 = vpop.xlane.xlu0 %563
    %v565 = vsel %vm228, %v559, 0.0
    %566 = vadd.xlane.f32.xlu0 %v565
    %v567 = vpop.xlane.xlu0 %566
    %v568 = vmul.f32 %v542, %v564
    %v569 = vmul.f32 %v543, %v567
    %v570 = vsub.f32 0.0, %v568
    %v571 = vsub.f32 0.0, %v569
    %v572 = vmul.f32 %v570, 1.442695
    %v573 = vpow.pop %v572
    %v574 = vmul.f32 %v571, 1.442695
    %v575 = vpow.pop %v574
    %v576 = vadd.f32 %v573, 1.0
    %v577 = vadd.f32 %v575, 1.0
    %v578 = vrcp.pop %v576
    %v579 = vmul.f32 1.0, %v578
    %v580 = vrcp.pop %v577
    %v581 = vmul.f32 1.0, %v580
    %v582 = vmul.f32 %v568, %v579
    %v583 = vmul.f32 %v569, %v581
    %586 = vrot.lane.b32.xlu0 %v214, 96
    %v587 = vpop.permute.xlu0 %586
    %588 = vrot.lane.b32.xlu0 %v215, 96
    %v589 = vpop.permute.xlu0 %588
    %v592 = vmul.f32 %v582, %v587
    %v593 = vmul.f32 %v583, %v589
    %v594 = vld [vmem:[%s12] sm:$0xf]
    %v595 = vld [vmem:[%s12 + $0x4] sm:$0xf]
    %v596 = vld [vmem:[%s12 + $0x8] sm:$0xf]
    %v597 = vld [vmem:[%s12 + $0xc] sm:$0xf]
    %v598 = vpack.c.bf16 %v593, %v592
    %v599 = vld [vmem:[%s13] sm:$0x1]
    %v601 = vlaneseq
    %v602 = vshrl.u32 %v601, 7
    %v603 = vsub.s32 0, %v602
    %v604 = vrot.slane %v599, %v603
    %v610 = vunpack.c.l.b16 %v594
    %v611 = vunpack.c.l.b16 %v595
    %v612 = vunpack.c.l.b16 %v596
    %v613 = vunpack.c.l.b16 %v597
    %v614 = vpack.c.b16 %v611, %v610
    %v615 = vpack.c.b16 %v613, %v612
    %v619 = vsel %vm411, %v598, 0
    %621 = vmatprep.subr.bf16.mxu0 0
    %622 = vmatpush1.bf16.msra.mxu0 %v614
    %623 = vmatprep.subr.bf16.mxu0 0
    %624 = vmatpush1.bf16.msra.mxu0 %v615
    %625 = vmatprep.subr.bf16.mxu0 0
    %626 = vmatpush1.bf16.msra.mxu0 0
    %627 = vmatprep.subr.bf16.mxu0 0
    %628 = vmatpush1.bf16.msra.mxu0 0
    %629 = vmatprep.subr.bf16.mxu0 0
    %630 = vmatpush1.bf16.msra.mxu0 0
    %631 = vmatprep.subr.bf16.mxu0 0
    %632 = vmatpush1.bf16.msra.mxu0 0
    %633 = vmatprep.subr.bf16.mxu0 0
    %634 = vmatpush1.bf16.msra.mxu0 0
    %635 = vmatprep.subr.bf16.mxu0 0
    %636 = vmatpush1.bf16.msra.mxu0 0
    %637 = vmatprep.subr.bf16.mxu0 0
    %638 = vmatpush1.bf16.msra.mxu0 0
    %639 = vmatprep.subr.bf16.mxu0 0
    %640 = vmatpush1.bf16.msra.mxu0 0
    %641 = vmatprep.subr.bf16.mxu0 0
    %642 = vmatpush1.bf16.msra.mxu0 0
    %643 = vmatprep.subr.bf16.mxu0 0
    %644 = vmatpush1.bf16.msra.mxu0 0
    %645 = vmatprep.subr.bf16.mxu0 0
    %646 = vmatpush1.bf16.msra.mxu0 0
    %647 = vmatprep.subr.bf16.mxu0 0
    %648 = vmatpush1.bf16.msra.mxu0 0
    %649 = vmatprep.subr.bf16.mxu0 0
    %650 = vmatpush1.bf16.msra.mxu0 0
    %651 = vmatprep.subr.bf16.mxu0 0
    %652 = vmatpush1.bf16.msra.mxu0 0
    %653 = vmatprep.mubr.bf16.mxu0 0
    %654 = vmatmul.mubr.bf16.gmra.mrb[0].mxu0 %v619
    %v655 = vpop.f32.mrb[0].mxu0
    %v656 = vadd.f32 %v604, %v655
    %v657 = vpop.f32.mrb[0].mxu0
    %v658 = vpop.f32.mrb[0].mxu0
    %v659 = vadd.f32 %v604, %v658
    %v660 = vpop.f32.mrb[0].mxu0
    %661 = vdwg.mxu0
    %v662 = vmul.f32 %v656, %v656
    %v663 = vmul.f32 %v659, %v659
    %v664 = vsel %vm117, %v662, 0.0
    %665 = vadd.xlane.f32.xlu0 %v664
    %v666 = vpop.xlane.xlu0 %665
    %v667 = vsel %vm117, %v663, 0.0
    %668 = vadd.xlane.f32.xlu0 %v667
    %v669 = vpop.xlane.xlu0 %668
    %v670 = vmul.f32 %v666, %v124
    %v671 = vmul.f32 %v669, %v124
    %v672 = vadd.f32 %v670, 1e-05
    %v673 = vadd.f32 %v671, 1e-05
    %v674 = vrsqrt.pop %v672
    %v675 = vrsqrt.pop %v673
    %v676 = vmul.f32 %v656, %v674
    %v677 = vmul.f32 %v659, %v675
    %s678 = scalar_lea.vmem %s3, 1
    %v679 = vld [vmem:[%s678] sm:$0x1]
    %v681 = vlaneseq
    %v682 = vshrl.u32 %v681, 7
    %v683 = vsub.s32 0, %v682
    %v684 = vrot.slane %v679, %v683
    %v686 = vmul.f32 %v676, %v684
    %v687 = vmul.f32 %v677, %v684
    %v688 = vpack.c.bf16 %v687, %v686
    %s689 = scalar_lea.vmem %s4, 8
    %v690 = vld [vmem:[%s689] sm:$0xf]
    %v691 = vld [vmem:[%s689 + $0x4] sm:$0xf]
    %s692 = scalar_lea.vmem %s5, 1
    %v693 = vld [vmem:[%s692] sm:$0x1]
    %v695 = vlaneseq
    %v696 = vshrl.u32 %v695, 7
    %v697 = vsub.s32 0, %v696
    %v698 = vrot.slane %v693, %v697
    %v702 = vunpack.c.l.b16 %v690
    %v703 = vunpack.c.l.b16 %v691
    %v704 = vpack.c.b16 %v703, %v702
    %v707 = vsel %vm117, %v688, 0
    %709 = vmatprep.subr.bf16.mxu0 0
    %710 = vmatpush1.bf16.msra.mxu0 %v704
    %711 = vmatprep.subr.bf16.mxu0 0
    %712 = vmatpush1.bf16.msra.mxu0 0
    %713 = vmatprep.subr.bf16.mxu0 0
    %714 = vmatpush1.bf16.msra.mxu0 0
    %715 = vmatprep.subr.bf16.mxu0 0
    %716 = vmatpush1.bf16.msra.mxu0 0
    %717 = vmatprep.subr.bf16.mxu0 0
    %718 = vmatpush1.bf16.msra.mxu0 0
    %719 = vmatprep.subr.bf16.mxu0 0
    %720 = vmatpush1.bf16.msra.mxu0 0
    %721 = vmatprep.subr.bf16.mxu0 0
    %722 = vmatpush1.bf16.msra.mxu0 0
    %723 = vmatprep.subr.bf16.mxu0 0
    %724 = vmatpush1.bf16.msra.mxu0 0
    %725 = vmatprep.subr.bf16.mxu0 0
    %726 = vmatpush1.bf16.msra.mxu0 0
    %727 = vmatprep.subr.bf16.mxu0 0
    %728 = vmatpush1.bf16.msra.mxu0 0
    %729 = vmatprep.subr.bf16.mxu0 0
    %730 = vmatpush1.bf16.msra.mxu0 0
    %731 = vmatprep.subr.bf16.mxu0 0
    %732 = vmatpush1.bf16.msra.mxu0 0
    %733 = vmatprep.subr.bf16.mxu0 0
    %734 = vmatpush1.bf16.msra.mxu0 0
    %735 = vmatprep.subr.bf16.mxu0 0
    %736 = vmatpush1.bf16.msra.mxu0 0
    %737 = vmatprep.subr.bf16.mxu0 0
    %738 = vmatpush1.bf16.msra.mxu0 0
    %739 = vmatprep.subr.bf16.mxu0 0
    %740 = vmatpush1.bf16.msra.mxu0 0
    %741 = vmatprep.mubr.bf16.mxu0 0
    %742 = vmatmul.mubr.bf16.gmra.mrb[0].mxu0 %v707
    %v743 = vpop.f32.mrb[0].mxu0
    %v744 = vadd.f32 %v698, %v743
    %v745 = vpop.f32.mrb[0].mxu0
    %v746 = vpop.f32.mrb[0].mxu0
    %v747 = vadd.f32 %v698, %v746
    %v748 = vpop.f32.mrb[0].mxu0
    %749 = vdwg.mxu0
    %v750 = vsub.f32 0.0, %v744
    %v751 = vsub.f32 0.0, %v747
    %v752 = vmul.f32 %v750, 1.442695
    %v753 = vpow.pop %v752
    %v754 = vmul.f32 %v751, 1.442695
    %v755 = vpow.pop %v754
    %v756 = vadd.f32 %v753, 1.0
    %v757 = vadd.f32 %v755, 1.0
    %v758 = vrcp.pop %v756
    %v759 = vmul.f32 1.0, %v758
    %v760 = vrcp.pop %v757
    %v761 = vmul.f32 1.0, %v760
    %v762 = vmul.f32 %v744, %v759
    %v763 = vmul.f32 %v747, %v761
    %v764 = vpack.c.bf16 %v744, %v744
    %s765 = scalar_lea.vmem %s6, 12
    %v766 = vld [vmem:[%s765] sm:$0xf]
    %v767 = vld [vmem:[%s765 + $0x4] sm:$0xf]
    %v768 = vld [vmem:[%s765 + $0x8] sm:$0xf]
    %v772 = vunpack.c.l.b16 %v766
    %v773 = vunpack.c.l.b16 %v767
    %v774 = vunpack.c.l.b16 %v768
    %v775 = vpack.c.b16 %v773, %v772
    %v776 = vpack.c.b16 %v774, %v774
    %v778 = vsel %vm228, %v775, 0
    %v781 = vsel %vm228, %v776, 0
    %v784 = vsel %vm235, %v764, 0
    %786 = vmatprep.subr.bf16.mxu0 0
    %787 = vmatpush1.bf16.msra.mxu0 %v784
    %788 = vmatprep.subr.bf16.mxu0 0
    %789 = vmatpush1.bf16.msra.mxu0 0
    %790 = vmatprep.subr.bf16.mxu0 0
    %791 = vmatpush1.bf16.msra.mxu0 0
    %792 = vmatprep.subr.bf16.mxu0 0
    %793 = vmatpush1.bf16.msra.mxu0 0
    %794 = vmatprep.subr.bf16.mxu0 0
    %795 = vmatpush1.bf16.msra.mxu0 0
    %796 = vmatprep.subr.bf16.mxu0 0
    %797 = vmatpush1.bf16.msra.mxu0 0
    %798 = vmatprep.subr.bf16.mxu0 0
    %799 = vmatpush1.bf16.msra.mxu0 0
    %800 = vmatprep.subr.bf16.mxu0 0
    %801 = vmatpush1.bf16.msra.mxu0 0
    %802 = vmatprep.subr.bf16.mxu0 0
    %803 = vmatpush1.bf16.msra.mxu0 0
    %804 = vmatprep.subr.bf16.mxu0 0
    %805 = vmatpush1.bf16.msra.mxu0 0
    %806 = vmatprep.subr.bf16.mxu0 0
    %807 = vmatpush1.bf16.msra.mxu0 0
    %808 = vmatprep.subr.bf16.mxu0 0
    %809 = vmatpush1.bf16.msra.mxu0 0
    %810 = vmatprep.subr.bf16.mxu0 0
    %811 = vmatpush1.bf16.msra.mxu0 0
    %812 = vmatprep.subr.bf16.mxu0 0
    %813 = vmatpush1.bf16.msra.mxu0 0
    %814 = vmatprep.subr.bf16.mxu0 0
    %815 = vmatpush1.bf16.msra.mxu0 0
    %816 = vmatprep.subr.bf16.mxu0 0
    %817 = vmatpush1.bf16.msra.mxu0 0
    %818 = vmatprep.mubr.bf16.mxu0 0
    %819 = vmatmul.mubr.bf16.gmra.mrb[0].mxu0 %v778
    %v820 = vpop.f32.mrb[0].mxu0
    %v821 = vadd.f32 0.0, %v820
    %v822 = vpop.f32.mrb[0].mxu0
    %v823 = vpop.f32.mrb[0].mxu0
    %v824 = vadd.f32 0.0, %v823
    %v825 = vpop.f32.mrb[0].mxu0
    %826 = vmatprep.mubr.bf16.mxu0 0
    %827 = vmatmul.mubr.bf16.gmra.mrb[0].mxu0 %v781
    %v828 = vpop.f32.mrb[0].mxu0
    %v829 = vadd.f32 0.0, %v828
    %v830 = vpop.f32.mrb[0].mxu0
    %v831 = vpop.f32.mrb[0].mxu0
    %v832 = vpop.f32.mrb[0].mxu0
    %833 = vdwg.mxu0
    %835 = vrot.lane.b32.xlu0 %v821, 1
    %v836 = vpop.permute.xlu0 %835
    %v838 = vsel %vm291, 0.0, %v836
    %v839 = vadd.f32 %v838, %v824
    %841 = vrot.lane.b32.xlu0 %v829, 127
    %v842 = vpop.permute.xlu0 %841
    %v844 = vsel %vm298, %v842, 0.0
    %v845 = vadd.f32 %v839, %v844
    %s846 = scalar_lea.vmem %s7, 8
    %v847 = vld [vmem:[%s846] sm:$0xff]
    %849 = vset.pattern.permute.xlu0 0
    %850 = vperm.xlu0 %849, %v847
    %v851 = vpop.permute.xlu0 %850
    %v853 = vadd.f32 %v845, %v851
    %v854 = vpack.c.bf16 %v747, %v747
    %v856 = vsel %vm235, %v854, 0
    %858 = vmatprep.subr.bf16.mxu0 0
    %859 = vmatpush1.bf16.msra.mxu0 %v856
    %860 = vmatprep.subr.bf16.mxu0 0
    %861 = vmatpush1.bf16.msra.mxu0 0
    %862 = vmatprep.subr.bf16.mxu0 0
    %863 = vmatpush1.bf16.msra.mxu0 0
    %864 = vmatprep.subr.bf16.mxu0 0
    %865 = vmatpush1.bf16.msra.mxu0 0
    %866 = vmatprep.subr.bf16.mxu0 0
    %867 = vmatpush1.bf16.msra.mxu0 0
    %868 = vmatprep.subr.bf16.mxu0 0
    %869 = vmatpush1.bf16.msra.mxu0 0
    %870 = vmatprep.subr.bf16.mxu0 0
    %871 = vmatpush1.bf16.msra.mxu0 0
    %872 = vmatprep.subr.bf16.mxu0 0
    %873 = vmatpush1.bf16.msra.mxu0 0
    %874 = vmatprep.subr.bf16.mxu0 0
    %875 = vmatpush1.bf16.msra.mxu0 0
    %876 = vmatprep.subr.bf16.mxu0 0
    %877 = vmatpush1.bf16.msra.mxu0 0
    %878 = vmatprep.subr.bf16.mxu0 0
    %879 = vmatpush1.bf16.msra.mxu0 0
    %880 = vmatprep.subr.bf16.mxu0 0
    %881 = vmatpush1.bf16.msra.mxu0 0
    %882 = vmatprep.subr.bf16.mxu0 0
    %883 = vmatpush1.bf16.msra.mxu0 0
    %884 = vmatprep.subr.bf16.mxu0 0
    %885 = vmatpush1.bf16.msra.mxu0 0
    %886 = vmatprep.subr.bf16.mxu0 0
    %887 = vmatpush1.bf16.msra.mxu0 0
    %888 = vmatprep.subr.bf16.mxu0 0
    %889 = vmatpush1.bf16.msra.mxu0 0
    %890 = vmatprep.mubr.bf16.mxu0 0
    %891 = vmatmul.mubr.bf16.gmra.mrb[0].mxu0 %v778
    %v892 = vpop.f32.mrb[0].mxu0
    %v893 = vadd.f32 0.0, %v892
    %v894 = vpop.f32.mrb[0].mxu0
    %v895 = vpop.f32.mrb[0].mxu0
    %v896 = vadd.f32 0.0, %v895
    %v897 = vpop.f32.mrb[0].mxu0
    %898 = vmatprep.mubr.bf16.mxu0 0
    %899 = vmatmul.mubr.bf16.gmra.mrb[0].mxu0 %v781
    %v900 = vpop.f32.mrb[0].mxu0
    %v901 = vadd.f32 0.0, %v900
    %v902 = vpop.f32.mrb[0].mxu0
    %v903 = vpop.f32.mrb[0].mxu0
    %v904 = vpop.f32.mrb[0].mxu0
    %905 = vdwg.mxu0
    %907 = vrot.lane.b32.xlu0 %v893, 1
    %v908 = vpop.permute.xlu0 %907
    %v910 = vsel %vm291, 0.0, %v908
    %v911 = vadd.f32 %v910, %v896
    %913 = vrot.lane.b32.xlu0 %v901, 127
    %v914 = vpop.permute.xlu0 %913
    %v916 = vsel %vm298, %v914, 0.0
    %v917 = vadd.f32 %v911, %v916
    %v918 = vadd.f32 %v917, %v851
    %v919 = vsub.f32 0.0, %v853
    %v920 = vsub.f32 0.0, %v918
    %v921 = vmul.f32 %v919, 1.442695
    %v922 = vpow.pop %v921
    %v923 = vmul.f32 %v920, 1.442695
    %v924 = vpow.pop %v923
    %v925 = vadd.f32 %v922, 1.0
    %v926 = vadd.f32 %v924, 1.0
    %v927 = vrcp.pop %v925
    %v928 = vmul.f32 1.0, %v927
    %v929 = vrcp.pop %v926
    %v930 = vmul.f32 1.0, %v929
    %v931 = vmul.f32 %v853, %v928
    %v932 = vmul.f32 %v918, %v930
    %s933 = scalar_lea.vmem %s8, 16
    %v934 = vld [vmem:[%s933] sm:$0xf]
    %v935 = vld [vmem:[%s933 + $0x4] sm:$0xf]
    %v936 = vld [vmem:[%s933 + $0x8] sm:$0xf]
    %v937 = vld [vmem:[%s933 + $0xc] sm:$0xf]
    %v938 = vpack.c.bf16 %v932, %v931
    %s939 = scalar_lea.vmem %s9, 1
    %v940 = vld [vmem:[%s939] sm:$0x1]
    %v942 = vlaneseq
    %v943 = vshrl.u32 %v942, 7
    %v944 = vsub.s32 0, %v943
    %v945 = vrot.slane %v940, %v944
    %v951 = vunpack.c.l.b16 %v934
    %v952 = vunpack.c.l.b16 %v935
    %v953 = vunpack.c.l.b16 %v936
    %v954 = vunpack.c.l.b16 %v937
    %v955 = vpack.c.b16 %v952, %v951
    %v956 = vpack.c.b16 %v954, %v953
    %v960 = vsel %vm411, %v938, 0
    %962 = vmatprep.subr.bf16.mxu0 0
    %963 = vmatpush1.bf16.msra.mxu0 %v955
    %964 = vmatprep.subr.bf16.mxu0 0
    %965 = vmatpush1.bf16.msra.mxu0 %v956
    %966 = vmatprep.subr.bf16.mxu0 0
    %967 = vmatpush1.bf16.msra.mxu0 0
    %968 = vmatprep.subr.bf16.mxu0 0
    %969 = vmatpush1.bf16.msra.mxu0 0
    %970 = vmatprep.subr.bf16.mxu0 0
    %971 = vmatpush1.bf16.msra.mxu0 0
    %972 = vmatprep.subr.bf16.mxu0 0
    %973 = vmatpush1.bf16.msra.mxu0 0
    %974 = vmatprep.subr.bf16.mxu0 0
    %975 = vmatpush1.bf16.msra.mxu0 0
    %976 = vmatprep.subr.bf16.mxu0 0
    %977 = vmatpush1.bf16.msra.mxu0 0
    %978 = vmatprep.subr.bf16.mxu0 0
    %979 = vmatpush1.bf16.msra.mxu0 0
    %980 = vmatprep.subr.bf16.mxu0 0
    %981 = vmatpush1.bf16.msra.mxu0 0
    %982 = vmatprep.subr.bf16.mxu0 0
    %983 = vmatpush1.bf16.msra.mxu0 0
    %984 = vmatprep.subr.bf16.mxu0 0
    %985 = vmatpush1.bf16.msra.mxu0 0
    %986 = vmatprep.subr.bf16.mxu0 0
    %987 = vmatpush1.bf16.msra.mxu0 0
    %988 = vmatprep.subr.bf16.mxu0 0
    %989 = vmatpush1.bf16.msra.mxu0 0
    %990 = vmatprep.subr.bf16.mxu0 0
    %991 = vmatpush1.bf16.msra.mxu0 0
    %992 = vmatprep.subr.bf16.mxu0 0
    %993 = vmatpush1.bf16.msra.mxu0 0
    %994 = vmatprep.mubr.bf16.mxu0 0
    %995 = vmatmul.mubr.bf16.gmra.mrb[0].mxu0 %v960
    %v996 = vpop.f32.mrb[0].mxu0
    %v997 = vadd.f32 %v945, %v996
    %v998 = vpop.f32.mrb[0].mxu0
    %v999 = vpop.f32.mrb[0].mxu0
    %v1000 = vadd.f32 %v945, %v999
    %v1001 = vpop.f32.mrb[0].mxu0
    %1002 = vdwg.mxu0
    %v1003 = vpack.c.bf16 %v1000, %v997
    %s1004 = scalar_lea.vmem %s10, 16
    %v1005 = vld [vmem:[%s1004] sm:$0xf]
    %v1006 = vld [vmem:[%s1004 + $0x4] sm:$0xf]
    %v1007 = vld [vmem:[%s1004 + $0x8] sm:$0xf]
    %v1008 = vld [vmem:[%s1004 + $0xc] sm:$0xf]
    %s1009 = scalar_lea.vmem %s11, 1
    %v1010 = vld [vmem:[%s1009] sm:$0x1]
    %v1012 = vlaneseq
    %v1013 = vshrl.u32 %v1012, 7
    %v1014 = vsub.s32 0, %v1013
    %v1015 = vrot.slane %v1010, %v1014
    %v1021 = vunpack.c.l.b16 %v1005
    %v1022 = vunpack.c.l.b16 %v1006
    %v1023 = vunpack.c.l.b16 %v1007
    %v1024 = vunpack.c.l.b16 %v1008
    %v1025 = vpack.c.b16 %v1022, %v1021
    %v1026 = vpack.c.b16 %v1024, %v1023
    %v1030 = vsel %vm411, %v1003, 0
    %1032 = vmatprep.subr.bf16.mxu0 0
    %1033 = vmatpush1.bf16.msra.mxu0 %v1025
    %1034 = vmatprep.subr.bf16.mxu0 0
    %1035 = vmatpush1.bf16.msra.mxu0 %v1026
    %1036 = vmatprep.subr.bf16.mxu0 0
    %1037 = vmatpush1.bf16.msra.mxu0 0
    %1038 = vmatprep.subr.bf16.mxu0 0
    %1039 = vmatpush1.bf16.msra.mxu0 0
    %1040 = vmatprep.subr.bf16.mxu0 0
    %1041 = vmatpush1.bf16.msra.mxu0 0
    %1042 = vmatprep.subr.bf16.mxu0 0
    %1043 = vmatpush1.bf16.msra.mxu0 0
    %1044 = vmatprep.subr.bf16.mxu0 0
    %1045 = vmatpush1.bf16.msra.mxu0 0
    %1046 = vmatprep.subr.bf16.mxu0 0
    %1047 = vmatpush1.bf16.msra.mxu0 0
    %1048 = vmatprep.subr.bf16.mxu0 0
    %1049 = vmatpush1.bf16.msra.mxu0 0
    %1050 = vmatprep.subr.bf16.mxu0 0
    %1051 = vmatpush1.bf16.msra.mxu0 0
    %1052 = vmatprep.subr.bf16.mxu0 0
    %1053 = vmatpush1.bf16.msra.mxu0 0
    %1054 = vmatprep.subr.bf16.mxu0 0
    %1055 = vmatpush1.bf16.msra.mxu0 0
    %1056 = vmatprep.subr.bf16.mxu0 0
    %1057 = vmatpush1.bf16.msra.mxu0 0
    %1058 = vmatprep.subr.bf16.mxu0 0
    %1059 = vmatpush1.bf16.msra.mxu0 0
    %1060 = vmatprep.subr.bf16.mxu0 0
    %1061 = vmatpush1.bf16.msra.mxu0 0
    %1062 = vmatprep.subr.bf16.mxu0 0
    %1063 = vmatpush1.bf16.msra.mxu0 0
    %1064 = vmatprep.mubr.bf16.mxu0 0
    %1065 = vmatmul.mubr.bf16.gmra.mrb[0].mxu0 %v1030
    %v1066 = vpop.f32.mrb[0].mxu0
    %v1067 = vadd.f32 %v1015, %v1066
    %v1068 = vpop.f32.mrb[0].mxu0
    %v1069 = vpop.f32.mrb[0].mxu0
    %v1070 = vadd.f32 %v1015, %v1069
    %v1071 = vpop.f32.mrb[0].mxu0
    %1072 = vdwg.mxu0
    %v1073 = vmax.f32 %v1067, 0.0
    %v1074 = vmax.f32 %v1070, 0.0
    %v1075 = vand.u32 2147483647, %v1067
    %v1076 = vand.u32 2147483647, %v1070
    %v1077 = vsub.f32 0.0, %v1075
    %v1078 = vsub.f32 0.0, %v1076
    %v1079 = vmul.f32 %v1077, 1.442695
    %v1080 = vpow.pop %v1079
    %v1081 = vmul.f32 %v1078, 1.442695
    %v1082 = vpow.pop %v1081
    %v1083 = vadd.f32 %v1080, 1.0
    %v1084 = vadd.f32 %v1082, 1.0
    %v1085 = vlog2.pop %v1083
    %v1086 = vmul.f32 %v1085, 0.6931472
    %v1087 = vlog2.pop %v1084
    %v1088 = vmul.f32 %v1087, 0.6931472
    %v1089 = vadd.f32 %v1073, %v1086
    %v1090 = vadd.f32 %v1074, %v1088
    %v1091 = vmul.f32 %v997, %v1089
    %v1092 = vmul.f32 %v1000, %v1090
    %1095 = vrot.lane.b32.xlu0 %v1067, 120
    %v1096 = vpop.permute.xlu0 %1095
    %1097 = vrot.lane.b32.xlu0 %v1070, 120
    %v1098 = vpop.permute.xlu0 %1097
    %v1101 = vmul.f32 %v1067, %v1096
    %v1102 = vmul.f32 %v1070, %v1098
    %1105 = vrot.lane.b32.xlu0 %v1101, 96
    %v1106 = vpop.permute.xlu0 %1105
    %1107 = vrot.lane.b32.xlu0 %v1102, 96
    %v1108 = vpop.permute.xlu0 %1107
    %v1111 = vsel %vm228, %v1106, 0.0
    %1112 = vadd.xlane.f32.xlu0 %v1111
    %v1113 = vpop.xlane.xlu0 %1112
    %v1114 = vsel %vm228, %v1108, 0.0
    %1115 = vadd.xlane.f32.xlu0 %v1114
    %v1116 = vpop.xlane.xlu0 %1115
    %v1117 = vmul.f32 %v1091, %v1113
    %v1118 = vmul.f32 %v1092, %v1116
    %v1119 = vsub.f32 0.0, %v1117
    %v1120 = vsub.f32 0.0, %v1118
    %v1121 = vmul.f32 %v1119, 1.442695
    %v1122 = vpow.pop %v1121
    %v1123 = vmul.f32 %v1120, 1.442695
    %v1124 = vpow.pop %v1123
    %v1125 = vadd.f32 %v1122, 1.0
    %v1126 = vadd.f32 %v1124, 1.0
    %v1127 = vrcp.pop %v1125
    %v1128 = vmul.f32 1.0, %v1127
    %v1129 = vrcp.pop %v1126
    %v1130 = vmul.f32 1.0, %v1129
    %v1131 = vmul.f32 %v1117, %v1128
    %v1132 = vmul.f32 %v1118, %v1130
    %1135 = vrot.lane.b32.xlu0 %v762, 96
    %v1136 = vpop.permute.xlu0 %1135
    %1137 = vrot.lane.b32.xlu0 %v763, 96
    %v1138 = vpop.permute.xlu0 %1137
    %v1141 = vmul.f32 %v1131, %v1136
    %v1142 = vmul.f32 %v1132, %v1138
    %s1143 = scalar_lea.vmem %s12, 16
    %v1144 = vld [vmem:[%s1143] sm:$0xf]
    %v1145 = vld [vmem:[%s1143 + $0x4] sm:$0xf]
    %v1146 = vld [vmem:[%s1143 + $0x8] sm:$0xf]
    %v1147 = vld [vmem:[%s1143 + $0xc] sm:$0xf]
    %v1148 = vpack.c.bf16 %v1142, %v1141
    %s1149 = scalar_lea.vmem %s13, 1
    %v1150 = vld [vmem:[%s1149] sm:$0x1]
    %v1152 = vlaneseq
    %v1153 = vshrl.u32 %v1152, 7
    %v1154 = vsub.s32 0, %v1153
    %v1155 = vrot.slane %v1150, %v1154
    %v1161 = vunpack.c.l.b16 %v1144
    %v1162 = vunpack.c.l.b16 %v1145
    %v1163 = vunpack.c.l.b16 %v1146
    %v1164 = vunpack.c.l.b16 %v1147
    %v1165 = vpack.c.b16 %v1162, %v1161
    %v1166 = vpack.c.b16 %v1164, %v1163
    %v1170 = vsel %vm411, %v1148, 0
    %1172 = vmatprep.subr.bf16.mxu0 0
    %1173 = vmatpush1.bf16.msra.mxu0 %v1165
    %1174 = vmatprep.subr.bf16.mxu0 0
    %1175 = vmatpush1.bf16.msra.mxu0 %v1166
    %1176 = vmatprep.subr.bf16.mxu0 0
    %1177 = vmatpush1.bf16.msra.mxu0 0
    %1178 = vmatprep.subr.bf16.mxu0 0
    %1179 = vmatpush1.bf16.msra.mxu0 0
    %1180 = vmatprep.subr.bf16.mxu0 0
    %1181 = vmatpush1.bf16.msra.mxu0 0
    %1182 = vmatprep.subr.bf16.mxu0 0
    %1183 = vmatpush1.bf16.msra.mxu0 0
    %1184 = vmatprep.subr.bf16.mxu0 0
    %1185 = vmatpush1.bf16.msra.mxu0 0
    %1186 = vmatprep.subr.bf16.mxu0 0
    %1187 = vmatpush1.bf16.msra.mxu0 0
    %1188 = vmatprep.subr.bf16.mxu0 0
    %1189 = vmatpush1.bf16.msra.mxu0 0
    %1190 = vmatprep.subr.bf16.mxu0 0
    %1191 = vmatpush1.bf16.msra.mxu0 0
    %1192 = vmatprep.subr.bf16.mxu0 0
    %1193 = vmatpush1.bf16.msra.mxu0 0
    %1194 = vmatprep.subr.bf16.mxu0 0
    %1195 = vmatpush1.bf16.msra.mxu0 0
    %1196 = vmatprep.subr.bf16.mxu0 0
    %1197 = vmatpush1.bf16.msra.mxu0 0
    %1198 = vmatprep.subr.bf16.mxu0 0
    %1199 = vmatpush1.bf16.msra.mxu0 0
    %1200 = vmatprep.subr.bf16.mxu0 0
    %1201 = vmatpush1.bf16.msra.mxu0 0
    %1202 = vmatprep.subr.bf16.mxu0 0
    %1203 = vmatpush1.bf16.msra.mxu0 0
    %1204 = vmatprep.mubr.bf16.mxu0 0
    %1205 = vmatmul.mubr.bf16.gmra.mrb[0].mxu0 %v1170
    %v1206 = vpop.f32.mrb[0].mxu0
    %v1207 = vadd.f32 %v1155, %v1206
    %v1208 = vpop.f32.mrb[0].mxu0
    %v1209 = vpop.f32.mrb[0].mxu0
    %v1210 = vadd.f32 %v1155, %v1209
    %v1211 = vpop.f32.mrb[0].mxu0
    %1212 = vdwg.mxu0
    %v1213 = vmul.f32 %v1207, %v1207
    %v1214 = vmul.f32 %v1210, %v1210
    %v1215 = vsel %vm117, %v1213, 0.0
    %1216 = vadd.xlane.f32.xlu0 %v1215
    %v1217 = vpop.xlane.xlu0 %1216
    %v1218 = vsel %vm117, %v1214, 0.0
    %1219 = vadd.xlane.f32.xlu0 %v1218
    %v1220 = vpop.xlane.xlu0 %1219
    %v1221 = vmul.f32 %v1217, %v124
    %v1222 = vmul.f32 %v1220, %v124
    %v1223 = vadd.f32 %v1221, 1e-05
    %v1224 = vadd.f32 %v1222, 1e-05
    %v1225 = vrsqrt.pop %v1223
    %v1226 = vrsqrt.pop %v1224
    %v1227 = vmul.f32 %v1207, %v1225
    %v1228 = vmul.f32 %v1210, %v1226
    %s1229 = scalar_lea.vmem %s3, 2
    %v1230 = vld [vmem:[%s1229] sm:$0x1]
    %v1232 = vlaneseq
    %v1233 = vshrl.u32 %v1232, 7
    %v1234 = vsub.s32 0, %v1233
    %v1235 = vrot.slane %v1230, %v1234
    %v1237 = vmul.f32 %v1227, %v1235
    %v1238 = vmul.f32 %v1228, %v1235
    %v1239 = vpack.c.bf16 %v1238, %v1237
    %s1240 = scalar_lea.vmem %s4, 16
    %v1241 = vld [vmem:[%s1240] sm:$0xf]
    %v1242 = vld [vmem:[%s1240 + $0x4] sm:$0xf]
    %s1243 = scalar_lea.vmem %s5, 2
    %v1244 = vld [vmem:[%s1243] sm:$0x1]
    %v1246 = vlaneseq
    %v1247 = vshrl.u32 %v1246, 7
    %v1248 = vsub.s32 0, %v1247
    %v1249 = vrot.slane %v1244, %v1248
    %v1253 = vunpack.c.l.b16 %v1241
    %v1254 = vunpack.c.l.b16 %v1242
    %v1255 = vpack.c.b16 %v1254, %v1253
    %v1258 = vsel %vm117, %v1239, 0
    %1260 = vmatprep.subr.bf16.mxu0 0
    %1261 = vmatpush1.bf16.msra.mxu0 %v1255
    %1262 = vmatprep.subr.bf16.mxu0 0
    %1263 = vmatpush1.bf16.msra.mxu0 0
    %1264 = vmatprep.subr.bf16.mxu0 0
    %1265 = vmatpush1.bf16.msra.mxu0 0
    %1266 = vmatprep.subr.bf16.mxu0 0
    %1267 = vmatpush1.bf16.msra.mxu0 0
    %1268 = vmatprep.subr.bf16.mxu0 0
    %1269 = vmatpush1.bf16.msra.mxu0 0
    %1270 = vmatprep.subr.bf16.mxu0 0
    %1271 = vmatpush1.bf16.msra.mxu0 0
    %1272 = vmatprep.subr.bf16.mxu0 0
    %1273 = vmatpush1.bf16.msra.mxu0 0
    %1274 = vmatprep.subr.bf16.mxu0 0
    %1275 = vmatpush1.bf16.msra.mxu0 0
    %1276 = vmatprep.subr.bf16.mxu0 0
    %1277 = vmatpush1.bf16.msra.mxu0 0
    %1278 = vmatprep.subr.bf16.mxu0 0
    %1279 = vmatpush1.bf16.msra.mxu0 0
    %1280 = vmatprep.subr.bf16.mxu0 0
    %1281 = vmatpush1.bf16.msra.mxu0 0
    %1282 = vmatprep.subr.bf16.mxu0 0
    %1283 = vmatpush1.bf16.msra.mxu0 0
    %1284 = vmatprep.subr.bf16.mxu0 0
    %1285 = vmatpush1.bf16.msra.mxu0 0
    %1286 = vmatprep.subr.bf16.mxu0 0
    %1287 = vmatpush1.bf16.msra.mxu0 0
    %1288 = vmatprep.subr.bf16.mxu0 0
    %1289 = vmatpush1.bf16.msra.mxu0 0
    %1290 = vmatprep.subr.bf16.mxu0 0
    %1291 = vmatpush1.bf16.msra.mxu0 0
    %1292 = vmatprep.mubr.bf16.mxu0 0
    %1293 = vmatmul.mubr.bf16.gmra.mrb[0].mxu0 %v1258
    %v1294 = vpop.f32.mrb[0].mxu0
    %v1295 = vadd.f32 %v1249, %v1294
    %v1296 = vpop.f32.mrb[0].mxu0
    %v1297 = vpop.f32.mrb[0].mxu0
    %v1298 = vadd.f32 %v1249, %v1297
    %v1299 = vpop.f32.mrb[0].mxu0
    %1300 = vdwg.mxu0
    %v1301 = vsub.f32 0.0, %v1295
    %v1302 = vsub.f32 0.0, %v1298
    %v1303 = vmul.f32 %v1301, 1.442695
    %v1304 = vpow.pop %v1303
    %v1305 = vmul.f32 %v1302, 1.442695
    %v1306 = vpow.pop %v1305
    %v1307 = vadd.f32 %v1304, 1.0
    %v1308 = vadd.f32 %v1306, 1.0
    %v1309 = vrcp.pop %v1307
    %v1310 = vmul.f32 1.0, %v1309
    %v1311 = vrcp.pop %v1308
    %v1312 = vmul.f32 1.0, %v1311
    %v1313 = vmul.f32 %v1295, %v1310
    %v1314 = vmul.f32 %v1298, %v1312
    %v1315 = vpack.c.bf16 %v1295, %v1295
    %s1316 = scalar_lea.vmem %s6, 24
    %v1317 = vld [vmem:[%s1316] sm:$0xf]
    %v1318 = vld [vmem:[%s1316 + $0x4] sm:$0xf]
    %v1319 = vld [vmem:[%s1316 + $0x8] sm:$0xf]
    %v1323 = vunpack.c.l.b16 %v1317
    %v1324 = vunpack.c.l.b16 %v1318
    %v1325 = vunpack.c.l.b16 %v1319
    %v1326 = vpack.c.b16 %v1324, %v1323
    %v1327 = vpack.c.b16 %v1325, %v1325
    %v1329 = vsel %vm228, %v1326, 0
    %v1332 = vsel %vm228, %v1327, 0
    %v1335 = vsel %vm235, %v1315, 0
    %1337 = vmatprep.subr.bf16.mxu0 0
    %1338 = vmatpush1.bf16.msra.mxu0 %v1335
    %1339 = vmatprep.subr.bf16.mxu0 0
    %1340 = vmatpush1.bf16.msra.mxu0 0
    %1341 = vmatprep.subr.bf16.mxu0 0
    %1342 = vmatpush1.bf16.msra.mxu0 0
    %1343 = vmatprep.subr.bf16.mxu0 0
    %1344 = vmatpush1.bf16.msra.mxu0 0
    %1345 = vmatprep.subr.bf16.mxu0 0
    %1346 = vmatpush1.bf16.msra.mxu0 0
    %1347 = vmatprep.subr.bf16.mxu0 0
    %1348 = vmatpush1.bf16.msra.mxu0 0
    %1349 = vmatprep.subr.bf16.mxu0 0
    %1350 = vmatpush1.bf16.msra.mxu0 0
    %1351 = vmatprep.subr.bf16.mxu0 0
    %1352 = vmatpush1.bf16.msra.mxu0 0
    %1353 = vmatprep.subr.bf16.mxu0 0
    %1354 = vmatpush1.bf16.msra.mxu0 0
    %1355 = vmatprep.subr.bf16.mxu0 0
    %1356 = vmatpush1.bf16.msra.mxu0 0
    %1357 = vmatprep.subr.bf16.mxu0 0
    %1358 = vmatpush1.bf16.msra.mxu0 0
    %1359 = vmatprep.subr.bf16.mxu0 0
    %1360 = vmatpush1.bf16.msra.mxu0 0
    %1361 = vmatprep.subr.bf16.mxu0 0
    %1362 = vmatpush1.bf16.msra.mxu0 0
    %1363 = vmatprep.subr.bf16.mxu0 0
    %1364 = vmatpush1.bf16.msra.mxu0 0
    %1365 = vmatprep.subr.bf16.mxu0 0
    %1366 = vmatpush1.bf16.msra.mxu0 0
    %1367 = vmatprep.subr.bf16.mxu0 0
    %1368 = vmatpush1.bf16.msra.mxu0 0
    %1369 = vmatprep.mubr.bf16.mxu0 0
    %1370 = vmatmul.mubr.bf16.gmra.mrb[0].mxu0 %v1329
    %v1371 = vpop.f32.mrb[0].mxu0
    %v1372 = vadd.f32 0.0, %v1371
    %v1373 = vpop.f32.mrb[0].mxu0
    %v1374 = vpop.f32.mrb[0].mxu0
    %v1375 = vadd.f32 0.0, %v1374
    %v1376 = vpop.f32.mrb[0].mxu0
    %1377 = vmatprep.mubr.bf16.mxu0 0
    %1378 = vmatmul.mubr.bf16.gmra.mrb[0].mxu0 %v1332
    %v1379 = vpop.f32.mrb[0].mxu0
    %v1380 = vadd.f32 0.0, %v1379
    %v1381 = vpop.f32.mrb[0].mxu0
    %v1382 = vpop.f32.mrb[0].mxu0
    %v1383 = vpop.f32.mrb[0].mxu0
    %1384 = vdwg.mxu0
    %1386 = vrot.lane.b32.xlu0 %v1372, 1
    %v1387 = vpop.permute.xlu0 %1386
    %v1389 = vsel %vm291, 0.0, %v1387
    %v1390 = vadd.f32 %v1389, %v1375
    %1392 = vrot.lane.b32.xlu0 %v1380, 127
    %v1393 = vpop.permute.xlu0 %1392
    %v1395 = vsel %vm298, %v1393, 0.0
    %v1396 = vadd.f32 %v1390, %v1395
    %s1397 = scalar_lea.vmem %s7, 16
    %v1398 = vld [vmem:[%s1397] sm:$0xff]
    %1400 = vset.pattern.permute.xlu0 0
    %1401 = vperm.xlu0 %1400, %v1398
    %v1402 = vpop.permute.xlu0 %1401
    %v1404 = vadd.f32 %v1396, %v1402
    %v1405 = vpack.c.bf16 %v1298, %v1298
    %v1407 = vsel %vm235, %v1405, 0
    %1409 = vmatprep.subr.bf16.mxu0 0
    %1410 = vmatpush1.bf16.msra.mxu0 %v1407
    %1411 = vmatprep.subr.bf16.mxu0 0
    %1412 = vmatpush1.bf16.msra.mxu0 0
    %1413 = vmatprep.subr.bf16.mxu0 0
    %1414 = vmatpush1.bf16.msra.mxu0 0
    %1415 = vmatprep.subr.bf16.mxu0 0
    %1416 = vmatpush1.bf16.msra.mxu0 0
    %1417 = vmatprep.subr.bf16.mxu0 0
    %1418 = vmatpush1.bf16.msra.mxu0 0
    %1419 = vmatprep.subr.bf16.mxu0 0
    %1420 = vmatpush1.bf16.msra.mxu0 0
    %1421 = vmatprep.subr.bf16.mxu0 0
    %1422 = vmatpush1.bf16.msra.mxu0 0
    %1423 = vmatprep.subr.bf16.mxu0 0
    %1424 = vmatpush1.bf16.msra.mxu0 0
    %1425 = vmatprep.subr.bf16.mxu0 0
    %1426 = vmatpush1.bf16.msra.mxu0 0
    %1427 = vmatprep.subr.bf16.mxu0 0
    %1428 = vmatpush1.bf16.msra.mxu0 0
    %1429 = vmatprep.subr.bf16.mxu0 0
    %1430 = vmatpush1.bf16.msra.mxu0 0
    %1431 = vmatprep.subr.bf16.mxu0 0
    %1432 = vmatpush1.bf16.msra.mxu0 0
    %1433 = vmatprep.subr.bf16.mxu0 0
    %1434 = vmatpush1.bf16.msra.mxu0 0
    %1435 = vmatprep.subr.bf16.mxu0 0
    %1436 = vmatpush1.bf16.msra.mxu0 0
    %1437 = vmatprep.subr.bf16.mxu0 0
    %1438 = vmatpush1.bf16.msra.mxu0 0
    %1439 = vmatprep.subr.bf16.mxu0 0
    %1440 = vmatpush1.bf16.msra.mxu0 0
    %1441 = vmatprep.mubr.bf16.mxu0 0
    %1442 = vmatmul.mubr.bf16.gmra.mrb[0].mxu0 %v1329
    %v1443 = vpop.f32.mrb[0].mxu0
    %v1444 = vadd.f32 0.0, %v1443
    %v1445 = vpop.f32.mrb[0].mxu0
    %v1446 = vpop.f32.mrb[0].mxu0
    %v1447 = vadd.f32 0.0, %v1446
    %v1448 = vpop.f32.mrb[0].mxu0
    %1449 = vmatprep.mubr.bf16.mxu0 0
    %1450 = vmatmul.mubr.bf16.gmra.mrb[0].mxu0 %v1332
    %v1451 = vpop.f32.mrb[0].mxu0
    %v1452 = vadd.f32 0.0, %v1451
    %v1453 = vpop.f32.mrb[0].mxu0
    %v1454 = vpop.f32.mrb[0].mxu0
    %v1455 = vpop.f32.mrb[0].mxu0
    %1456 = vdwg.mxu0
    %1458 = vrot.lane.b32.xlu0 %v1444, 1
    %v1459 = vpop.permute.xlu0 %1458
    %v1461 = vsel %vm291, 0.0, %v1459
    %v1462 = vadd.f32 %v1461, %v1447
    %1464 = vrot.lane.b32.xlu0 %v1452, 127
    %v1465 = vpop.permute.xlu0 %1464
    %v1467 = vsel %vm298, %v1465, 0.0
    %v1468 = vadd.f32 %v1462, %v1467
    %v1469 = vadd.f32 %v1468, %v1402
    %v1470 = vsub.f32 0.0, %v1404
    %v1471 = vsub.f32 0.0, %v1469
    %v1472 = vmul.f32 %v1470, 1.442695
    %v1473 = vpow.pop %v1472
    %v1474 = vmul.f32 %v1471, 1.442695
    %v1475 = vpow.pop %v1474
    %v1476 = vadd.f32 %v1473, 1.0
    %v1477 = vadd.f32 %v1475, 1.0
    %v1478 = vrcp.pop %v1476
    %v1479 = vmul.f32 1.0, %v1478
    %v1480 = vrcp.pop %v1477
    %v1481 = vmul.f32 1.0, %v1480
    %v1482 = vmul.f32 %v1404, %v1479
    %v1483 = vmul.f32 %v1469, %v1481
    %s1484 = scalar_lea.vmem %s8, 32
    %v1485 = vld [vmem:[%s1484] sm:$0xf]
    %v1486 = vld [vmem:[%s1484 + $0x4] sm:$0xf]
    %v1487 = vld [vmem:[%s1484 + $0x8] sm:$0xf]
    %v1488 = vld [vmem:[%s1484 + $0xc] sm:$0xf]
    %v1489 = vpack.c.bf16 %v1483, %v1482
    %s1490 = scalar_lea.vmem %s9, 2
    %v1491 = vld [vmem:[%s1490] sm:$0x1]
    %v1493 = vlaneseq
    %v1494 = vshrl.u32 %v1493, 7
    %v1495 = vsub.s32 0, %v1494
    %v1496 = vrot.slane %v1491, %v1495
    %v1502 = vunpack.c.l.b16 %v1485
    %v1503 = vunpack.c.l.b16 %v1486
    %v1504 = vunpack.c.l.b16 %v1487
    %v1505 = vunpack.c.l.b16 %v1488
    %v1506 = vpack.c.b16 %v1503, %v1502
    %v1507 = vpack.c.b16 %v1505, %v1504
    %v1511 = vsel %vm411, %v1489, 0
    %1513 = vmatprep.subr.bf16.mxu0 0
    %1514 = vmatpush1.bf16.msra.mxu0 %v1506
    %1515 = vmatprep.subr.bf16.mxu0 0
    %1516 = vmatpush1.bf16.msra.mxu0 %v1507
    %1517 = vmatprep.subr.bf16.mxu0 0
    %1518 = vmatpush1.bf16.msra.mxu0 0
    %1519 = vmatprep.subr.bf16.mxu0 0
    %1520 = vmatpush1.bf16.msra.mxu0 0
    %1521 = vmatprep.subr.bf16.mxu0 0
    %1522 = vmatpush1.bf16.msra.mxu0 0
    %1523 = vmatprep.subr.bf16.mxu0 0
    %1524 = vmatpush1.bf16.msra.mxu0 0
    %1525 = vmatprep.subr.bf16.mxu0 0
    %1526 = vmatpush1.bf16.msra.mxu0 0
    %1527 = vmatprep.subr.bf16.mxu0 0
    %1528 = vmatpush1.bf16.msra.mxu0 0
    %1529 = vmatprep.subr.bf16.mxu0 0
    %1530 = vmatpush1.bf16.msra.mxu0 0
    %1531 = vmatprep.subr.bf16.mxu0 0
    %1532 = vmatpush1.bf16.msra.mxu0 0
    %1533 = vmatprep.subr.bf16.mxu0 0
    %1534 = vmatpush1.bf16.msra.mxu0 0
    %1535 = vmatprep.subr.bf16.mxu0 0
    %1536 = vmatpush1.bf16.msra.mxu0 0
    %1537 = vmatprep.subr.bf16.mxu0 0
    %1538 = vmatpush1.bf16.msra.mxu0 0
    %1539 = vmatprep.subr.bf16.mxu0 0
    %1540 = vmatpush1.bf16.msra.mxu0 0
    %1541 = vmatprep.subr.bf16.mxu0 0
    %1542 = vmatpush1.bf16.msra.mxu0 0
    %1543 = vmatprep.subr.bf16.mxu0 0
    %1544 = vmatpush1.bf16.msra.mxu0 0
    %1545 = vmatprep.mubr.bf16.mxu0 0
    %1546 = vmatmul.mubr.bf16.gmra.mrb[0].mxu0 %v1511
    %v1547 = vpop.f32.mrb[0].mxu0
    %v1548 = vadd.f32 %v1496, %v1547
    %v1549 = vpop.f32.mrb[0].mxu0
    %v1550 = vpop.f32.mrb[0].mxu0
    %v1551 = vadd.f32 %v1496, %v1550
    %v1552 = vpop.f32.mrb[0].mxu0
    %1553 = vdwg.mxu0
    %v1554 = vpack.c.bf16 %v1551, %v1548
    %s1555 = scalar_lea.vmem %s10, 32
    %v1556 = vld [vmem:[%s1555] sm:$0xf]
    %v1557 = vld [vmem:[%s1555 + $0x4] sm:$0xf]
    %v1558 = vld [vmem:[%s1555 + $0x8] sm:$0xf]
    %v1559 = vld [vmem:[%s1555 + $0xc] sm:$0xf]
    %s1560 = scalar_lea.vmem %s11, 2
    %v1561 = vld [vmem:[%s1560] sm:$0x1]
    %v1563 = vlaneseq
    %v1564 = vshrl.u32 %v1563, 7
    %v1565 = vsub.s32 0, %v1564
    %v1566 = vrot.slane %v1561, %v1565
    %v1572 = vunpack.c.l.b16 %v1556
    %v1573 = vunpack.c.l.b16 %v1557
    %v1574 = vunpack.c.l.b16 %v1558
    %v1575 = vunpack.c.l.b16 %v1559
    %v1576 = vpack.c.b16 %v1573, %v1572
    %v1577 = vpack.c.b16 %v1575, %v1574
    %v1581 = vsel %vm411, %v1554, 0
    %1583 = vmatprep.subr.bf16.mxu0 0
    %1584 = vmatpush1.bf16.msra.mxu0 %v1576
    %1585 = vmatprep.subr.bf16.mxu0 0
    %1586 = vmatpush1.bf16.msra.mxu0 %v1577
    %1587 = vmatprep.subr.bf16.mxu0 0
    %1588 = vmatpush1.bf16.msra.mxu0 0
    %1589 = vmatprep.subr.bf16.mxu0 0
    %1590 = vmatpush1.bf16.msra.mxu0 0
    %1591 = vmatprep.subr.bf16.mxu0 0
    %1592 = vmatpush1.bf16.msra.mxu0 0
    %1593 = vmatprep.subr.bf16.mxu0 0
    %1594 = vmatpush1.bf16.msra.mxu0 0
    %1595 = vmatprep.subr.bf16.mxu0 0
    %1596 = vmatpush1.bf16.msra.mxu0 0
    %1597 = vmatprep.subr.bf16.mxu0 0
    %1598 = vmatpush1.bf16.msra.mxu0 0
    %1599 = vmatprep.subr.bf16.mxu0 0
    %1600 = vmatpush1.bf16.msra.mxu0 0
    %1601 = vmatprep.subr.bf16.mxu0 0
    %1602 = vmatpush1.bf16.msra.mxu0 0
    %1603 = vmatprep.subr.bf16.mxu0 0
    %1604 = vmatpush1.bf16.msra.mxu0 0
    %1605 = vmatprep.subr.bf16.mxu0 0
    %1606 = vmatpush1.bf16.msra.mxu0 0
    %1607 = vmatprep.subr.bf16.mxu0 0
    %1608 = vmatpush1.bf16.msra.mxu0 0
    %1609 = vmatprep.subr.bf16.mxu0 0
    %1610 = vmatpush1.bf16.msra.mxu0 0
    %1611 = vmatprep.subr.bf16.mxu0 0
    %1612 = vmatpush1.bf16.msra.mxu0 0
    %1613 = vmatprep.subr.bf16.mxu0 0
    %1614 = vmatpush1.bf16.msra.mxu0 0
    %1615 = vmatprep.mubr.bf16.mxu0 0
    %1616 = vmatmul.mubr.bf16.gmra.mrb[0].mxu0 %v1581
    %v1617 = vpop.f32.mrb[0].mxu0
    %v1618 = vadd.f32 %v1566, %v1617
    %v1619 = vpop.f32.mrb[0].mxu0
    %v1620 = vpop.f32.mrb[0].mxu0
    %v1621 = vadd.f32 %v1566, %v1620
    %v1622 = vpop.f32.mrb[0].mxu0
    %1623 = vdwg.mxu0
    %v1624 = vmax.f32 %v1618, 0.0
    %v1625 = vmax.f32 %v1621, 0.0
    %v1626 = vand.u32 2147483647, %v1618
    %v1627 = vand.u32 2147483647, %v1621
    %v1628 = vsub.f32 0.0, %v1626
    %v1629 = vsub.f32 0.0, %v1627
    %v1630 = vmul.f32 %v1628, 1.442695
    %v1631 = vpow.pop %v1630
    %v1632 = vmul.f32 %v1629, 1.442695
    %v1633 = vpow.pop %v1632
    %v1634 = vadd.f32 %v1631, 1.0
    %v1635 = vadd.f32 %v1633, 1.0
    %v1636 = vlog2.pop %v1634
    %v1637 = vmul.f32 %v1636, 0.6931472
    %v1638 = vlog2.pop %v1635
    %v1639 = vmul.f32 %v1638, 0.6931472
    %v1640 = vadd.f32 %v1624, %v1637
    %v1641 = vadd.f32 %v1625, %v1639
    %v1642 = vmul.f32 %v1548, %v1640
    %v1643 = vmul.f32 %v1551, %v1641
    %1646 = vrot.lane.b32.xlu0 %v1618, 120
    %v1647 = vpop.permute.xlu0 %1646
    %1648 = vrot.lane.b32.xlu0 %v1621, 120
    %v1649 = vpop.permute.xlu0 %1648
    %v1652 = vmul.f32 %v1618, %v1647
    %v1653 = vmul.f32 %v1621, %v1649
    %1656 = vrot.lane.b32.xlu0 %v1652, 96
    %v1657 = vpop.permute.xlu0 %1656
    %1658 = vrot.lane.b32.xlu0 %v1653, 96
    %v1659 = vpop.permute.xlu0 %1658
    %v1662 = vsel %vm228, %v1657, 0.0
    %1663 = vadd.xlane.f32.xlu0 %v1662
    %v1664 = vpop.xlane.xlu0 %1663
    %v1665 = vsel %vm228, %v1659, 0.0
    %1666 = vadd.xlane.f32.xlu0 %v1665
    %v1667 = vpop.xlane.xlu0 %1666
    %v1668 = vmul.f32 %v1642, %v1664
    %v1669 = vmul.f32 %v1643, %v1667
    %v1670 = vsub.f32 0.0, %v1668
    %v1671 = vsub.f32 0.0, %v1669
    %v1672 = vmul.f32 %v1670, 1.442695
    %v1673 = vpow.pop %v1672
    %v1674 = vmul.f32 %v1671, 1.442695
    %v1675 = vpow.pop %v1674
    %v1676 = vadd.f32 %v1673, 1.0
    %v1677 = vadd.f32 %v1675, 1.0
    %v1678 = vrcp.pop %v1676
    %v1679 = vmul.f32 1.0, %v1678
    %v1680 = vrcp.pop %v1677
    %v1681 = vmul.f32 1.0, %v1680
    %v1682 = vmul.f32 %v1668, %v1679
    %v1683 = vmul.f32 %v1669, %v1681
    %1686 = vrot.lane.b32.xlu0 %v1313, 96
    %v1687 = vpop.permute.xlu0 %1686
    %1688 = vrot.lane.b32.xlu0 %v1314, 96
    %v1689 = vpop.permute.xlu0 %1688
    %v1692 = vmul.f32 %v1682, %v1687
    %v1693 = vmul.f32 %v1683, %v1689
    %s1694 = scalar_lea.vmem %s12, 32
    %v1695 = vld [vmem:[%s1694] sm:$0xf]
    %v1696 = vld [vmem:[%s1694 + $0x4] sm:$0xf]
    %v1697 = vld [vmem:[%s1694 + $0x8] sm:$0xf]
    %v1698 = vld [vmem:[%s1694 + $0xc] sm:$0xf]
    %v1699 = vpack.c.bf16 %v1693, %v1692
    %s1700 = scalar_lea.vmem %s13, 2
    %v1701 = vld [vmem:[%s1700] sm:$0x1]
    %v1703 = vlaneseq
    %v1704 = vshrl.u32 %v1703, 7
    %v1705 = vsub.s32 0, %v1704
    %v1706 = vrot.slane %v1701, %v1705
    %v1712 = vunpack.c.l.b16 %v1695
    %v1713 = vunpack.c.l.b16 %v1696
    %v1714 = vunpack.c.l.b16 %v1697
    %v1715 = vunpack.c.l.b16 %v1698
    %v1716 = vpack.c.b16 %v1713, %v1712
    %v1717 = vpack.c.b16 %v1715, %v1714
    %v1721 = vsel %vm411, %v1699, 0
    %1723 = vmatprep.subr.bf16.mxu0 0
    %1724 = vmatpush1.bf16.msra.mxu0 %v1716
    %1725 = vmatprep.subr.bf16.mxu0 0
    %1726 = vmatpush1.bf16.msra.mxu0 %v1717
    %1727 = vmatprep.subr.bf16.mxu0 0
    %1728 = vmatpush1.bf16.msra.mxu0 0
    %1729 = vmatprep.subr.bf16.mxu0 0
    %1730 = vmatpush1.bf16.msra.mxu0 0
    %1731 = vmatprep.subr.bf16.mxu0 0
    %1732 = vmatpush1.bf16.msra.mxu0 0
    %1733 = vmatprep.subr.bf16.mxu0 0
    %1734 = vmatpush1.bf16.msra.mxu0 0
    %1735 = vmatprep.subr.bf16.mxu0 0
    %1736 = vmatpush1.bf16.msra.mxu0 0
    %1737 = vmatprep.subr.bf16.mxu0 0
    %1738 = vmatpush1.bf16.msra.mxu0 0
    %1739 = vmatprep.subr.bf16.mxu0 0
    %1740 = vmatpush1.bf16.msra.mxu0 0
    %1741 = vmatprep.subr.bf16.mxu0 0
    %1742 = vmatpush1.bf16.msra.mxu0 0
    %1743 = vmatprep.subr.bf16.mxu0 0
    %1744 = vmatpush1.bf16.msra.mxu0 0
    %1745 = vmatprep.subr.bf16.mxu0 0
    %1746 = vmatpush1.bf16.msra.mxu0 0
    %1747 = vmatprep.subr.bf16.mxu0 0
    %1748 = vmatpush1.bf16.msra.mxu0 0
    %1749 = vmatprep.subr.bf16.mxu0 0
    %1750 = vmatpush1.bf16.msra.mxu0 0
    %1751 = vmatprep.subr.bf16.mxu0 0
    %1752 = vmatpush1.bf16.msra.mxu0 0
    %1753 = vmatprep.subr.bf16.mxu0 0
    %1754 = vmatpush1.bf16.msra.mxu0 0
    %1755 = vmatprep.mubr.bf16.mxu0 0
    %1756 = vmatmul.mubr.bf16.gmra.mrb[0].mxu0 %v1721
    %v1757 = vpop.f32.mrb[0].mxu0
    %v1758 = vadd.f32 %v1706, %v1757
    %v1759 = vpop.f32.mrb[0].mxu0
    %v1760 = vpop.f32.mrb[0].mxu0
    %v1761 = vadd.f32 %v1706, %v1760
    %v1762 = vpop.f32.mrb[0].mxu0
    %1763 = vdwg.mxu0
    %v1764 = vsel %vm117, %v1758, 0.0
    %v1765 = vrot.slane %v1764, 4
    %v1766 = vadd.f32 %v1764, %v1765
    %v1767 = vrot.slane %v1766, 2
    %v1768 = vadd.f32 %v1766, %v1767
    %v1769 = vrot.slane %v1768, 1
    %v1770 = vadd.f32 %v1768, %v1769
    %v1771 = vrcp.pop 8.0
    %v1772 = vmul.f32 %v1770, %v1771
    %v1773 = vsel %vm117, %v1761, 0.0
    %v1774 = vrot.slane %v1773, 4
    %v1775 = vadd.f32 %v1773, %v1774
    %v1776 = vrot.slane %v1775, 2
    %v1777 = vadd.f32 %v1775, %v1776
    %v1778 = vrot.slane %v1777, 1
    %v1779 = vadd.f32 %v1777, %v1778
    %v1780 = vmul.f32 %v1779, %v1771
    %vm1781 = vcmask 1040384
    %v1782 = vsel %vm1781, %v1772, %v1780
    %v1783 = vld [vmem:[%s14] sm:$0xf]
    %v1784 = vld [vmem:[%s14 + $0x4] sm:$0xf]
    %v1785 = vpack.c.bf16 %v1782, %v1782
    %v1786 = vld [vmem:[%s15] sm:$0x1]
    %v1788 = vlaneseq
    %v1789 = vshrl.u32 %v1788, 7
    %v1790 = vsub.s32 0, %v1789
    %v1791 = vrot.slane %v1786, %v1790
    %v1795 = vunpack.c.l.b16 %v1783
    %v1796 = vunpack.c.l.b16 %v1784
    %v1797 = vpack.c.b16 %v1796, %v1795
    %v1800 = vsel %vm117, %v1785, 0
    %1802 = vmatprep.subr.bf16.mxu0 0
    %1803 = vmatpush1.bf16.msra.mxu0 %v1797
    %1804 = vmatprep.subr.bf16.mxu0 0
    %1805 = vmatpush1.bf16.msra.mxu0 0
    %1806 = vmatprep.subr.bf16.mxu0 0
    %1807 = vmatpush1.bf16.msra.mxu0 0
    %1808 = vmatprep.subr.bf16.mxu0 0
    %1809 = vmatpush1.bf16.msra.mxu0 0
    %1810 = vmatprep.subr.bf16.mxu0 0
    %1811 = vmatpush1.bf16.msra.mxu0 0
    %1812 = vmatprep.subr.bf16.mxu0 0
    %1813 = vmatpush1.bf16.msra.mxu0 0
    %1814 = vmatprep.subr.bf16.mxu0 0
    %1815 = vmatpush1.bf16.msra.mxu0 0
    %1816 = vmatprep.subr.bf16.mxu0 0
    %1817 = vmatpush1.bf16.msra.mxu0 0
    %1818 = vmatprep.subr.bf16.mxu0 0
    %1819 = vmatpush1.bf16.msra.mxu0 0
    %1820 = vmatprep.subr.bf16.mxu0 0
    %1821 = vmatpush1.bf16.msra.mxu0 0
    %1822 = vmatprep.subr.bf16.mxu0 0
    %1823 = vmatpush1.bf16.msra.mxu0 0
    %1824 = vmatprep.subr.bf16.mxu0 0
    %1825 = vmatpush1.bf16.msra.mxu0 0
    %1826 = vmatprep.subr.bf16.mxu0 0
    %1827 = vmatpush1.bf16.msra.mxu0 0
    %1828 = vmatprep.subr.bf16.mxu0 0
    %1829 = vmatpush1.bf16.msra.mxu0 0
    %1830 = vmatprep.subr.bf16.mxu0 0
    %1831 = vmatpush1.bf16.msra.mxu0 0
    %1832 = vmatprep.subr.bf16.mxu0 0
    %1833 = vmatpush1.bf16.msra.mxu0 0
    %1834 = vmatprep.mubr.bf16.mxu0 0
    %1835 = vmatmul.mubr.bf16.gmra.mrb[0].mxu0 %v1800
    %v1836 = vpop.f32.mrb[0].mxu0
    %v1837 = vadd.f32 %v1791, %v1836
    %v1838 = vpop.f32.mrb[0].mxu0
    %v1839 = vpop.f32.mrb[0].mxu0
    %v1840 = vpop.f32.mrb[0].mxu0
    %1841 = vdwg.mxu0
    %1843 = vrot.lane.b32.xlu0 %v1837, 16
    %v1844 = vpop.permute.xlu0 %1843
    %v1846 = vsel %vm117, %v1782, %v1844
    %vm1847 = vcmask 162816
    %v1848 = vsel %vm1847, %v1846, 0.0
    %1849 = vst [vmem:[#allocation2] sm:$0x3] %v1848
    // Predicated region
    $region66: #{tpu_custom_call.1} parent=1 // pred_check
      _
    $region67: #{tpu_custom_call.1} parent=1 // pred_check_branch
      %1851 = sbr.rel (0) target = $region69
    $region68: #{tpu_custom_call.1} parent=1 // pred_region
      %s1853 = ssub.s32 32, 32
      %1854 = vsyncadd [#allocation3], %s1853
      %s1856 = sshll.u32 [#allocation2], 4
      %s1857 = int_to_ptr.vmem [resolvable:$true] %s1856
      %1859 = dma.vmem_to_hbm [thread:$0]  %s1857, 32, %s16, [#allocation3]
    $region69: #{tpu_custom_call.1} parent=1 // pred_fallthru
      _
    // Predicated region
    $region70: #{tpu_custom_call.1} parent=1 // pred_check
      _
    $region71: #{tpu_custom_call.1} parent=1 // pred_check_branch
      %1861 = sbr.rel (0) target = $region73
    $region72: #{tpu_custom_call.1} parent=1 // pred_region
      %1862 = dma.done [#allocation3], 32
    $region73: #{tpu_custom_call.1} parent=1 // pred_fallthru
      _
    %1863 = vsyncpa [#allocation3], 1

// kernel: tpu_custom_call.1
$region0: #{tpu_custom_call.1}
  #allocation0 [shape = 'u32[]', space=smem, size = 0x4, offset = 0x4, fixed_abs, tag = 'smem constant byte address 0x4 - core index']
  #allocation1 [shape = 'u32[144,128]{1,0:T(1,128)}', space=vmem, size = 0x12000, scoped, tag = 'internal scratch']
  %s0 = inlined_call_operand.vmem [shape: f32[16,4], index: 0, kind: input, shape index: {}]
  %s1 = inlined_call_operand.vmem [shape: bf16[4,16], index: 1, kind: input, shape index: {}]
  %s2 = inlined_call_operand.vmem [shape: f32[1,16], index: 2, kind: input, shape index: {}]
  %s3 = inlined_call_operand.vmem [shape: f32[3,1,16], index: 3, kind: input, shape index: {}]
  %s4 = inlined_call_operand.vmem [shape: bf16[3,16,64], index: 4, kind: input, shape index: {}]
  %s5 = inlined_call_operand.vmem [shape: f32[3,1,64], index: 5, kind: input, shape index: {}]
  %s6 = inlined_call_operand.vmem [shape: bf16[3,24,8], index: 6, kind: input, shape index: {}]
  %s7 = inlined_call_operand.vmem [shape: f32[3,8,1], index: 7, kind: input, shape index: {}]
  %s8 = inlined_call_operand.vmem [shape: bf16[3,32,32], index: 8, kind: input, shape index: {}]
  %s9 = inlined_call_operand.vmem [shape: f32[3,1,32], index: 9, kind: input, shape index: {}]
  %s10 = inlined_call_operand.vmem [shape: bf16[3,32,48], index: 10, kind: input, shape index: {}]
  %s11 = inlined_call_operand.vmem [shape: f32[3,1,48], index: 11, kind: input, shape index: {}]
  %s12 = inlined_call_operand.vmem [shape: bf16[3,32,16], index: 12, kind: input, shape index: {}]
  %s13 = inlined_call_operand.vmem [shape: f32[3,1,16], index: 13, kind: input, shape index: {}]
  %s14 = inlined_call_operand.vmem [shape: bf16[16,4], index: 14, kind: input, shape index: {}]
  %s15 = inlined_call_operand.vmem [shape: f32[1,4], index: 15, kind: input, shape index: {}]
  %s16 = inlined_call_operand.hbm [shape: f32[2,128], index: 16, kind: output, shape index: {}]
  %s17 = sld [smem:[#allocation0]]
  $region74: #{tpu_custom_call.1} parent=0
    _
  %s19 = ssub.s32 1, %s17
  %s20 = scalar_select 0, %s19, %s17
  $region1: #{tpu_custom_call.1} parent=0
    #allocation2 [shape = 'u8[1024]{0}', space=vmem, size = 0x400, scoped, tag = 'output window, operand 0, single buffered']
    #allocation3 [shape = 's32[1]{0}', space=sflag, size = 0x4, scoped, tag = 'scoped memory for tpu_custom_call.1']
    %21 = vsyncpa [#allocation3], 0
    // Predicated region
    $region2: #{tpu_custom_call.1} parent=1 // pred_check
      _
    $region3: #{tpu_custom_call.1} parent=1 // pred_check_branch
      %23 = sbr.rel (0) target = $region5
    $region4: #{tpu_custom_call.1} parent=1 // pred_region
      _
    $region5: #{tpu_custom_call.1} parent=1 // pred_fallthru
      _
    // Predicated region
    $region6: #{tpu_custom_call.1} parent=1 // pred_check
      _
    $region7: #{tpu_custom_call.1} parent=1 // pred_check_branch
      %25 = sbr.rel (0) target = $region9
    $region8: #{tpu_custom_call.1} parent=1 // pred_region
      _
    $region9: #{tpu_custom_call.1} parent=1 // pred_fallthru
      _
    // Predicated region
    $region10: #{tpu_custom_call.1} parent=1 // pred_check
      _
    $region11: #{tpu_custom_call.1} parent=1 // pred_check_branch
      %27 = sbr.rel (0) target = $region13
    $region12: #{tpu_custom_call.1} parent=1 // pred_region
      _
    $region13: #{tpu_custom_call.1} parent=1 // pred_fallthru
      _
    // Predicated region
    $region14: #{tpu_custom_call.1} parent=1 // pred_check
      _
    $region15: #{tpu_custom_call.1} parent=1 // pred_check_branch
      %29 = sbr.rel (0) target = $region17
    $region16: #{tpu_custom_call.1} parent=1 // pred_region
      _
    $region17: #{tpu_custom_call.1} parent=1 // pred_fallthru
      _
    // Predicated region
    $region18: #{tpu_custom_call.1} parent=1 // pred_check
      _
    $region19: #{tpu_custom_call.1} parent=1 // pred_check_branch
      %31 = sbr.rel (0) target = $region21
    $region20: #{tpu_custom_call.1} parent=1 // pred_region
      _
    $region21: #{tpu_custom_call.1} parent=1 // pred_fallthru
      _
    // Predicated region
    $region22: #{tpu_custom_call.1} parent=1 // pred_check
      _
    $region23: #{tpu_custom_call.1} parent=1 // pred_check_branch
      %33 = sbr.rel (0) target = $region25
    $region24: #{tpu_custom_call.1} parent=1 // pred_region
      _
    $region25: #{tpu_custom_call.1} parent=1 // pred_fallthru
      _
    // Predicated region
    $region26: #{tpu_custom_call.1} parent=1 // pred_check
      _
    $region27: #{tpu_custom_call.1} parent=1 // pred_check_branch
      %35 = sbr.rel (0) target = $region29
    $region28: #{tpu_custom_call.1} parent=1 // pred_region
      _
    $region29: #{tpu_custom_call.1} parent=1 // pred_fallthru
      _
    // Predicated region
    $region30: #{tpu_custom_call.1} parent=1 // pred_check
      _
    $region31: #{tpu_custom_call.1} parent=1 // pred_check_branch
      %37 = sbr.rel (0) target = $region33
    $region32: #{tpu_custom_call.1} parent=1 // pred_region
      _
    $region33: #{tpu_custom_call.1} parent=1 // pred_fallthru
      _
    // Predicated region
    $region34: #{tpu_custom_call.1} parent=1 // pred_check
      _
    $region35: #{tpu_custom_call.1} parent=1 // pred_check_branch
      %39 = sbr.rel (0) target = $region37
    $region36: #{tpu_custom_call.1} parent=1 // pred_region
      _
    $region37: #{tpu_custom_call.1} parent=1 // pred_fallthru
      _
    // Predicated region
    $region38: #{tpu_custom_call.1} parent=1 // pred_check
      _
    $region39: #{tpu_custom_call.1} parent=1 // pred_check_branch
      %41 = sbr.rel (0) target = $region41
    $region40: #{tpu_custom_call.1} parent=1 // pred_region
      _
    $region41: #{tpu_custom_call.1} parent=1 // pred_fallthru
      _
    // Predicated region
    $region42: #{tpu_custom_call.1} parent=1 // pred_check
      _
    $region43: #{tpu_custom_call.1} parent=1 // pred_check_branch
      %43 = sbr.rel (0) target = $region45
    $region44: #{tpu_custom_call.1} parent=1 // pred_region
      _
    $region45: #{tpu_custom_call.1} parent=1 // pred_fallthru
      _
    // Predicated region
    $region46: #{tpu_custom_call.1} parent=1 // pred_check
      _
    $region47: #{tpu_custom_call.1} parent=1 // pred_check_branch
      %45 = sbr.rel (0) target = $region49
    $region48: #{tpu_custom_call.1} parent=1 // pred_region
      _
    $region49: #{tpu_custom_call.1} parent=1 // pred_fallthru
      _
    // Predicated region
    $region50: #{tpu_custom_call.1} parent=1 // pred_check
      _
    $region51: #{tpu_custom_call.1} parent=1 // pred_check_branch
      %47 = sbr.rel (0) target = $region53
    $region52: #{tpu_custom_call.1} parent=1 // pred_region
      _
    $region53: #{tpu_custom_call.1} parent=1 // pred_fallthru
      _
    // Predicated region
    $region54: #{tpu_custom_call.1} parent=1 // pred_check
      _
    $region55: #{tpu_custom_call.1} parent=1 // pred_check_branch
      %49 = sbr.rel (0) target = $region57
    $region56: #{tpu_custom_call.1} parent=1 // pred_region
      _
    $region57: #{tpu_custom_call.1} parent=1 // pred_fallthru
      _
    // Predicated region
    $region58: #{tpu_custom_call.1} parent=1 // pred_check
      _
    $region59: #{tpu_custom_call.1} parent=1 // pred_check_branch
      %51 = sbr.rel (0) target = $region61
    $region60: #{tpu_custom_call.1} parent=1 // pred_region
      _
    $region61: #{tpu_custom_call.1} parent=1 // pred_fallthru
      _
    // Predicated region
    $region62: #{tpu_custom_call.1} parent=1 // pred_check
      _
    $region63: #{tpu_custom_call.1} parent=1 // pred_check_branch
      %53 = sbr.rel (0) target = $region65
    $region64: #{tpu_custom_call.1} parent=1 // pred_region
      _
    $region65: #{tpu_custom_call.1} parent=1 // pred_fallthru
      _
    %v55 = vld [vmem:[%s0] sm:$0xff]
    %v56 = vld [vmem:[%s0 + $0x8] sm:$0xff]
    %v57 = vld [vmem:[%s1] sm:$0x3]
    %v58 = vpack.c.bf16 %v56, %v55
    %v59 = vld [vmem:[%s2] sm:$0x1]
    %v61 = vlaneseq
    %v62 = vshrl.u32 %v61, 7
    %v63 = vsub.s32 0, %v62
    %v64 = vrot.slane %v59, %v63
    %vm66 = vcmask 31744
    %v68 = vsel %vm66, %v58, 0
    %vm70 = vcmask 1041408
    %v72 = vsel %vm70, %v57, 0
    %74 = vmatprep.subr.bf16.mxu0 0
    %75 = vmatpush1.bf16.msra.mxu0 %v72
    %76 = vmatprep.subr.bf16.mxu0 0
    %77 = vmatpush1.bf16.msra.mxu0 0
    %78 = vmatprep.subr.bf16.mxu0 0
    %79 = vmatpush1.bf16.msra.mxu0 0
    %80 = vmatprep.subr.bf16.mxu0 0
    %81 = vmatpush1.bf16.msra.mxu0 0
    %82 = vmatprep.subr.bf16.mxu0 0
    %83 = vmatpush1.bf16.msra.mxu0 0
    %84 = vmatprep.subr.bf16.mxu0 0
    %85 = vmatpush1.bf16.msra.mxu0 0
    %86 = vmatprep.subr.bf16.mxu0 0
    %87 = vmatpush1.bf16.msra.mxu0 0
    %88 = vmatprep.subr.bf16.mxu0 0
    %89 = vmatpush1.bf16.msra.mxu0 0
    %90 = vmatprep.subr.bf16.mxu0 0
    %91 = vmatpush1.bf16.msra.mxu0 0
    %92 = vmatprep.subr.bf16.mxu0 0
    %93 = vmatpush1.bf16.msra.mxu0 0
    %94 = vmatprep.subr.bf16.mxu0 0
    %95 = vmatpush1.bf16.msra.mxu0 0
    %96 = vmatprep.subr.bf16.mxu0 0
    %97 = vmatpush1.bf16.msra.mxu0 0
    %98 = vmatprep.subr.bf16.mxu0 0
    %99 = vmatpush1.bf16.msra.mxu0 0
    %100 = vmatprep.subr.bf16.mxu0 0
    %101 = vmatpush1.bf16.msra.mxu0 0
    %102 = vmatprep.subr.bf16.mxu0 0
    %103 = vmatpush1.bf16.msra.mxu0 0
    %104 = vmatprep.subr.bf16.mxu0 0
    %105 = vmatpush1.bf16.msra.mxu0 0
    %106 = vmatprep.mubr.bf16.mxu0 0
    %107 = vmatmul.mubr.bf16.gmra.mrb[0].mxu0 %v68
    %v108 = vpop.f32.mrb[0].mxu0
    %v109 = vadd.f32 %v64, %v108
    %v110 = vpop.f32.mrb[0].mxu0
    %v111 = vpop.f32.mrb[0].mxu0
    %v112 = vadd.f32 %v64, %v111
    %v113 = vpop.f32.mrb[0].mxu0
    %114 = vdwg.mxu0
    %v115 = vmul.f32 %v109, %v109
    %v116 = vmul.f32 %v112, %v112
    %vm117 = vcmask 130048
    %v118 = vsel %vm117, %v115, 0.0
    %119 = vadd.xlane.f32.xlu0 %v118
    %v120 = vpop.xlane.xlu0 %119
    %v121 = vsel %vm117, %v116, 0.0
    %122 = vadd.xlane.f32.xlu0 %v121
    %v123 = vpop.xlane.xlu0 %122
    %v124 = vrcp.pop 16.0
    %v125 = vmul.f32 %v120, %v124
    %v126 = vmul.f32 %v123, %v124
    %v127 = vadd.f32 %v125, 1e-05
    %v128 = vadd.f32 %v126, 1e-05
    %v129 = vrsqrt.pop %v127
    %v130 = vrsqrt.pop %v128
    %v131 = vmul.f32 %v109, %v129
    %v132 = vmul.f32 %v112, %v130
    %v133 = vld [vmem:[%s3] sm:$0x1]
    %v135 = vlaneseq
    %v136 = vshrl.u32 %v135, 7
    %v137 = vsub.s32 0, %v136
    %v138 = vrot.slane %v133, %v137
    %v140 = vmul.f32 %v131, %v138
    %v141 = vmul.f32 %v132, %v138
    %v142 = vpack.c.bf16 %v141, %v140
    %v143 = vld [vmem:[%s4] sm:$0xf]
    %v144 = vld [vmem:[%s4 + $0x4] sm:$0xf]
    %v145 = vld [vmem:[%s5] sm:$0x1]
    %v147 = vlaneseq
    %v148 = vshrl.u32 %v147, 7
    %v149 = vsub.s32 0, %v148
    %v150 = vrot.slane %v145, %v149
    %v154 = vunpack.c.l.b16 %v143
    %v155 = vunpack.c.l.b16 %v144
    %v156 = vpack.c.b16 %v155, %v154
    %v159 = vsel %vm117, %v142, 0
    %161 = vmatprep.subr.bf16.mxu0 0
    %162 = vmatpush1.bf16.msra.mxu0 %v156
    %163 = vmatprep.subr.bf16.mxu0 0
    %164 = vmatpush1.bf16.msra.mxu0 0
    %165 = vmatprep.subr.bf16.mxu0 0
    %166 = vmatpush1.bf16.msra.mxu0 0
    %167 = vmatprep.subr.bf16.mxu0 0
    %168 = vmatpush1.bf16.msra.mxu0 0
    %169 = vmatprep.subr.bf16.mxu0 0
    %170 = vmatpush1.bf16.msra.mxu0 0
    %171 = vmatprep.subr.bf16.mxu0 0
    %172 = vmatpush1.bf16.msra.mxu0 0
    %173 = vmatprep.subr.bf16.mxu0 0
    %174 = vmatpush1.bf16.msra.mxu0 0
    %175 = vmatprep.subr.bf16.mxu0 0
    %176 = vmatpush1.bf16.msra.mxu0 0
    %177 = vmatprep.subr.bf16.mxu0 0
    %178 = vmatpush1.bf16.msra.mxu0 0
    %179 = vmatprep.subr.bf16.mxu0 0
    %180 = vmatpush1.bf16.msra.mxu0 0
    %181 = vmatprep.subr.bf16.mxu0 0
    %182 = vmatpush1.bf16.msra.mxu0 0
    %183 = vmatprep.subr.bf16.mxu0 0
    %184 = vmatpush1.bf16.msra.mxu0 0
    %185 = vmatprep.subr.bf16.mxu0 0
    %186 = vmatpush1.bf16.msra.mxu0 0
    %187 = vmatprep.subr.bf16.mxu0 0
    %188 = vmatpush1.bf16.msra.mxu0 0
    %189 = vmatprep.subr.bf16.mxu0 0
    %190 = vmatpush1.bf16.msra.mxu0 0
    %191 = vmatprep.subr.bf16.mxu0 0
    %192 = vmatpush1.bf16.msra.mxu0 0
    %193 = vmatprep.mubr.bf16.mxu0 0
    %194 = vmatmul.mubr.bf16.gmra.mrb[0].mxu0 %v159
    %v195 = vpop.f32.mrb[0].mxu0
    %v196 = vadd.f32 %v150, %v195
    %v197 = vpop.f32.mrb[0].mxu0
    %v198 = vpop.f32.mrb[0].mxu0
    %v199 = vadd.f32 %v150, %v198
    %v200 = vpop.f32.mrb[0].mxu0
    %201 = vdwg.mxu0
    %v202 = vsub.f32 0.0, %v196
    %v203 = vsub.f32 0.0, %v199
    %v204 = vmul.f32 %v202, 1.442695
    %v205 = vpow.pop %v204
    %v206 = vmul.f32 %v203, 1.442695
    %v207 = vpow.pop %v206
    %v208 = vadd.f32 %v205, 1.0
    %v209 = vadd.f32 %v207, 1.0
    %v210 = vrcp.pop %v208
    %v211 = vmul.f32 1.0, %v210
    %v212 = vrcp.pop %v209
    %v213 = vmul.f32 1.0, %v212
    %v214 = vmul.f32 %v196, %v211
    %v215 = vmul.f32 %v199, %v213
    %v216 = vpack.c.bf16 %v196, %v196
    %v217 = vld [vmem:[%s6] sm:$0xf]
    %v218 = vld [vmem:[%s6 + $0x4] sm:$0xf]
    %v219 = vld [vmem:[%s6 + $0x8] sm:$0xf]
    %v223 = vunpack.c.l.b16 %v217
    %v224 = vunpack.c.l.b16 %v218
    %v225 = vunpack.c.l.b16 %v219
    %v226 = vpack.c.b16 %v224, %v223
    %v227 = vpack.c.b16 %v225, %v225
    %vm228 = vcmask 64512
    %v230 = vsel %vm228, %v226, 0
    %v233 = vsel %vm228, %v227, 0
    %vm235 = vcmask 1043456
    %v237 = vsel %vm235, %v216, 0
    %239 = vmatprep.subr.bf16.mxu0 0
    %240 = vmatpush1.bf16.msra.mxu0 %v237
    %241 = vmatprep.subr.bf16.mxu0 0
    %242 = vmatpush1.bf16.msra.mxu0 0
    %243 = vmatprep.subr.bf16.mxu0 0
    %244 = vmatpush1.bf16.msra.mxu0 0
    %245 = vmatprep.subr.bf16.mxu0 0
    %246 = vmatpush1.bf16.msra.mxu0 0
    %247 = vmatprep.subr.bf16.mxu0 0
    %248 = vmatpush1.bf16.msra.mxu0 0
    %249 = vmatprep.subr.bf16.mxu0 0
    %250 = vmatpush1.bf16.msra.mxu0 0
    %251 = vmatprep.subr.bf16.mxu0 0
    %252 = vmatpush1.bf16.msra.mxu0 0
    %253 = vmatprep.subr.bf16.mxu0 0
    %254 = vmatpush1.bf16.msra.mxu0 0
    %255 = vmatprep.subr.bf16.mxu0 0
    %256 = vmatpush1.bf16.msra.mxu0 0
    %257 = vmatprep.subr.bf16.mxu0 0
    %258 = vmatpush1.bf16.msra.mxu0 0
    %259 = vmatprep.subr.bf16.mxu0 0
    %260 = vmatpush1.bf16.msra.mxu0 0
    %261 = vmatprep.subr.bf16.mxu0 0
    %262 = vmatpush1.bf16.msra.mxu0 0
    %263 = vmatprep.subr.bf16.mxu0 0
    %264 = vmatpush1.bf16.msra.mxu0 0
    %265 = vmatprep.subr.bf16.mxu0 0
    %266 = vmatpush1.bf16.msra.mxu0 0
    %267 = vmatprep.subr.bf16.mxu0 0
    %268 = vmatpush1.bf16.msra.mxu0 0
    %269 = vmatprep.subr.bf16.mxu0 0
    %270 = vmatpush1.bf16.msra.mxu0 0
    %271 = vmatprep.mubr.bf16.mxu0 0
    %272 = vmatmul.mubr.bf16.gmra.mrb[0].mxu0 %v230
    %v273 = vpop.f32.mrb[0].mxu0
    %v274 = vadd.f32 0.0, %v273
    %v275 = vpop.f32.mrb[0].mxu0
    %v276 = vpop.f32.mrb[0].mxu0
    %v277 = vadd.f32 0.0, %v276
    %v278 = vpop.f32.mrb[0].mxu0
    %279 = vmatprep.mubr.bf16.mxu0 0
    %280 = vmatmul.mubr.bf16.gmra.mrb[0].mxu0 %v233
    %v281 = vpop.f32.mrb[0].mxu0
    %v282 = vadd.f32 0.0, %v281
    %v283 = vpop.f32.mrb[0].mxu0
    %v284 = vpop.f32.mrb[0].mxu0
    %v285 = vpop.f32.mrb[0].mxu0
    %286 = vdwg.mxu0
    %288 = vrot.lane.b32.xlu0 %v274, 1
    %v289 = vpop.permute.xlu0 %288
    %vm291 = vcmask 7168
    %v292 = vsel %vm291, 0.0, %v289
    %v293 = vadd.f32 %v292, %v277
    %295 = vrot.lane.b32.xlu0 %v282, 127
    %v296 = vpop.permute.xlu0 %295
    %vm298 = vcmask 252928
    %v299 = vsel %vm298, %v296, 0.0
    %v300 = vadd.f32 %v293, %v299
    %v301 = vld [vmem:[%s7] sm:$0xff]
    %303 = vset.pattern.permute.xlu0 0
    %304 = vperm.xlu0 %303, %v301
    %v305 = vpop.permute.xlu0 %304
    %v307 = vadd.f32 %v300, %v305
    %v308 = vpack.c.bf16 %v199, %v199
    %v310 = vsel %vm235, %v308, 0
    %312 = vmatprep.subr.bf16.mxu0 0
    %313 = vmatpush1.bf16.msra.mxu0 %v310
    %314 = vmatprep.subr.bf16.mxu0 0
    %315 = vmatpush1.bf16.msra.mxu0 0
    %316 = vmatprep.subr.bf16.mxu0 0
    %317 = vmatpush1.bf16.msra.mxu0 0
    %318 = vmatprep.subr.bf16.mxu0 0
    %319 = vmatpush1.bf16.msra.mxu0 0
    %320 = vmatprep.subr.bf16.mxu0 0
    %321 = vmatpush1.bf16.msra.mxu0 0
    %322 = vmatprep.subr.bf16.mxu0 0
    %323 = vmatpush1.bf16.msra.mxu0 0
    %324 = vmatprep.subr.bf16.mxu0 0
    %325 = vmatpush1.bf16.msra.mxu0 0
    %326 = vmatprep.subr.bf16.mxu0 0
    %327 = vmatpush1.bf16.msra.mxu0 0
    %328 = vmatprep.subr.bf16.mxu0 0
    %329 = vmatpush1.bf16.msra.mxu0 0
    %330 = vmatprep.subr.bf16.mxu0 0
    %331 = vmatpush1.bf16.msra.mxu0 0
    %332 = vmatprep.subr.bf16.mxu0 0
    %333 = vmatpush1.bf16.msra.mxu0 0
    %334 = vmatprep.subr.bf16.mxu0 0
    %335 = vmatpush1.bf16.msra.mxu0 0
    %336 = vmatprep.subr.bf16.mxu0 0
    %337 = vmatpush1.bf16.msra.mxu0 0
    %338 = vmatprep.subr.bf16.mxu0 0
    %339 = vmatpush1.bf16.msra.mxu0 0
    %340 = vmatprep.subr.bf16.mxu0 0
    %341 = vmatpush1.bf16.msra.mxu0 0
    %342 = vmatprep.subr.bf16.mxu0 0
    %343 = vmatpush1.bf16.msra.mxu0 0
    %344 = vmatprep.mubr.bf16.mxu0 0
    %345 = vmatmul.mubr.bf16.gmra.mrb[0].mxu0 %v230
    %v346 = vpop.f32.mrb[0].mxu0
    %v347 = vadd.f32 0.0, %v346
    %v348 = vpop.f32.mrb[0].mxu0
    %v349 = vpop.f32.mrb[0].mxu0
    %v350 = vadd.f32 0.0, %v349
    %v351 = vpop.f32.mrb[0].mxu0
    %352 = vmatprep.mubr.bf16.mxu0 0
    %353 = vmatmul.mubr.bf16.gmra.mrb[0].mxu0 %v233
    %v354 = vpop.f32.mrb[0].mxu0
    %v355 = vadd.f32 0.0, %v354
    %v356 = vpop.f32.mrb[0].mxu0
    %v357 = vpop.f32.mrb[0].mxu0
    %v358 = vpop.f32.mrb[0].mxu0
    %359 = vdwg.mxu0
    %361 = vrot.lane.b32.xlu0 %v347, 1
    %v362 = vpop.permute.xlu0 %361
    %v364 = vsel %vm291, 0.0, %v362
    %v365 = vadd.f32 %v364, %v350
    %367 = vrot.lane.b32.xlu0 %v355, 127
    %v368 = vpop.permute.xlu0 %367
    %v370 = vsel %vm298, %v368, 0.0
    %v371 = vadd.f32 %v365, %v370
    %v372 = vadd.f32 %v371, %v305
    %v373 = vsub.f32 0.0, %v307
    %v374 = vsub.f32 0.0, %v372
    %v375 = vmul.f32 %v373, 1.442695
    %v376 = vpow.pop %v375
    %v377 = vmul.f32 %v374, 1.442695
    %v378 = vpow.pop %v377
    %v379 = vadd.f32 %v376, 1.0
    %v380 = vadd.f32 %v378, 1.0
    %v381 = vrcp.pop %v379
    %v382 = vmul.f32 1.0, %v381
    %v383 = vrcp.pop %v380
    %v384 = vmul.f32 1.0, %v383
    %v385 = vmul.f32 %v307, %v382
    %v386 = vmul.f32 %v372, %v384
    %v387 = vld [vmem:[%s8] sm:$0xf]
    %v388 = vld [vmem:[%s8 + $0x4] sm:$0xf]
    %v389 = vld [vmem:[%s8 + $0x8] sm:$0xf]
    %v390 = vld [vmem:[%s8 + $0xc] sm:$0xf]
    %v391 = vpack.c.bf16 %v386, %v385
    %v392 = vld [vmem:[%s9] sm:$0x1]
    %v394 = vlaneseq
    %v395 = vshrl.u32 %v394, 7
    %v396 = vsub.s32 0, %v395
    %v397 = vrot.slane %v392, %v396
    %v403 = vunpack.c.l.b16 %v387
    %v404 = vunpack.c.l.b16 %v388
    %v405 = vunpack.c.l.b16 %v389
    %v406 = vunpack.c.l.b16 %v390
    %v407 = vpack.c.b16 %v404, %v403
    %v408 = vpack.c.b16 %v406, %v405
    %vm411 = vcmask 261120
    %v413 = vsel %vm411, %v391, 0
    %415 = vmatprep.subr.bf16.mxu0 0
    %416 = vmatpush1.bf16.msra.mxu0 %v407
    %417 = vmatprep.subr.bf16.mxu0 0
    %418 = vmatpush1.bf16.msra.mxu0 %v408
    %419 = vmatprep.subr.bf16.mxu0 0
    %420 = vmatpush1.bf16.msra.mxu0 0
    %421 = vmatprep.subr.bf16.mxu0 0
    %422 = vmatpush1.bf16.msra.mxu0 0
    %423 = vmatprep.subr.bf16.mxu0 0
    %424 = vmatpush1.bf16.msra.mxu0 0
    %425 = vmatprep.subr.bf16.mxu0 0
    %426 = vmatpush1.bf16.msra.mxu0 0
    %427 = vmatprep.subr.bf16.mxu0 0
    %428 = vmatpush1.bf16.msra.mxu0 0
    %429 = vmatprep.subr.bf16.mxu0 0
    %430 = vmatpush1.bf16.msra.mxu0 0
    %431 = vmatprep.subr.bf16.mxu0 0
    %432 = vmatpush1.bf16.msra.mxu0 0
    %433 = vmatprep.subr.bf16.mxu0 0
    %434 = vmatpush1.bf16.msra.mxu0 0
    %435 = vmatprep.subr.bf16.mxu0 0
    %436 = vmatpush1.bf16.msra.mxu0 0
    %437 = vmatprep.subr.bf16.mxu0 0
    %438 = vmatpush1.bf16.msra.mxu0 0
    %439 = vmatprep.subr.bf16.mxu0 0
    %440 = vmatpush1.bf16.msra.mxu0 0
    %441 = vmatprep.subr.bf16.mxu0 0
    %442 = vmatpush1.bf16.msra.mxu0 0
    %443 = vmatprep.subr.bf16.mxu0 0
    %444 = vmatpush1.bf16.msra.mxu0 0
    %445 = vmatprep.subr.bf16.mxu0 0
    %446 = vmatpush1.bf16.msra.mxu0 0
    %447 = vmatprep.mubr.bf16.mxu0 0
    %448 = vmatmul.mubr.bf16.gmra.mrb[0].mxu0 %v413
    %v449 = vpop.f32.mrb[0].mxu0
    %v450 = vadd.f32 %v397, %v449
    %v451 = vpop.f32.mrb[0].mxu0
    %v452 = vpop.f32.mrb[0].mxu0
    %v453 = vadd.f32 %v397, %v452
    %v454 = vpop.f32.mrb[0].mxu0
    %455 = vdwg.mxu0
    %v456 = vpack.c.bf16 %v453, %v450
    %v457 = vld [vmem:[%s10] sm:$0xf]
    %v458 = vld [vmem:[%s10 + $0x4] sm:$0xf]
    %v459 = vld [vmem:[%s10 + $0x8] sm:$0xf]
    %v460 = vld [vmem:[%s10 + $0xc] sm:$0xf]
    %v461 = vld [vmem:[%s11] sm:$0x1]
    %v463 = vlaneseq
    %v464 = vshrl.u32 %v463, 7
    %v465 = vsub.s32 0, %v464
    %v466 = vrot.slane %v461, %v465
    %v472 = vunpack.c.l.b16 %v457
    %v473 = vunpack.c.l.b16 %v458
    %v474 = vunpack.c.l.b16 %v459
    %v475 = vunpack.c.l.b16 %v460
    %v476 = vpack.c.b16 %v473, %v472
    %v477 = vpack.c.b16 %v475, %v474
    %v481 = vsel %vm411, %v456, 0
    %483 = vmatprep.subr.bf16.mxu0 0
    %484 = vmatpush1.bf16.msra.mxu0 %v476
    %485 = vmatprep.subr.bf16.mxu0 0
    %486 = vmatpush1.bf16.msra.mxu0 %v477
    %487 = vmatprep.subr.bf16.mxu0 0
    %488 = vmatpush1.bf16.msra.mxu0 0
    %489 = vmatprep.subr.bf16.mxu0 0
    %490 = vmatpush1.bf16.msra.mxu0 0
    %491 = vmatprep.subr.bf16.mxu0 0
    %492 = vmatpush1.bf16.msra.mxu0 0
    %493 = vmatprep.subr.bf16.mxu0 0
    %494 = vmatpush1.bf16.msra.mxu0 0
    %495 = vmatprep.subr.bf16.mxu0 0
    %496 = vmatpush1.bf16.msra.mxu0 0
    %497 = vmatprep.subr.bf16.mxu0 0
    %498 = vmatpush1.bf16.msra.mxu0 0
    %499 = vmatprep.subr.bf16.mxu0 0
    %500 = vmatpush1.bf16.msra.mxu0 0
    %501 = vmatprep.subr.bf16.mxu0 0
    %502 = vmatpush1.bf16.msra.mxu0 0
    %503 = vmatprep.subr.bf16.mxu0 0
    %504 = vmatpush1.bf16.msra.mxu0 0
    %505 = vmatprep.subr.bf16.mxu0 0
    %506 = vmatpush1.bf16.msra.mxu0 0
    %507 = vmatprep.subr.bf16.mxu0 0
    %508 = vmatpush1.bf16.msra.mxu0 0
    %509 = vmatprep.subr.bf16.mxu0 0
    %510 = vmatpush1.bf16.msra.mxu0 0
    %511 = vmatprep.subr.bf16.mxu0 0
    %512 = vmatpush1.bf16.msra.mxu0 0
    %513 = vmatprep.subr.bf16.mxu0 0
    %514 = vmatpush1.bf16.msra.mxu0 0
    %515 = vmatprep.mubr.bf16.mxu0 0
    %516 = vmatmul.mubr.bf16.gmra.mrb[0].mxu0 %v481
    %v517 = vpop.f32.mrb[0].mxu0
    %v518 = vadd.f32 %v466, %v517
    %v519 = vpop.f32.mrb[0].mxu0
    %v520 = vpop.f32.mrb[0].mxu0
    %v521 = vadd.f32 %v466, %v520
    %v522 = vpop.f32.mrb[0].mxu0
    %523 = vdwg.mxu0
    %v524 = vmax.f32 %v518, 0.0
    %v525 = vmax.f32 %v521, 0.0
    %v526 = vand.u32 2147483647, %v518
    %v527 = vand.u32 2147483647, %v521
    %v528 = vsub.f32 0.0, %v526
    %v529 = vsub.f32 0.0, %v527
    %v530 = vmul.f32 %v528, 1.442695
    %v531 = vpow.pop %v530
    %v532 = vmul.f32 %v529, 1.442695
    %v533 = vpow.pop %v532
    %v534 = vadd.f32 %v531, 1.0
    %v535 = vadd.f32 %v533, 1.0
    %v536 = vlog2.pop %v534
    %v537 = vmul.f32 %v536, 0.6931472
    %v538 = vlog2.pop %v535
    %v539 = vmul.f32 %v538, 0.6931472
    %v540 = vadd.f32 %v524, %v537
    %v541 = vadd.f32 %v525, %v539
    %v542 = vmul.f32 %v450, %v540
    %v543 = vmul.f32 %v453, %v541
    %546 = vrot.lane.b32.xlu0 %v518, 120
    %v547 = vpop.permute.xlu0 %546
    %548 = vrot.lane.b32.xlu0 %v521, 120
    %v549 = vpop.permute.xlu0 %548
    %v552 = vmul.f32 %v518, %v547
    %v553 = vmul.f32 %v521, %v549
    %556 = vrot.lane.b32.xlu0 %v552, 96
    %v557 = vpop.permute.xlu0 %556
    %558 = vrot.lane.b32.xlu0 %v553, 96
    %v559 = vpop.permute.xlu0 %558
    %v562 = vsel %vm228, %v557, 0.0
    %563 = vadd.xlane.f32.xlu0 %v562
    %v564 = vpop.xlane.xlu0 %563
    %v565 = vsel %vm228, %v559, 0.0
    %566 = vadd.xlane.f32.xlu0 %v565
    %v567 = vpop.xlane.xlu0 %566
    %v568 = vmul.f32 %v542, %v564
    %v569 = vmul.f32 %v543, %v567
    %v570 = vsub.f32 0.0, %v568
    %v571 = vsub.f32 0.0, %v569
    %v572 = vmul.f32 %v570, 1.442695
    %v573 = vpow.pop %v572
    %v574 = vmul.f32 %v571, 1.442695
    %v575 = vpow.pop %v574
    %v576 = vadd.f32 %v573, 1.0
    %v577 = vadd.f32 %v575, 1.0
    %v578 = vrcp.pop %v576
    %v579 = vmul.f32 1.0, %v578
    %v580 = vrcp.pop %v577
    %v581 = vmul.f32 1.0, %v580
    %v582 = vmul.f32 %v568, %v579
    %v583 = vmul.f32 %v569, %v581
    %586 = vrot.lane.b32.xlu0 %v214, 96
    %v587 = vpop.permute.xlu0 %586
    %588 = vrot.lane.b32.xlu0 %v215, 96
    %v589 = vpop.permute.xlu0 %588
    %v592 = vmul.f32 %v582, %v587
    %v593 = vmul.f32 %v583, %v589
    %v594 = vld [vmem:[%s12] sm:$0xf]
    %v595 = vld [vmem:[%s12 + $0x4] sm:$0xf]
    %v596 = vld [vmem:[%s12 + $0x8] sm:$0xf]
    %v597 = vld [vmem:[%s12 + $0xc] sm:$0xf]
    %v598 = vpack.c.bf16 %v593, %v592
    %v599 = vld [vmem:[%s13] sm:$0x1]
    %v601 = vlaneseq
    %v602 = vshrl.u32 %v601, 7
    %v603 = vsub.s32 0, %v602
    %v604 = vrot.slane %v599, %v603
    %v610 = vunpack.c.l.b16 %v594
    %v611 = vunpack.c.l.b16 %v595
    %v612 = vunpack.c.l.b16 %v596
    %v613 = vunpack.c.l.b16 %v597
    %v614 = vpack.c.b16 %v611, %v610
    %v615 = vpack.c.b16 %v613, %v612
    %v619 = vsel %vm411, %v598, 0
    %621 = vmatprep.subr.bf16.mxu0 0
    %622 = vmatpush1.bf16.msra.mxu0 %v614
    %623 = vmatprep.subr.bf16.mxu0 0
    %624 = vmatpush1.bf16.msra.mxu0 %v615
    %625 = vmatprep.subr.bf16.mxu0 0
    %626 = vmatpush1.bf16.msra.mxu0 0
    %627 = vmatprep.subr.bf16.mxu0 0
    %628 = vmatpush1.bf16.msra.mxu0 0
    %629 = vmatprep.subr.bf16.mxu0 0
    %630 = vmatpush1.bf16.msra.mxu0 0
    %631 = vmatprep.subr.bf16.mxu0 0
    %632 = vmatpush1.bf16.msra.mxu0 0
    %633 = vmatprep.subr.bf16.mxu0 0
    %634 = vmatpush1.bf16.msra.mxu0 0
    %635 = vmatprep.subr.bf16.mxu0 0
    %636 = vmatpush1.bf16.msra.mxu0 0
    %637 = vmatprep.subr.bf16.mxu0 0
    %638 = vmatpush1.bf16.msra.mxu0 0
    %639 = vmatprep.subr.bf16.mxu0 0
    %640 = vmatpush1.bf16.msra.mxu0 0
    %641 = vmatprep.subr.bf16.mxu0 0
    %642 = vmatpush1.bf16.msra.mxu0 0
    %643 = vmatprep.subr.bf16.mxu0 0
    %644 = vmatpush1.bf16.msra.mxu0 0
    %645 = vmatprep.subr.bf16.mxu0 0
    %646 = vmatpush1.bf16.msra.mxu0 0
    %647 = vmatprep.subr.bf16.mxu0 0
    %648 = vmatpush1.bf16.msra.mxu0 0
    %649 = vmatprep.subr.bf16.mxu0 0
    %650 = vmatpush1.bf16.msra.mxu0 0
    %651 = vmatprep.subr.bf16.mxu0 0
    %652 = vmatpush1.bf16.msra.mxu0 0
    %653 = vmatprep.mubr.bf16.mxu0 0
    %654 = vmatmul.mubr.bf16.gmra.mrb[0].mxu0 %v619
    %v655 = vpop.f32.mrb[0].mxu0
    %v656 = vadd.f32 %v604, %v655
    %v657 = vpop.f32.mrb[0].mxu0
    %v658 = vpop.f32.mrb[0].mxu0
    %v659 = vadd.f32 %v604, %v658
    %v660 = vpop.f32.mrb[0].mxu0
    %661 = vdwg.mxu0
    %v662 = vmul.f32 %v656, %v656
    %v663 = vmul.f32 %v659, %v659
    %v664 = vsel %vm117, %v662, 0.0
    %665 = vadd.xlane.f32.xlu0 %v664
    %v666 = vpop.xlane.xlu0 %665
    %v667 = vsel %vm117, %v663, 0.0
    %668 = vadd.xlane.f32.xlu0 %v667
    %v669 = vpop.xlane.xlu0 %668
    %v670 = vmul.f32 %v666, %v124
    %v671 = vmul.f32 %v669, %v124
    %v672 = vadd.f32 %v670, 1e-05
    %v673 = vadd.f32 %v671, 1e-05
    %v674 = vrsqrt.pop %v672
    %v675 = vrsqrt.pop %v673
    %v676 = vmul.f32 %v656, %v674
    %v677 = vmul.f32 %v659, %v675
    %s678 = scalar_lea.vmem %s3, 1
    %v679 = vld [vmem:[%s678] sm:$0x1]
    %v681 = vlaneseq
    %v682 = vshrl.u32 %v681, 7
    %v683 = vsub.s32 0, %v682
    %v684 = vrot.slane %v679, %v683
    %v686 = vmul.f32 %v676, %v684
    %v687 = vmul.f32 %v677, %v684
    %v688 = vpack.c.bf16 %v687, %v686
    %s689 = scalar_lea.vmem %s4, 8
    %v690 = vld [vmem:[%s689] sm:$0xf]
    %v691 = vld [vmem:[%s689 + $0x4] sm:$0xf]
    %s692 = scalar_lea.vmem %s5, 1
    %v693 = vld [vmem:[%s692] sm:$0x1]
    %v695 = vlaneseq
    %v696 = vshrl.u32 %v695, 7
    %v697 = vsub.s32 0, %v696
    %v698 = vrot.slane %v693, %v697
    %v702 = vunpack.c.l.b16 %v690
    %v703 = vunpack.c.l.b16 %v691
    %v704 = vpack.c.b16 %v703, %v702
    %v707 = vsel %vm117, %v688, 0
    %709 = vmatprep.subr.bf16.mxu0 0
    %710 = vmatpush1.bf16.msra.mxu0 %v704
    %711 = vmatprep.subr.bf16.mxu0 0
    %712 = vmatpush1.bf16.msra.mxu0 0
    %713 = vmatprep.subr.bf16.mxu0 0
    %714 = vmatpush1.bf16.msra.mxu0 0
    %715 = vmatprep.subr.bf16.mxu0 0
    %716 = vmatpush1.bf16.msra.mxu0 0
    %717 = vmatprep.subr.bf16.mxu0 0
    %718 = vmatpush1.bf16.msra.mxu0 0
    %719 = vmatprep.subr.bf16.mxu0 0
    %720 = vmatpush1.bf16.msra.mxu0 0
    %721 = vmatprep.subr.bf16.mxu0 0
    %722 = vmatpush1.bf16.msra.mxu0 0
    %723 = vmatprep.subr.bf16.mxu0 0
    %724 = vmatpush1.bf16.msra.mxu0 0
    %725 = vmatprep.subr.bf16.mxu0 0
    %726 = vmatpush1.bf16.msra.mxu0 0
    %727 = vmatprep.subr.bf16.mxu0 0
    %728 = vmatpush1.bf16.msra.mxu0 0
    %729 = vmatprep.subr.bf16.mxu0 0
    %730 = vmatpush1.bf16.msra.mxu0 0
    %731 = vmatprep.subr.bf16.mxu0 0
    %732 = vmatpush1.bf16.msra.mxu0 0
    %733 = vmatprep.subr.bf16.mxu0 0
    %734 = vmatpush1.bf16.msra.mxu0 0
    %735 = vmatprep.subr.bf16.mxu0 0
    %736 = vmatpush1.bf16.msra.mxu0 0
    %737 = vmatprep.subr.bf16.mxu0 0
    %738 = vmatpush1.bf16.msra.mxu0 0
    %739 = vmatprep.subr.bf16.mxu0 0
    %740 = vmatpush1.bf16.msra.mxu0 0
    %741 = vmatprep.mubr.bf16.mxu0 0
    %742 = vmatmul.mubr.bf16.gmra.mrb[0].mxu0 %v707
    %v743 = vpop.f32.mrb[0].mxu0
    %v744 = vadd.f32 %v698, %v743
    %v745 = vpop.f32.mrb[0].mxu0
    %v746 = vpop.f32.mrb[0].mxu0
    %v747 = vadd.f32 %v698, %v746
    %v748 = vpop.f32.mrb[0].mxu0
    %749 = vdwg.mxu0
    %v750 = vsub.f32 0.0, %v744
    %v751 = vsub.f32 0.0, %v747
    %v752 = vmul.f32 %v750, 1.442695
    %v753 = vpow.pop %v752
    %v754 = vmul.f32 %v751, 1.442695
    %v755 = vpow.pop %v754
    %v756 = vadd.f32 %v753, 1.0
    %v757 = vadd.f32 %v755, 1.0
    %v758 = vrcp.pop %v756
    %v759 = vmul.f32 1.0, %v758
    %v760 = vrcp.pop %v757
    %v761 = vmul.f32 1.0, %v760
    %v762 = vmul.f32 %v744, %v759
    %v763 = vmul.f32 %v747, %v761
    %v764 = vpack.c.bf16 %v744, %v744
    %s765 = scalar_lea.vmem %s6, 12
    %v766 = vld [vmem:[%s765] sm:$0xf]
    %v767 = vld [vmem:[%s765 + $0x4] sm:$0xf]
    %v768 = vld [vmem:[%s765 + $0x8] sm:$0xf]
    %v772 = vunpack.c.l.b16 %v766
    %v773 = vunpack.c.l.b16 %v767
    %v774 = vunpack.c.l.b16 %v768
    %v775 = vpack.c.b16 %v773, %v772
    %v776 = vpack.c.b16 %v774, %v774
    %v778 = vsel %vm228, %v775, 0
    %v781 = vsel %vm228, %v776, 0
    %v784 = vsel %vm235, %v764, 0
    %786 = vmatprep.subr.bf16.mxu0 0
    %787 = vmatpush1.bf16.msra.mxu0 %v784
    %788 = vmatprep.subr.bf16.mxu0 0
    %789 = vmatpush1.bf16.msra.mxu0 0
    %790 = vmatprep.subr.bf16.mxu0 0
    %791 = vmatpush1.bf16.msra.mxu0 0
    %792 = vmatprep.subr.bf16.mxu0 0
    %793 = vmatpush1.bf16.msra.mxu0 0
    %794 = vmatprep.subr.bf16.mxu0 0
    %795 = vmatpush1.bf16.msra.mxu0 0
    %796 = vmatprep.subr.bf16.mxu0 0
    %797 = vmatpush1.bf16.msra.mxu0 0
    %798 = vmatprep.subr.bf16.mxu0 0
    %799 = vmatpush1.bf16.msra.mxu0 0
    %800 = vmatprep.subr.bf16.mxu0 0
    %801 = vmatpush1.bf16.msra.mxu0 0
    %802 = vmatprep.subr.bf16.mxu0 0
    %803 = vmatpush1.bf16.msra.mxu0 0
    %804 = vmatprep.subr.bf16.mxu0 0
    %805 = vmatpush1.bf16.msra.mxu0 0
    %806 = vmatprep.subr.bf16.mxu0 0
    %807 = vmatpush1.bf16.msra.mxu0 0
    %808 = vmatprep.subr.bf16.mxu0 0
    %809 = vmatpush1.bf16.msra.mxu0 0
    %810 = vmatprep.subr.bf16.mxu0 0
    %811 = vmatpush1.bf16.msra.mxu0 0
    %812 = vmatprep.subr.bf16.mxu0 0
    %813 = vmatpush1.bf16.msra.mxu0 0
    %814 = vmatprep.subr.bf16.mxu0 0
    %815 = vmatpush1.bf16.msra.mxu0 0
    %816 = vmatprep.subr.bf16.mxu0 0
    %817 = vmatpush1.bf16.msra.mxu0 0
    %818 = vmatprep.mubr.bf16.mxu0 0
    %819 = vmatmul.mubr.bf16.gmra.mrb[0].mxu0 %v778
    %v820 = vpop.f32.mrb[0].mxu0
    %v821 = vadd.f32 0.0, %v820
    %v822 = vpop.f32.mrb[0].mxu0
    %v823 = vpop.f32.mrb[0].mxu0
    %v824 = vadd.f32 0.0, %v823
    %v825 = vpop.f32.mrb[0].mxu0
    %826 = vmatprep.mubr.bf16.mxu0 0
    %827 = vmatmul.mubr.bf16.gmra.mrb[0].mxu0 %v781
    %v828 = vpop.f32.mrb[0].mxu0
    %v829 = vadd.f32 0.0, %v828
    %v830 = vpop.f32.mrb[0].mxu0
    %v831 = vpop.f32.mrb[0].mxu0
    %v832 = vpop.f32.mrb[0].mxu0
    %833 = vdwg.mxu0
    %835 = vrot.lane.b32.xlu0 %v821, 1
    %v836 = vpop.permute.xlu0 %835
    %v838 = vsel %vm291, 0.0, %v836
    %v839 = vadd.f32 %v838, %v824
    %841 = vrot.lane.b32.xlu0 %v829, 127
    %v842 = vpop.permute.xlu0 %841
    %v844 = vsel %vm298, %v842, 0.0
    %v845 = vadd.f32 %v839, %v844
    %s846 = scalar_lea.vmem %s7, 8
    %v847 = vld [vmem:[%s846] sm:$0xff]
    %849 = vset.pattern.permute.xlu0 0
    %850 = vperm.xlu0 %849, %v847
    %v851 = vpop.permute.xlu0 %850
    %v853 = vadd.f32 %v845, %v851
    %v854 = vpack.c.bf16 %v747, %v747
    %v856 = vsel %vm235, %v854, 0
    %858 = vmatprep.subr.bf16.mxu0 0
    %859 = vmatpush1.bf16.msra.mxu0 %v856
    %860 = vmatprep.subr.bf16.mxu0 0
    %861 = vmatpush1.bf16.msra.mxu0 0
    %862 = vmatprep.subr.bf16.mxu0 0
    %863 = vmatpush1.bf16.msra.mxu0 0
    %864 = vmatprep.subr.bf16.mxu0 0
    %865 = vmatpush1.bf16.msra.mxu0 0
    %866 = vmatprep.subr.bf16.mxu0 0
    %867 = vmatpush1.bf16.msra.mxu0 0
    %868 = vmatprep.subr.bf16.mxu0 0
    %869 = vmatpush1.bf16.msra.mxu0 0
    %870 = vmatprep.subr.bf16.mxu0 0
    %871 = vmatpush1.bf16.msra.mxu0 0
    %872 = vmatprep.subr.bf16.mxu0 0
    %873 = vmatpush1.bf16.msra.mxu0 0
    %874 = vmatprep.subr.bf16.mxu0 0
    %875 = vmatpush1.bf16.msra.mxu0 0
    %876 = vmatprep.subr.bf16.mxu0 0
    %877 = vmatpush1.bf16.msra.mxu0 0
    %878 = vmatprep.subr.bf16.mxu0 0
    %879 = vmatpush1.bf16.msra.mxu0 0
    %880 = vmatprep.subr.bf16.mxu0 0
    %881 = vmatpush1.bf16.msra.mxu0 0
    %882 = vmatprep.subr.bf16.mxu0 0
    %883 = vmatpush1.bf16.msra.mxu0 0
    %884 = vmatprep.subr.bf16.mxu0 0
    %885 = vmatpush1.bf16.msra.mxu0 0
    %886 = vmatprep.subr.bf16.mxu0 0
    %887 = vmatpush1.bf16.msra.mxu0 0
    %888 = vmatprep.subr.bf16.mxu0 0
    %889 = vmatpush1.bf16.msra.mxu0 0
    %890 = vmatprep.mubr.bf16.mxu0 0
    %891 = vmatmul.mubr.bf16.gmra.mrb[0].mxu0 %v778
    %v892 = vpop.f32.mrb[0].mxu0
    %v893 = vadd.f32 0.0, %v892
    %v894 = vpop.f32.mrb[0].mxu0
    %v895 = vpop.f32.mrb[0].mxu0
    %v896 = vadd.f32 0.0, %v895
    %v897 = vpop.f32.mrb[0].mxu0
    %898 = vmatprep.mubr.bf16.mxu0 0
    %899 = vmatmul.mubr.bf16.gmra.mrb[0].mxu0 %v781
    %v900 = vpop.f32.mrb[0].mxu0
    %v901 = vadd.f32 0.0, %v900
    %v902 = vpop.f32.mrb[0].mxu0
    %v903 = vpop.f32.mrb[0].mxu0
    %v904 = vpop.f32.mrb[0].mxu0
    %905 = vdwg.mxu0
    %907 = vrot.lane.b32.xlu0 %v893, 1
    %v908 = vpop.permute.xlu0 %907
    %v910 = vsel %vm291, 0.0, %v908
    %v911 = vadd.f32 %v910, %v896
    %913 = vrot.lane.b32.xlu0 %v901, 127
    %v914 = vpop.permute.xlu0 %913
    %v916 = vsel %vm298, %v914, 0.0
    %v917 = vadd.f32 %v911, %v916
    %v918 = vadd.f32 %v917, %v851
    %v919 = vsub.f32 0.0, %v853
    %v920 = vsub.f32 0.0, %v918
    %v921 = vmul.f32 %v919, 1.442695
    %v922 = vpow.pop %v921
    %v923 = vmul.f32 %v920, 1.442695
    %v924 = vpow.pop %v923
    %v925 = vadd.f32 %v922, 1.0
    %v926 = vadd.f32 %v924, 1.0
    %v927 = vrcp.pop %v925
    %v928 = vmul.f32 1.0, %v927
    %v929 = vrcp.pop %v926
    %v930 = vmul.f32 1.0, %v929
    %v931 = vmul.f32 %v853, %v928
    %v932 = vmul.f32 %v918, %v930
    %s933 = scalar_lea.vmem %s8, 16
    %v934 = vld [vmem:[%s933] sm:$0xf]
    %v935 = vld [vmem:[%s933 + $0x4] sm:$0xf]
    %v936 = vld [vmem:[%s933 + $0x8] sm:$0xf]
    %v937 = vld [vmem:[%s933 + $0xc] sm:$0xf]
    %v938 = vpack.c.bf16 %v932, %v931
    %s939 = scalar_lea.vmem %s9, 1
    %v940 = vld [vmem:[%s939] sm:$0x1]
    %v942 = vlaneseq
    %v943 = vshrl.u32 %v942, 7
    %v944 = vsub.s32 0, %v943
    %v945 = vrot.slane %v940, %v944
    %v951 = vunpack.c.l.b16 %v934
    %v952 = vunpack.c.l.b16 %v935
    %v953 = vunpack.c.l.b16 %v936
    %v954 = vunpack.c.l.b16 %v937
    %v955 = vpack.c.b16 %v952, %v951
    %v956 = vpack.c.b16 %v954, %v953
    %v960 = vsel %vm411, %v938, 0
    %962 = vmatprep.subr.bf16.mxu0 0
    %963 = vmatpush1.bf16.msra.mxu0 %v955
    %964 = vmatprep.subr.bf16.mxu0 0
    %965 = vmatpush1.bf16.msra.mxu0 %v956
    %966 = vmatprep.subr.bf16.mxu0 0
    %967 = vmatpush1.bf16.msra.mxu0 0
    %968 = vmatprep.subr.bf16.mxu0 0
    %969 = vmatpush1.bf16.msra.mxu0 0
    %970 = vmatprep.subr.bf16.mxu0 0
    %971 = vmatpush1.bf16.msra.mxu0 0
    %972 = vmatprep.subr.bf16.mxu0 0
    %973 = vmatpush1.bf16.msra.mxu0 0
    %974 = vmatprep.subr.bf16.mxu0 0
    %975 = vmatpush1.bf16.msra.mxu0 0
    %976 = vmatprep.subr.bf16.mxu0 0
    %977 = vmatpush1.bf16.msra.mxu0 0
    %978 = vmatprep.subr.bf16.mxu0 0
    %979 = vmatpush1.bf16.msra.mxu0 0
    %980 = vmatprep.subr.bf16.mxu0 0
    %981 = vmatpush1.bf16.msra.mxu0 0
    %982 = vmatprep.subr.bf16.mxu0 0
    %983 = vmatpush1.bf16.msra.mxu0 0
    %984 = vmatprep.subr.bf16.mxu0 0
    %985 = vmatpush1.bf16.msra.mxu0 0
    %986 = vmatprep.subr.bf16.mxu0 0
    %987 = vmatpush1.bf16.msra.mxu0 0
    %988 = vmatprep.subr.bf16.mxu0 0
    %989 = vmatpush1.bf16.msra.mxu0 0
    %990 = vmatprep.subr.bf16.mxu0 0
    %991 = vmatpush1.bf16.msra.mxu0 0
    %992 = vmatprep.subr.bf16.mxu0 0
    %993 = vmatpush1.bf16.msra.mxu0 0
    %994 = vmatprep.mubr.bf16.mxu0 0
    %995 = vmatmul.mubr.bf16.gmra.mrb[0].mxu0 %v960
    %v996 = vpop.f32.mrb[0].mxu0
    %v997 = vadd.f32 %v945, %v996
    %v998 = vpop.f32.mrb[0].mxu0
    %v999 = vpop.f32.mrb[0].mxu0
    %v1000 = vadd.f32 %v945, %v999
    %v1001 = vpop.f32.mrb[0].mxu0
    %1002 = vdwg.mxu0
    %v1003 = vpack.c.bf16 %v1000, %v997
    %s1004 = scalar_lea.vmem %s10, 16
    %v1005 = vld [vmem:[%s1004] sm:$0xf]
    %v1006 = vld [vmem:[%s1004 + $0x4] sm:$0xf]
    %v1007 = vld [vmem:[%s1004 + $0x8] sm:$0xf]
    %v1008 = vld [vmem:[%s1004 + $0xc] sm:$0xf]
    %s1009 = scalar_lea.vmem %s11, 1
    %v1010 = vld [vmem:[%s1009] sm:$0x1]
    %v1012 = vlaneseq
    %v1013 = vshrl.u32 %v1012, 7
    %v1014 = vsub.s32 0, %v1013
    %v1015 = vrot.slane %v1010, %v1014
    %v1021 = vunpack.c.l.b16 %v1005
    %v1022 = vunpack.c.l.b16 %v1006
    %v1023 = vunpack.c.l.b16 %v1007
    %v1024 = vunpack.c.l.b16 %v1008
    %v1025 = vpack.c.b16 %v1022, %v1021
    %v1026 = vpack.c.b16 %v1024, %v1023
    %v1030 = vsel %vm411, %v1003, 0
    %1032 = vmatprep.subr.bf16.mxu0 0
    %1033 = vmatpush1.bf16.msra.mxu0 %v1025
    %1034 = vmatprep.subr.bf16.mxu0 0
    %1035 = vmatpush1.bf16.msra.mxu0 %v1026
    %1036 = vmatprep.subr.bf16.mxu0 0
    %1037 = vmatpush1.bf16.msra.mxu0 0
    %1038 = vmatprep.subr.bf16.mxu0 0
    %1039 = vmatpush1.bf16.msra.mxu0 0
    %1040 = vmatprep.subr.bf16.mxu0 0
    %1041 = vmatpush1.bf16.msra.mxu0 0
    %1042 = vmatprep.subr.bf16.mxu0 0
    %1043 = vmatpush1.bf16.msra.mxu0 0
    %1044 = vmatprep.subr.bf16.mxu0 0
    %1045 = vmatpush1.bf16.msra.mxu0 0
    %1046 = vmatprep.subr.bf16.mxu0 0
    %1047 = vmatpush1.bf16.msra.mxu0 0
    %1048 = vmatprep.subr.bf16.mxu0 0
    %1049 = vmatpush1.bf16.msra.mxu0 0
    %1050 = vmatprep.subr.bf16.mxu0 0
    %1051 = vmatpush1.bf16.msra.mxu0 0
    %1052 = vmatprep.subr.bf16.mxu0 0
    %1053 = vmatpush1.bf16.msra.mxu0 0
    %1054 = vmatprep.subr.bf16.mxu0 0
    %1055 = vmatpush1.bf16.msra.mxu0 0
    %1056 = vmatprep.subr.bf16.mxu0 0
    %1057 = vmatpush1.bf16.msra.mxu0 0
    %1058 = vmatprep.subr.bf16.mxu0 0
    %1059 = vmatpush1.bf16.msra.mxu0 0
    %1060 = vmatprep.subr.bf16.mxu0 0
    %1061 = vmatpush1.bf16.msra.mxu0 0
    %1062 = vmatprep.subr.bf16.mxu0 0
    %1063 = vmatpush1.bf16.msra.mxu0 0
    %1064 = vmatprep.mubr.bf16.mxu0 0
    %1065 = vmatmul.mubr.bf16.gmra.mrb[0].mxu0 %v1030
    %v1066 = vpop.f32.mrb[0].mxu0
    %v1067 = vadd.f32 %v1015, %v1066
    %v1068 = vpop.f32.mrb[0].mxu0
    %v1069 = vpop.f32.mrb[0].mxu0
    %v1070 = vadd.f32 %v1015, %v1069
    %v1071 = vpop.f32.mrb[0].mxu0
    %1072 = vdwg.mxu0
    %v1073 = vmax.f32 %v1067, 0.0
    %v1074 = vmax.f32 %v1070, 0.0
    %v1075 = vand.u32 2147483647, %v1067
    %v1076 = vand.u32 2147483647, %v1070
    %v1077 = vsub.f32 0.0, %v1075
    %v1078 = vsub.f32 0.0, %v1076
    %v1079 = vmul.f32 %v1077, 1.442695
    %v1080 = vpow.pop %v1079
    %v1081 = vmul.f32 %v1078, 1.442695
    %v1082 = vpow.pop %v1081
    %v1083 = vadd.f32 %v1080, 1.0
    %v1084 = vadd.f32 %v1082, 1.0
    %v1085 = vlog2.pop %v1083
    %v1086 = vmul.f32 %v1085, 0.6931472
    %v1087 = vlog2.pop %v1084
    %v1088 = vmul.f32 %v1087, 0.6931472
    %v1089 = vadd.f32 %v1073, %v1086
    %v1090 = vadd.f32 %v1074, %v1088
    %v1091 = vmul.f32 %v997, %v1089
    %v1092 = vmul.f32 %v1000, %v1090
    %1095 = vrot.lane.b32.xlu0 %v1067, 120
    %v1096 = vpop.permute.xlu0 %1095
    %1097 = vrot.lane.b32.xlu0 %v1070, 120
    %v1098 = vpop.permute.xlu0 %1097
    %v1101 = vmul.f32 %v1067, %v1096
    %v1102 = vmul.f32 %v1070, %v1098
    %1105 = vrot.lane.b32.xlu0 %v1101, 96
    %v1106 = vpop.permute.xlu0 %1105
    %1107 = vrot.lane.b32.xlu0 %v1102, 96
    %v1108 = vpop.permute.xlu0 %1107
    %v1111 = vsel %vm228, %v1106, 0.0
    %1112 = vadd.xlane.f32.xlu0 %v1111
    %v1113 = vpop.xlane.xlu0 %1112
    %v1114 = vsel %vm228, %v1108, 0.0
    %1115 = vadd.xlane.f32.xlu0 %v1114
    %v1116 = vpop.xlane.xlu0 %1115
    %v1117 = vmul.f32 %v1091, %v1113
    %v1118 = vmul.f32 %v1092, %v1116
    %v1119 = vsub.f32 0.0, %v1117
    %v1120 = vsub.f32 0.0, %v1118
    %v1121 = vmul.f32 %v1119, 1.442695
    %v1122 = vpow.pop %v1121
    %v1123 = vmul.f32 %v1120, 1.442695
    %v1124 = vpow.pop %v1123
    %v1125 = vadd.f32 %v1122, 1.0
    %v1126 = vadd.f32 %v1124, 1.0
    %v1127 = vrcp.pop %v1125
    %v1128 = vmul.f32 1.0, %v1127
    %v1129 = vrcp.pop %v1126
    %v1130 = vmul.f32 1.0, %v1129
    %v1131 = vmul.f32 %v1117, %v1128
    %v1132 = vmul.f32 %v1118, %v1130
    %1135 = vrot.lane.b32.xlu0 %v762, 96
    %v1136 = vpop.permute.xlu0 %1135
    %1137 = vrot.lane.b32.xlu0 %v763, 96
    %v1138 = vpop.permute.xlu0 %1137
    %v1141 = vmul.f32 %v1131, %v1136
    %v1142 = vmul.f32 %v1132, %v1138
    %s1143 = scalar_lea.vmem %s12, 16
    %v1144 = vld [vmem:[%s1143] sm:$0xf]
    %v1145 = vld [vmem:[%s1143 + $0x4] sm:$0xf]
    %v1146 = vld [vmem:[%s1143 + $0x8] sm:$0xf]
    %v1147 = vld [vmem:[%s1143 + $0xc] sm:$0xf]
    %v1148 = vpack.c.bf16 %v1142, %v1141
    %s1149 = scalar_lea.vmem %s13, 1
    %v1150 = vld [vmem:[%s1149] sm:$0x1]
    %v1152 = vlaneseq
    %v1153 = vshrl.u32 %v1152, 7
    %v1154 = vsub.s32 0, %v1153
    %v1155 = vrot.slane %v1150, %v1154
    %v1161 = vunpack.c.l.b16 %v1144
    %v1162 = vunpack.c.l.b16 %v1145
    %v1163 = vunpack.c.l.b16 %v1146
    %v1164 = vunpack.c.l.b16 %v1147
    %v1165 = vpack.c.b16 %v1162, %v1161
    %v1166 = vpack.c.b16 %v1164, %v1163
    %v1170 = vsel %vm411, %v1148, 0
    %1172 = vmatprep.subr.bf16.mxu0 0
    %1173 = vmatpush1.bf16.msra.mxu0 %v1165
    %1174 = vmatprep.subr.bf16.mxu0 0
    %1175 = vmatpush1.bf16.msra.mxu0 %v1166
    %1176 = vmatprep.subr.bf16.mxu0 0
    %1177 = vmatpush1.bf16.msra.mxu0 0
    %1178 = vmatprep.subr.bf16.mxu0 0
    %1179 = vmatpush1.bf16.msra.mxu0 0
    %1180 = vmatprep.subr.bf16.mxu0 0
    %1181 = vmatpush1.bf16.msra.mxu0 0
    %1182 = vmatprep.subr.bf16.mxu0 0
    %1183 = vmatpush1.bf16.msra.mxu0 0
    %1184 = vmatprep.subr.bf16.mxu0 0
    %1185 = vmatpush1.bf16.msra.mxu0 0
    %1186 = vmatprep.subr.bf16.mxu0 0
    %1187 = vmatpush1.bf16.msra.mxu0 0
    %1188 = vmatprep.subr.bf16.mxu0 0
    %1189 = vmatpush1.bf16.msra.mxu0 0
    %1190 = vmatprep.subr.bf16.mxu0 0
    %1191 = vmatpush1.bf16.msra.mxu0 0
    %1192 = vmatprep.subr.bf16.mxu0 0
    %1193 = vmatpush1.bf16.msra.mxu0 0
    %1194 = vmatprep.subr.bf16.mxu0 0
    %1195 = vmatpush1.bf16.msra.mxu0 0
    %1196 = vmatprep.subr.bf16.mxu0 0
    %1197 = vmatpush1.bf16.msra.mxu0 0
    %1198 = vmatprep.subr.bf16.mxu0 0
    %1199 = vmatpush1.bf16.msra.mxu0 0
    %1200 = vmatprep.subr.bf16.mxu0 0
    %1201 = vmatpush1.bf16.msra.mxu0 0
    %1202 = vmatprep.subr.bf16.mxu0 0
    %1203 = vmatpush1.bf16.msra.mxu0 0
    %1204 = vmatprep.mubr.bf16.mxu0 0
    %1205 = vmatmul.mubr.bf16.gmra.mrb[0].mxu0 %v1170
    %v1206 = vpop.f32.mrb[0].mxu0
    %v1207 = vadd.f32 %v1155, %v1206
    %v1208 = vpop.f32.mrb[0].mxu0
    %v1209 = vpop.f32.mrb[0].mxu0
    %v1210 = vadd.f32 %v1155, %v1209
    %v1211 = vpop.f32.mrb[0].mxu0
    %1212 = vdwg.mxu0
    %v1213 = vmul.f32 %v1207, %v1207
    %v1214 = vmul.f32 %v1210, %v1210
    %v1215 = vsel %vm117, %v1213, 0.0
    %1216 = vadd.xlane.f32.xlu0 %v1215
    %v1217 = vpop.xlane.xlu0 %1216
    %v1218 = vsel %vm117, %v1214, 0.0
    %1219 = vadd.xlane.f32.xlu0 %v1218
    %v1220 = vpop.xlane.xlu0 %1219
    %v1221 = vmul.f32 %v1217, %v124
    %v1222 = vmul.f32 %v1220, %v124
    %v1223 = vadd.f32 %v1221, 1e-05
    %v1224 = vadd.f32 %v1222, 1e-05
    %v1225 = vrsqrt.pop %v1223
    %v1226 = vrsqrt.pop %v1224
    %v1227 = vmul.f32 %v1207, %v1225
    %v1228 = vmul.f32 %v1210, %v1226
    %s1229 = scalar_lea.vmem %s3, 2
    %v1230 = vld [vmem:[%s1229] sm:$0x1]
    %v1232 = vlaneseq
    %v1233 = vshrl.u32 %v1232, 7
    %v1234 = vsub.s32 0, %v1233
    %v1235 = vrot.slane %v1230, %v1234
    %v1237 = vmul.f32 %v1227, %v1235
    %v1238 = vmul.f32 %v1228, %v1235
    %v1239 = vpack.c.bf16 %v1238, %v1237
    %s1240 = scalar_lea.vmem %s4, 16
    %v1241 = vld [vmem:[%s1240] sm:$0xf]
    %v1242 = vld [vmem:[%s1240 + $0x4] sm:$0xf]
    %s1243 = scalar_lea.vmem %s5, 2
    %v1244 = vld [vmem:[%s1243] sm:$0x1]
    %v1246 = vlaneseq
    %v1247 = vshrl.u32 %v1246, 7
    %v1248 = vsub.s32 0, %v1247
    %v1249 = vrot.slane %v1244, %v1248
    %v1253 = vunpack.c.l.b16 %v1241
    %v1254 = vunpack.c.l.b16 %v1242
    %v1255 = vpack.c.b16 %v1254, %v1253
    %v1258 = vsel %vm117, %v1239, 0
    %1260 = vmatprep.subr.bf16.mxu0 0
    %1261 = vmatpush1.bf16.msra.mxu0 %v1255
    %1262 = vmatprep.subr.bf16.mxu0 0
    %1263 = vmatpush1.bf16.msra.mxu0 0
    %1264 = vmatprep.subr.bf16.mxu0 0
    %1265 = vmatpush1.bf16.msra.mxu0 0
    %1266 = vmatprep.subr.bf16.mxu0 0
    %1267 = vmatpush1.bf16.msra.mxu0 0
    %1268 = vmatprep.subr.bf16.mxu0 0
    %1269 = vmatpush1.bf16.msra.mxu0 0
    %1270 = vmatprep.subr.bf16.mxu0 0
    %1271 = vmatpush1.bf16.msra.mxu0 0
    %1272 = vmatprep.subr.bf16.mxu0 0
    %1273 = vmatpush1.bf16.msra.mxu0 0
    %1274 = vmatprep.subr.bf16.mxu0 0
    %1275 = vmatpush1.bf16.msra.mxu0 0
    %1276 = vmatprep.subr.bf16.mxu0 0
    %1277 = vmatpush1.bf16.msra.mxu0 0
    %1278 = vmatprep.subr.bf16.mxu0 0
    %1279 = vmatpush1.bf16.msra.mxu0 0
    %1280 = vmatprep.subr.bf16.mxu0 0
    %1281 = vmatpush1.bf16.msra.mxu0 0
    %1282 = vmatprep.subr.bf16.mxu0 0
    %1283 = vmatpush1.bf16.msra.mxu0 0
    %1284 = vmatprep.subr.bf16.mxu0 0
    %1285 = vmatpush1.bf16.msra.mxu0 0
    %1286 = vmatprep.subr.bf16.mxu0 0
    %1287 = vmatpush1.bf16.msra.mxu0 0
    %1288 = vmatprep.subr.bf16.mxu0 0
    %1289 = vmatpush1.bf16.msra.mxu0 0
    %1290 = vmatprep.subr.bf16.mxu0 0
    %1291 = vmatpush1.bf16.msra.mxu0 0
    %1292 = vmatprep.mubr.bf16.mxu0 0
    %1293 = vmatmul.mubr.bf16.gmra.mrb[0].mxu0 %v1258
    %v1294 = vpop.f32.mrb[0].mxu0
    %v1295 = vadd.f32 %v1249, %v1294
    %v1296 = vpop.f32.mrb[0].mxu0
    %v1297 = vpop.f32.mrb[0].mxu0
    %v1298 = vadd.f32 %v1249, %v1297
    %v1299 = vpop.f32.mrb[0].mxu0
    %1300 = vdwg.mxu0
    %v1301 = vsub.f32 0.0, %v1295
    %v1302 = vsub.f32 0.0, %v1298
    %v1303 = vmul.f32 %v1301, 1.442695
    %v1304 = vpow.pop %v1303
    %v1305 = vmul.f32 %v1302, 1.442695
    %v1306 = vpow.pop %v1305
    %v1307 = vadd.f32 %v1304, 1.0
    %v1308 = vadd.f32 %v1306, 1.0
    %v1309 = vrcp.pop %v1307
    %v1310 = vmul.f32 1.0, %v1309
    %v1311 = vrcp.pop %v1308
    %v1312 = vmul.f32 1.0, %v1311
    %v1313 = vmul.f32 %v1295, %v1310
    %v1314 = vmul.f32 %v1298, %v1312
    %v1315 = vpack.c.bf16 %v1295, %v1295
    %s1316 = scalar_lea.vmem %s6, 24
    %v1317 = vld [vmem:[%s1316] sm:$0xf]
    %v1318 = vld [vmem:[%s1316 + $0x4] sm:$0xf]
    %v1319 = vld [vmem:[%s1316 + $0x8] sm:$0xf]
    %v1323 = vunpack.c.l.b16 %v1317
    %v1324 = vunpack.c.l.b16 %v1318
    %v1325 = vunpack.c.l.b16 %v1319
    %v1326 = vpack.c.b16 %v1324, %v1323
    %v1327 = vpack.c.b16 %v1325, %v1325
    %v1329 = vsel %vm228, %v1326, 0
    %v1332 = vsel %vm228, %v1327, 0
    %v1335 = vsel %vm235, %v1315, 0
    %1337 = vmatprep.subr.bf16.mxu0 0
    %1338 = vmatpush1.bf16.msra.mxu0 %v1335
    %1339 = vmatprep.subr.bf16.mxu0 0
    %1340 = vmatpush1.bf16.msra.mxu0 0
    %1341 = vmatprep.subr.bf16.mxu0 0
    %1342 = vmatpush1.bf16.msra.mxu0 0
    %1343 = vmatprep.subr.bf16.mxu0 0
    %1344 = vmatpush1.bf16.msra.mxu0 0
    %1345 = vmatprep.subr.bf16.mxu0 0
    %1346 = vmatpush1.bf16.msra.mxu0 0
    %1347 = vmatprep.subr.bf16.mxu0 0
    %1348 = vmatpush1.bf16.msra.mxu0 0
    %1349 = vmatprep.subr.bf16.mxu0 0
    %1350 = vmatpush1.bf16.msra.mxu0 0
    %1351 = vmatprep.subr.bf16.mxu0 0
    %1352 = vmatpush1.bf16.msra.mxu0 0
    %1353 = vmatprep.subr.bf16.mxu0 0
    %1354 = vmatpush1.bf16.msra.mxu0 0
    %1355 = vmatprep.subr.bf16.mxu0 0
    %1356 = vmatpush1.bf16.msra.mxu0 0
    %1357 = vmatprep.subr.bf16.mxu0 0
    %1358 = vmatpush1.bf16.msra.mxu0 0
    %1359 = vmatprep.subr.bf16.mxu0 0
    %1360 = vmatpush1.bf16.msra.mxu0 0
    %1361 = vmatprep.subr.bf16.mxu0 0
    %1362 = vmatpush1.bf16.msra.mxu0 0
    %1363 = vmatprep.subr.bf16.mxu0 0
    %1364 = vmatpush1.bf16.msra.mxu0 0
    %1365 = vmatprep.subr.bf16.mxu0 0
    %1366 = vmatpush1.bf16.msra.mxu0 0
    %1367 = vmatprep.subr.bf16.mxu0 0
    %1368 = vmatpush1.bf16.msra.mxu0 0
    %1369 = vmatprep.mubr.bf16.mxu0 0
    %1370 = vmatmul.mubr.bf16.gmra.mrb[0].mxu0 %v1329
    %v1371 = vpop.f32.mrb[0].mxu0
    %v1372 = vadd.f32 0.0, %v1371
    %v1373 = vpop.f32.mrb[0].mxu0
    %v1374 = vpop.f32.mrb[0].mxu0
    %v1375 = vadd.f32 0.0, %v1374
    %v1376 = vpop.f32.mrb[0].mxu0
    %1377 = vmatprep.mubr.bf16.mxu0 0
    %1378 = vmatmul.mubr.bf16.gmra.mrb[0].mxu0 %v1332
    %v1379 = vpop.f32.mrb[0].mxu0
    %v1380 = vadd.f32 0.0, %v1379
    %v1381 = vpop.f32.mrb[0].mxu0
    %v1382 = vpop.f32.mrb[0].mxu0
    %v1383 = vpop.f32.mrb[0].mxu0
    %1384 = vdwg.mxu0
    %1386 = vrot.lane.b32.xlu0 %v1372, 1
    %v1387 = vpop.permute.xlu0 %1386
    %v1389 = vsel %vm291, 0.0, %v1387
    %v1390 = vadd.f32 %v1389, %v1375
    %1392 = vrot.lane.b32.xlu0 %v1380, 127
    %v1393 = vpop.permute.xlu0 %1392
    %v1395 = vsel %vm298, %v1393, 0.0
    %v1396 = vadd.f32 %v1390, %v1395
    %s1397 = scalar_lea.vmem %s7, 16
    %v1398 = vld [vmem:[%s1397] sm:$0xff]
    %1400 = vset.pattern.permute.xlu0 0
    %1401 = vperm.xlu0 %1400, %v1398
    %v1402 = vpop.permute.xlu0 %1401
    %v1404 = vadd.f32 %v1396, %v1402
    %v1405 = vpack.c.bf16 %v1298, %v1298
    %v1407 = vsel %vm235, %v1405, 0
    %1409 = vmatprep.subr.bf16.mxu0 0
    %1410 = vmatpush1.bf16.msra.mxu0 %v1407
    %1411 = vmatprep.subr.bf16.mxu0 0
    %1412 = vmatpush1.bf16.msra.mxu0 0
    %1413 = vmatprep.subr.bf16.mxu0 0
    %1414 = vmatpush1.bf16.msra.mxu0 0
    %1415 = vmatprep.subr.bf16.mxu0 0
    %1416 = vmatpush1.bf16.msra.mxu0 0
    %1417 = vmatprep.subr.bf16.mxu0 0
    %1418 = vmatpush1.bf16.msra.mxu0 0
    %1419 = vmatprep.subr.bf16.mxu0 0
    %1420 = vmatpush1.bf16.msra.mxu0 0
    %1421 = vmatprep.subr.bf16.mxu0 0
    %1422 = vmatpush1.bf16.msra.mxu0 0
    %1423 = vmatprep.subr.bf16.mxu0 0
    %1424 = vmatpush1.bf16.msra.mxu0 0
    %1425 = vmatprep.subr.bf16.mxu0 0
    %1426 = vmatpush1.bf16.msra.mxu0 0
    %1427 = vmatprep.subr.bf16.mxu0 0
    %1428 = vmatpush1.bf16.msra.mxu0 0
    %1429 = vmatprep.subr.bf16.mxu0 0
    %1430 = vmatpush1.bf16.msra.mxu0 0
    %1431 = vmatprep.subr.bf16.mxu0 0
    %1432 = vmatpush1.bf16.msra.mxu0 0
    %1433 = vmatprep.subr.bf16.mxu0 0
    %1434 = vmatpush1.bf16.msra.mxu0 0
    %1435 = vmatprep.subr.bf16.mxu0 0
    %1436 = vmatpush1.bf16.msra.mxu0 0
    %1437 = vmatprep.subr.bf16.mxu0 0
    %1438 = vmatpush1.bf16.msra.mxu0 0
    %1439 = vmatprep.subr.bf16.mxu0 0
    %1440 = vmatpush1.bf16.msra.mxu0 0
    %1441 = vmatprep.mubr.bf16.mxu0 0
    %1442 = vmatmul.mubr.bf16.gmra.mrb[0].mxu0 %v1329
    %v1443 = vpop.f32.mrb[0].mxu0
    %v1444 = vadd.f32 0.0, %v1443
    %v1445 = vpop.f32.mrb[0].mxu0
    %v1446 = vpop.f32.mrb[0].mxu0
    %v1447 = vadd.f32 0.0, %v1446
    %v1448 = vpop.f32.mrb[0].mxu0
    %1449 = vmatprep.mubr.bf16.mxu0 0
    %1450 = vmatmul.mubr.bf16.gmra.mrb[0].mxu0 %v1332
    %v1451 = vpop.f32.mrb[0].mxu0
    %v1452 = vadd.f32 0.0, %v1451
    %v1453 = vpop.f32.mrb[0].mxu0
    %v1454 = vpop.f32.mrb[0].mxu0
    %v1455 = vpop.f32.mrb[0].mxu0
    %1456 = vdwg.mxu0
    %1458 = vrot.lane.b32.xlu0 %v1444, 1
    %v1459 = vpop.permute.xlu0 %1458
    %v1461 = vsel %vm291, 0.0, %v1459
    %v1462 = vadd.f32 %v1461, %v1447
    %1464 = vrot.lane.b32.xlu0 %v1452, 127
    %v1465 = vpop.permute.xlu0 %1464
    %v1467 = vsel %vm298, %v1465, 0.0
    %v1468 = vadd.f32 %v1462, %v1467
    %v1469 = vadd.f32 %v1468, %v1402
    %v1470 = vsub.f32 0.0, %v1404
    %v1471 = vsub.f32 0.0, %v1469
    %v1472 = vmul.f32 %v1470, 1.442695
    %v1473 = vpow.pop %v1472
    %v1474 = vmul.f32 %v1471, 1.442695
    %v1475 = vpow.pop %v1474
    %v1476 = vadd.f32 %v1473, 1.0
    %v1477 = vadd.f32 %v1475, 1.0
    %v1478 = vrcp.pop %v1476
    %v1479 = vmul.f32 1.0, %v1478
    %v1480 = vrcp.pop %v1477
    %v1481 = vmul.f32 1.0, %v1480
    %v1482 = vmul.f32 %v1404, %v1479
    %v1483 = vmul.f32 %v1469, %v1481
    %s1484 = scalar_lea.vmem %s8, 32
    %v1485 = vld [vmem:[%s1484] sm:$0xf]
    %v1486 = vld [vmem:[%s1484 + $0x4] sm:$0xf]
    %v1487 = vld [vmem:[%s1484 + $0x8] sm:$0xf]
    %v1488 = vld [vmem:[%s1484 + $0xc] sm:$0xf]
    %v1489 = vpack.c.bf16 %v1483, %v1482
    %s1490 = scalar_lea.vmem %s9, 2
    %v1491 = vld [vmem:[%s1490] sm:$0x1]
    %v1493 = vlaneseq
    %v1494 = vshrl.u32 %v1493, 7
    %v1495 = vsub.s32 0, %v1494
    %v1496 = vrot.slane %v1491, %v1495
    %v1502 = vunpack.c.l.b16 %v1485
    %v1503 = vunpack.c.l.b16 %v1486
    %v1504 = vunpack.c.l.b16 %v1487
    %v1505 = vunpack.c.l.b16 %v1488
    %v1506 = vpack.c.b16 %v1503, %v1502
    %v1507 = vpack.c.b16 %v1505, %v1504
    %v1511 = vsel %vm411, %v1489, 0
    %1513 = vmatprep.subr.bf16.mxu0 0
    %1514 = vmatpush1.bf16.msra.mxu0 %v1506
    %1515 = vmatprep.subr.bf16.mxu0 0
    %1516 = vmatpush1.bf16.msra.mxu0 %v1507
    %1517 = vmatprep.subr.bf16.mxu0 0
    %1518 = vmatpush1.bf16.msra.mxu0 0
    %1519 = vmatprep.subr.bf16.mxu0 0
    %1520 = vmatpush1.bf16.msra.mxu0 0
    %1521 = vmatprep.subr.bf16.mxu0 0
    %1522 = vmatpush1.bf16.msra.mxu0 0
    %1523 = vmatprep.subr.bf16.mxu0 0
    %1524 = vmatpush1.bf16.msra.mxu0 0
    %1525 = vmatprep.subr.bf16.mxu0 0
    %1526 = vmatpush1.bf16.msra.mxu0 0
    %1527 = vmatprep.subr.bf16.mxu0 0
    %1528 = vmatpush1.bf16.msra.mxu0 0
    %1529 = vmatprep.subr.bf16.mxu0 0
    %1530 = vmatpush1.bf16.msra.mxu0 0
    %1531 = vmatprep.subr.bf16.mxu0 0
    %1532 = vmatpush1.bf16.msra.mxu0 0
    %1533 = vmatprep.subr.bf16.mxu0 0
    %1534 = vmatpush1.bf16.msra.mxu0 0
    %1535 = vmatprep.subr.bf16.mxu0 0
    %1536 = vmatpush1.bf16.msra.mxu0 0
    %1537 = vmatprep.subr.bf16.mxu0 0
    %1538 = vmatpush1.bf16.msra.mxu0 0
    %1539 = vmatprep.subr.bf16.mxu0 0
    %1540 = vmatpush1.bf16.msra.mxu0 0
    %1541 = vmatprep.subr.bf16.mxu0 0
    %1542 = vmatpush1.bf16.msra.mxu0 0
    %1543 = vmatprep.subr.bf16.mxu0 0
    %1544 = vmatpush1.bf16.msra.mxu0 0
    %1545 = vmatprep.mubr.bf16.mxu0 0
    %1546 = vmatmul.mubr.bf16.gmra.mrb[0].mxu0 %v1511
    %v1547 = vpop.f32.mrb[0].mxu0
    %v1548 = vadd.f32 %v1496, %v1547
    %v1549 = vpop.f32.mrb[0].mxu0
    %v1550 = vpop.f32.mrb[0].mxu0
    %v1551 = vadd.f32 %v1496, %v1550
    %v1552 = vpop.f32.mrb[0].mxu0
    %1553 = vdwg.mxu0
    %v1554 = vpack.c.bf16 %v1551, %v1548
    %s1555 = scalar_lea.vmem %s10, 32
    %v1556 = vld [vmem:[%s1555] sm:$0xf]
    %v1557 = vld [vmem:[%s1555 + $0x4] sm:$0xf]
    %v1558 = vld [vmem:[%s1555 + $0x8] sm:$0xf]
    %v1559 = vld [vmem:[%s1555 + $0xc] sm:$0xf]
    %s1560 = scalar_lea.vmem %s11, 2
    %v1561 = vld [vmem:[%s1560] sm:$0x1]
    %v1563 = vlaneseq
    %v1564 = vshrl.u32 %v1563, 7
    %v1565 = vsub.s32 0, %v1564
    %v1566 = vrot.slane %v1561, %v1565
    %v1572 = vunpack.c.l.b16 %v1556
    %v1573 = vunpack.c.l.b16 %v1557
    %v1574 = vunpack.c.l.b16 %v1558
    %v1575 = vunpack.c.l.b16 %v1559
    %v1576 = vpack.c.b16 %v1573, %v1572
    %v1577 = vpack.c.b16 %v1575, %v1574
    %v1581 = vsel %vm411, %v1554, 0
    %1583 = vmatprep.subr.bf16.mxu0 0
    %1584 = vmatpush1.bf16.msra.mxu0 %v1576
    %1585 = vmatprep.subr.bf16.mxu0 0
    %1586 = vmatpush1.bf16.msra.mxu0 %v1577
    %1587 = vmatprep.subr.bf16.mxu0 0
    %1588 = vmatpush1.bf16.msra.mxu0 0
    %1589 = vmatprep.subr.bf16.mxu0 0
    %1590 = vmatpush1.bf16.msra.mxu0 0
    %1591 = vmatprep.subr.bf16.mxu0 0
    %1592 = vmatpush1.bf16.msra.mxu0 0
    %1593 = vmatprep.subr.bf16.mxu0 0
    %1594 = vmatpush1.bf16.msra.mxu0 0
    %1595 = vmatprep.subr.bf16.mxu0 0
    %1596 = vmatpush1.bf16.msra.mxu0 0
    %1597 = vmatprep.subr.bf16.mxu0 0
    %1598 = vmatpush1.bf16.msra.mxu0 0
    %1599 = vmatprep.subr.bf16.mxu0 0
    %1600 = vmatpush1.bf16.msra.mxu0 0
    %1601 = vmatprep.subr.bf16.mxu0 0
    %1602 = vmatpush1.bf16.msra.mxu0 0
    %1603 = vmatprep.subr.bf16.mxu0 0
    %1604 = vmatpush1.bf16.msra.mxu0 0
    %1605 = vmatprep.subr.bf16.mxu0 0
    %1606 = vmatpush1.bf16.msra.mxu0 0
    %1607 = vmatprep.subr.bf16.mxu0 0
    %1608 = vmatpush1.bf16.msra.mxu0 0
    %1609 = vmatprep.subr.bf16.mxu0 0
    %1610 = vmatpush1.bf16.msra.mxu0 0
    %1611 = vmatprep.subr.bf16.mxu0 0
    %1612 = vmatpush1.bf16.msra.mxu0 0
    %1613 = vmatprep.subr.bf16.mxu0 0
    %1614 = vmatpush1.bf16.msra.mxu0 0
    %1615 = vmatprep.mubr.bf16.mxu0 0
    %1616 = vmatmul.mubr.bf16.gmra.mrb[0].mxu0 %v1581
    %v1617 = vpop.f32.mrb[0].mxu0
    %v1618 = vadd.f32 %v1566, %v1617
    %v1619 = vpop.f32.mrb[0].mxu0
    %v1620 = vpop.f32.mrb[0].mxu0
    %v1621 = vadd.f32 %v1566, %v1620
    %v1622 = vpop.f32.mrb[0].mxu0
    %1623 = vdwg.mxu0
    %v1624 = vmax.f32 %v1618, 0.0
    %v1625 = vmax.f32 %v1621, 0.0
    %v1626 = vand.u32 2147483647, %v1618
    %v1627 = vand.u32 2147483647, %v1621
    %v1628 = vsub.f32 0.0, %v1626
    %v1629 = vsub.f32 0.0, %v1627
    %v1630 = vmul.f32 %v1628, 1.442695
    %v1631 = vpow.pop %v1630
    %v1632 = vmul.f32 %v1629, 1.442695
    %v1633 = vpow.pop %v1632
    %v1634 = vadd.f32 %v1631, 1.0
    %v1635 = vadd.f32 %v1633, 1.0
    %v1636 = vlog2.pop %v1634
    %v1637 = vmul.f32 %v1636, 0.6931472
    %v1638 = vlog2.pop %v1635
    %v1639 = vmul.f32 %v1638, 0.6931472
    %v1640 = vadd.f32 %v1624, %v1637
    %v1641 = vadd.f32 %v1625, %v1639
    %v1642 = vmul.f32 %v1548, %v1640
    %v1643 = vmul.f32 %v1551, %v1641
    %1646 = vrot.lane.b32.xlu0 %v1618, 120
    %v1647 = vpop.permute.xlu0 %1646
    %1648 = vrot.lane.b32.xlu0 %v1621, 120
    %v1649 = vpop.permute.xlu0 %1648
    %v1652 = vmul.f32 %v1618, %v1647
    %v1653 = vmul.f32 %v1621, %v1649
    %1656 = vrot.lane.b32.xlu0 %v1652, 96
    %v1657 = vpop.permute.xlu0 %1656
    %1658 = vrot.lane.b32.xlu0 %v1653, 96
    %v1659 = vpop.permute.xlu0 %1658
    %v1662 = vsel %vm228, %v1657, 0.0
    %1663 = vadd.xlane.f32.xlu0 %v1662
    %v1664 = vpop.xlane.xlu0 %1663
    %v1665 = vsel %vm228, %v1659, 0.0
    %1666 = vadd.xlane.f32.xlu0 %v1665
    %v1667 = vpop.xlane.xlu0 %1666
    %v1668 = vmul.f32 %v1642, %v1664
    %v1669 = vmul.f32 %v1643, %v1667
    %v1670 = vsub.f32 0.0, %v1668
    %v1671 = vsub.f32 0.0, %v1669
    %v1672 = vmul.f32 %v1670, 1.442695
    %v1673 = vpow.pop %v1672
    %v1674 = vmul.f32 %v1671, 1.442695
    %v1675 = vpow.pop %v1674
    %v1676 = vadd.f32 %v1673, 1.0
    %v1677 = vadd.f32 %v1675, 1.0
    %v1678 = vrcp.pop %v1676
    %v1679 = vmul.f32 1.0, %v1678
    %v1680 = vrcp.pop %v1677
    %v1681 = vmul.f32 1.0, %v1680
    %v1682 = vmul.f32 %v1668, %v1679
    %v1683 = vmul.f32 %v1669, %v1681
    %1686 = vrot.lane.b32.xlu0 %v1313, 96
    %v1687 = vpop.permute.xlu0 %1686
    %1688 = vrot.lane.b32.xlu0 %v1314, 96
    %v1689 = vpop.permute.xlu0 %1688
    %v1692 = vmul.f32 %v1682, %v1687
    %v1693 = vmul.f32 %v1683, %v1689
    %s1694 = scalar_lea.vmem %s12, 32
    %v1695 = vld [vmem:[%s1694] sm:$0xf]
    %v1696 = vld [vmem:[%s1694 + $0x4] sm:$0xf]
    %v1697 = vld [vmem:[%s1694 + $0x8] sm:$0xf]
    %v1698 = vld [vmem:[%s1694 + $0xc] sm:$0xf]
    %v1699 = vpack.c.bf16 %v1693, %v1692
    %s1700 = scalar_lea.vmem %s13, 2
    %v1701 = vld [vmem:[%s1700] sm:$0x1]
    %v1703 = vlaneseq
    %v1704 = vshrl.u32 %v1703, 7
    %v1705 = vsub.s32 0, %v1704
    %v1706 = vrot.slane %v1701, %v1705
    %v1712 = vunpack.c.l.b16 %v1695
    %v1713 = vunpack.c.l.b16 %v1696
    %v1714 = vunpack.c.l.b16 %v1697
    %v1715 = vunpack.c.l.b16 %v1698
    %v1716 = vpack.c.b16 %v1713, %v1712
    %v1717 = vpack.c.b16 %v1715, %v1714
    %v1721 = vsel %vm411, %v1699, 0
    %1723 = vmatprep.subr.bf16.mxu0 0
    %1724 = vmatpush1.bf16.msra.mxu0 %v1716
    %1725 = vmatprep.subr.bf16.mxu0 0
    %1726 = vmatpush1.bf16.msra.mxu0 %v1717
    %1727 = vmatprep.subr.bf16.mxu0 0
    %1728 = vmatpush1.bf16.msra.mxu0 0
    %1729 = vmatprep.subr.bf16.mxu0 0
    %1730 = vmatpush1.bf16.msra.mxu0 0
    %1731 = vmatprep.subr.bf16.mxu0 0
    %1732 = vmatpush1.bf16.msra.mxu0 0
    %1733 = vmatprep.subr.bf16.mxu0 0
    %1734 = vmatpush1.bf16.msra.mxu0 0
    %1735 = vmatprep.subr.bf16.mxu0 0
    %1736 = vmatpush1.bf16.msra.mxu0 0
    %1737 = vmatprep.subr.bf16.mxu0 0
    %1738 = vmatpush1.bf16.msra.mxu0 0
    %1739 = vmatprep.subr.bf16.mxu0 0
    %1740 = vmatpush1.bf16.msra.mxu0 0
    %1741 = vmatprep.subr.bf16.mxu0 0
    %1742 = vmatpush1.bf16.msra.mxu0 0
    %1743 = vmatprep.subr.bf16.mxu0 0
    %1744 = vmatpush1.bf16.msra.mxu0 0
    %1745 = vmatprep.subr.bf16.mxu0 0
    %1746 = vmatpush1.bf16.msra.mxu0 0
    %1747 = vmatprep.subr.bf16.mxu0 0
    %1748 = vmatpush1.bf16.msra.mxu0 0
    %1749 = vmatprep.subr.bf16.mxu0 0
    %1750 = vmatpush1.bf16.msra.mxu0 0
    %1751 = vmatprep.subr.bf16.mxu0 0
    %1752 = vmatpush1.bf16.msra.mxu0 0
    %1753 = vmatprep.subr.bf16.mxu0 0
    %1754 = vmatpush1.bf16.msra.mxu0 0
    %1755 = vmatprep.mubr.bf16.mxu0 0
    %1756 = vmatmul.mubr.bf16.gmra.mrb[0].mxu0 %v1721
    %v1757 = vpop.f32.mrb[0].mxu0
    %v1758 = vadd.f32 %v1706, %v1757
    %v1759 = vpop.f32.mrb[0].mxu0
    %v1760 = vpop.f32.mrb[0].mxu0
    %v1761 = vadd.f32 %v1706, %v1760
    %v1762 = vpop.f32.mrb[0].mxu0
    %1763 = vdwg.mxu0
    %v1764 = vsel %vm117, %v1758, 0.0
    %v1765 = vrot.slane %v1764, 4
    %v1766 = vadd.f32 %v1764, %v1765
    %v1767 = vrot.slane %v1766, 2
    %v1768 = vadd.f32 %v1766, %v1767
    %v1769 = vrot.slane %v1768, 1
    %v1770 = vadd.f32 %v1768, %v1769
    %v1771 = vrcp.pop 8.0
    %v1772 = vmul.f32 %v1770, %v1771
    %v1773 = vsel %vm117, %v1761, 0.0
    %v1774 = vrot.slane %v1773, 4
    %v1775 = vadd.f32 %v1773, %v1774
    %v1776 = vrot.slane %v1775, 2
    %v1777 = vadd.f32 %v1775, %v1776
    %v1778 = vrot.slane %v1777, 1
    %v1779 = vadd.f32 %v1777, %v1778
    %v1780 = vmul.f32 %v1779, %v1771
    %vm1781 = vcmask 1040384
    %v1782 = vsel %vm1781, %v1772, %v1780
    %v1783 = vld [vmem:[%s14] sm:$0xf]
    %v1784 = vld [vmem:[%s14 + $0x4] sm:$0xf]
    %v1785 = vpack.c.bf16 %v1782, %v1782
    %v1786 = vld [vmem:[%s15] sm:$0x1]
    %v1788 = vlaneseq
    %v1789 = vshrl.u32 %v1788, 7
    %v1790 = vsub.s32 0, %v1789
    %v1791 = vrot.slane %v1786, %v1790
    %v1795 = vunpack.c.l.b16 %v1783
    %v1796 = vunpack.c.l.b16 %v1784
    %v1797 = vpack.c.b16 %v1796, %v1795
    %v1800 = vsel %vm117, %v1785, 0
    %1802 = vmatprep.subr.bf16.mxu0 0
    %1803 = vmatpush1.bf16.msra.mxu0 %v1797
    %1804 = vmatprep.subr.bf16.mxu0 0
    %1805 = vmatpush1.bf16.msra.mxu0 0
    %1806 = vmatprep.subr.bf16.mxu0 0
    %1807 = vmatpush1.bf16.msra.mxu0 0
    %1808 = vmatprep.subr.bf16.mxu0 0
    %1809 = vmatpush1.bf16.msra.mxu0 0
    %1810 = vmatprep.subr.bf16.mxu0 0
    %1811 = vmatpush1.bf16.msra.mxu0 0
    %1812 = vmatprep.subr.bf16.mxu0 0
    %1813 = vmatpush1.bf16.msra.mxu0 0
    %1814 = vmatprep.subr.bf16.mxu0 0
    %1815 = vmatpush1.bf16.msra.mxu0 0
    %1816 = vmatprep.subr.bf16.mxu0 0
    %1817 = vmatpush1.bf16.msra.mxu0 0
    %1818 = vmatprep.subr.bf16.mxu0 0
    %1819 = vmatpush1.bf16.msra.mxu0 0
    %1820 = vmatprep.subr.bf16.mxu0 0
    %1821 = vmatpush1.bf16.msra.mxu0 0
    %1822 = vmatprep.subr.bf16.mxu0 0
    %1823 = vmatpush1.bf16.msra.mxu0 0
    %1824 = vmatprep.subr.bf16.mxu0 0
    %1825 = vmatpush1.bf16.msra.mxu0 0
    %1826 = vmatprep.subr.bf16.mxu0 0
    %1827 = vmatpush1.bf16.msra.mxu0 0
    %1828 = vmatprep.subr.bf16.mxu0 0
    %1829 = vmatpush1.bf16.msra.mxu0 0
    %1830 = vmatprep.subr.bf16.mxu0 0
    %1831 = vmatpush1.bf16.msra.mxu0 0
    %1832 = vmatprep.subr.bf16.mxu0 0
    %1833 = vmatpush1.bf16.msra.mxu0 0
    %1834 = vmatprep.mubr.bf16.mxu0 0
    %1835 = vmatmul.mubr.bf16.gmra.mrb[0].mxu0 %v1800
    %v1836 = vpop.f32.mrb[0].mxu0
    %v1837 = vadd.f32 %v1791, %v1836
    %v1838 = vpop.f32.mrb[0].mxu0
    %v1839 = vpop.f32.mrb[0].mxu0
    %v1840 = vpop.f32.mrb[0].mxu0
    %1841 = vdwg.mxu0
    %1843 = vrot.lane.b32.xlu0 %v1837, 16
    %v1844 = vpop.permute.xlu0 %1843
    %v1846 = vsel %vm117, %v1782, %v1844
    %vm1847 = vcmask 162816
    %v1848 = vsel %vm1847, %v1846, 0.0
    %1849 = vst [vmem:[#allocation2] sm:$0x3] %v1848
    // Predicated region
    $region66: #{tpu_custom_call.1} parent=1 // pred_check
      _
    $region67: #{tpu_custom_call.1} parent=1 // pred_check_branch
      %1851 = sbr.rel (0) target = $region69
    $region68: #{tpu_custom_call.1} parent=1 // pred_region
      %s1853 = ssub.s32 32, 32
      %1854 = vsyncadd [#allocation3], %s1853
      %s1856 = sshll.u32 [#allocation2], 4
      %s1857 = int_to_ptr.vmem [resolvable:$true] %s1856
      %1859 = dma.vmem_to_hbm [thread:$0]  %s1857, 32, %s16, [#allocation3]
    $region69: #{tpu_custom_call.1} parent=1 // pred_fallthru
      _
    // Predicated region
    $region70: #{tpu_custom_call.1} parent=1 // pred_check
      _
    $region71: #{tpu_custom_call.1} parent=1 // pred_check_branch
      %1861 = sbr.rel (0) target = $region73
    $region72: #{tpu_custom_call.1} parent=1 // pred_region
      %1862 = dma.done [#allocation3], 32
    $region73: #{tpu_custom_call.1} parent=1 // pred_fallthru
      _
    %1863 = vsyncpa [#allocation3], 1

</llo_original>
